<compile_context>
chip_gen: v7x
topology: tpu7x:2x2x1
jax: 0.10.0
libtpu: 0.0.40
codegen_flags: <defaults>
</compile_context>

<pallas_src>
import functools

import jax
import jax.numpy as jnp
from jax.experimental import pallas as pl
from jax.experimental.pallas import tpu as pltpu

LANE = 128
SUBLANE = 8


def _round_up(x, m):
    return -(-x // m) * m


def _sigmoid_via_tanh(x):
    # One EUP op (tanh) instead of exp + reciprocal; kept f32 (v5e has no bf16 VPU/EUP).
    return 0.5 * (jnp.tanh(0.5 * x) + 1.0)


def _lstm_policy_kernel(x_ref, *refs, hidden_pad, layer_count, seq_len):
    """Grid axis 0 = time block (sequential / 'arbitrary').

    x_ref : bf16 (T*Bp, C) current time block, rows ordered (t, b).
    refs  : w_ih_0 .. w_ih_{L-1}   bf16 (in_dim_l, 4*Hp)   lane-aligned per-gate columns
            w_hh                   bf16 (L, Hp, 4*Hp)
            b                      f32  (L, 1, 4*Hp)       (b_ih + b_hh)
            w_fc, b_fc             bf16 (Hp, Cp) / f32 (1, Cp)  (padded lanes bias=-1e30)
            out_ref                f32  (T*Bp, Cp)         lane-dense log-probs
            hn_ref, cn_ref         f32  (L, Bp, Hp)        resident recurrent state
            gproj                  f32  (T, Bp, 4*Hp)      scratch: hoisted gate pre-acts
            h_seq                  f32  (T, Bp, Hp)        scratch: per-step h of a layer
    """
    Hp = hidden_pad
    L = layer_count

    w_ih = refs[:L]
    w_hh_ref, b_ref, w_fc_ref, b_fc_ref = refs[L:L + 4]
    out_ref, hn_ref, cn_ref = refs[L + 4:L + 7]
    gproj, h_seq = refs[L + 7:L + 9]

    T, Bp, _ = h_seq.shape
    tb = pl.program_id(0)
    t0 = tb * T                       # global timestep of this block's first row
    unroll = T if T <= 8 else 4       # partial unroll: LLO visibility, bounded vregs

    @pl.when(tb == 0)
    def _init():
        hn_ref[...] = jnp.zeros_like(hn_ref)
        cn_ref[...] = jnp.zeros_like(cn_ref)

    cur2d = x_ref[...]                # bf16 (T*Bp, C): layer-0 input slab

    for l in range(L):
        # Hoisted input projection + bias: one big MXU matmul per layer per block.
        proj = jnp.dot(cur2d, w_ih[l][...],
                       preferred_element_type=jnp.float32) + b_ref[l]
        gproj[...] = proj.reshape(T, Bp, 4 * Hp)

        w_hh_l = w_hh_ref[l]          # bf16 (Hp, 4*Hp), hoisted out of the time loop

        def step(t, carry):
            h, c = carry              # f32 (Bp, Hp)
            gates = gproj[t] + jnp.dot(h.astype(jnp.bfloat16), w_hh_l,
                                       preferred_element_type=jnp.float32)
            # Lane-aligned gate slices (Hp is a multiple of 128).
            i_g = _sigmoid_via_tanh(gates[:, 0 * Hp:1 * Hp])
            f_g = _sigmoid_via_tanh(gates[:, 1 * Hp:2 * Hp])
            g_g = jnp.tanh(gates[:, 2 * Hp:3 * Hp])
            o_g = _sigmoid_via_tanh(gates[:, 3 * Hp:4 * Hp])
            c_new = f_g * c + i_g * g_g
            h_new = o_g * jnp.tanh(c_new)
            # Ragged tail: timesteps past the real sequence length leave state untouched.
            valid = (t0 + t) < seq_len
            h = jnp.where(valid, h_new, h)
            c = jnp.where(valid, c_new, c)
            h_seq[t] = h
            return h, c

        h_fin, c_fin = jax.lax.fori_loop(
            0, T, step, (hn_ref[l], cn_ref[l]), unroll=unroll)
        hn_ref[l] = h_fin
        cn_ref[l] = c_fin

        if l + 1 < L:
            # Staged per-timestep h of this layer feeds the next layer's projection.
            cur2d = h_seq[...].reshape(T * Bp, Hp).astype(jnp.bfloat16)

    # Head: tanh -> fc1 -> log-softmax, amortized over the whole block; lane-dense store.
    act = jnp.tanh(h_seq[...]).reshape(T * Bp, Hp).astype(jnp.bfloat16)
    logits = jnp.dot(act, w_fc_ref[...],
                     preferred_element_type=jnp.float32) + b_fc_ref[...]
    m = jnp.max(logits, axis=-1, keepdims=True)
    lse = jnp.log(jnp.sum(jnp.exp(logits - m), axis=-1, keepdims=True)) + m
    out_ref[...] = logits - lse


def lstm_policy_forward(x, packed, *, hidden_size, layer_count, charset_size,
                        t_block=32):
    S, B, C = x.shape
    assert C == charset_size
    H, L = hidden_size, layer_count
    Hp, Cp = packed["hidden_pad"], packed["charset_pad"]

    # Even t_block keeps the bf16 x block a multiple of 16 sublanes; ragged tails are
    # masked in-kernel (no divisor-shrinking perf cliff for odd/prime S).
    t_block = max(2, min(t_block, _round_up(S, 2)))
    t_block = _round_up(t_block, 2)
    n_blocks = -(-S // t_block)
    Sp = n_blocks * t_block
    Bp = _round_up(B, SUBLANE)

    # Stream activations in bf16; pad batch to 8 sublanes and the ragged time tail with
    # zeros.  Flatten (time, batch) so in-kernel slabs are 2-D and sublane-dense.
    x_p = jnp.zeros((Sp, Bp, C), jnp.bfloat16).at[:S, :B, :].set(
        x.astype(jnp.bfloat16)).reshape(Sp * Bp, C)

    args = [x_p]
    in_specs = [pl.BlockSpec((t_block * Bp, C), lambda tb: (tb, 0))]
    for w in packed["w_ih"]:
        args.append(w)
        in_specs.append(pl.BlockSpec(w.shape, lambda tb, nd=w.ndim: (0,) * nd))
    for name in ("w_hh", "b", "w_fc", "b_fc"):
        a = packed[name]
        args.append(a)
        in_specs.append(pl.BlockSpec(a.shape, lambda tb, nd=a.ndim: (0,) * nd))
    # TODO(synk): mark these constant-index weight specs single-buffered
    # (pipeline_mode=pl.Buffered(1)) to halve their VMEM footprint at large H/L.

    out_shape = (
        jax.ShapeDtypeStruct((Sp * Bp, Cp), jnp.float32),   # lane-dense log-probs
        jax.ShapeDtypeStruct((L, Bp, Hp), jnp.float32),     # h_n (resident state carrier)
        jax.ShapeDtypeStruct((L, Bp, Hp), jnp.float32),     # c_n (resident state carrier)
    )
    out_specs = (
        pl.BlockSpec((t_block * Bp, Cp), lambda tb: (tb, 0)),
        pl.BlockSpec((L, Bp, Hp), lambda tb: (0, 0, 0)),    # constant index -> resident
        pl.BlockSpec((L, Bp, Hp), lambda tb: (0, 0, 0)),
    )
    scratch_shapes = [
        pltpu.VMEM((t_block, Bp, 4 * Hp), jnp.float32),     # hoisted gate pre-activations
        pltpu.VMEM((t_block, Bp, Hp), jnp.float32),         # staged per-timestep h
    ]

    # VMEM budget (re-derived so the tiling also fits v7x's 64 MiB): double-buffered
    # x / out blocks + worst-case 2x resident weights & state + scratch, with headroom.
    est = (2 * t_block * Bp * C * 2
           + 2 * t_block * Bp * Cp * 4
           + 2 * sum(int(a.size) * a.dtype.itemsize for a in args[1:])
           + 2 * 2 * L * Bp * Hp * 4
           + t_block * Bp * (4 * Hp + Hp) * 4)
    vmem_limit = int(min(max(2 * est, 32 * 1024 * 1024), 48 * 1024 * 1024))

    kernel = functools.partial(_lstm_policy_kernel,
                               hidden_pad=Hp, layer_count=L, seq_len=S)

    log_probs2d, h_n, c_n = pl.pallas_call(
        kernel,
        out_shape=out_shape,
        grid_spec=pltpu.PrefetchScalarGridSpec(
            num_scalar_prefetch=0,
            grid=(n_blocks,),
            in_specs=in_specs,
            out_specs=out_specs,
            scratch_shapes=scratch_shapes,
        ),
        compiler_params=pltpu.CompilerParams(
            dimension_semantics=("arbitrary",),
            vmem_limit_bytes=vmem_limit,
        ),
    )(*args)

    log_probs = log_probs2d.reshape(Sp, Bp, Cp)[:S, :B, :C]
    return log_probs, h_n[:, :B, :H], c_n[:, :B, :H]


# ---------------------------------------------------------------------------
# Deterministic parameter init (matches LSTMPolicy.__init__):
#   lstm weights: xavier_normal, lstm biases: 0; fc1 weight: xavier_normal, bias 0.
# ---------------------------------------------------------------------------
def _xavier_normal(key, shape):
    fan_out, fan_in = shape
    std = (2.0 / (fan_in + fan_out)) ** 0.5
    return std * jax.random.normal(key, shape, dtype=jnp.float32)


def init_params(key, *, hidden_size, layer_count, charset_size):
    H, L, C = hidden_size, layer_count, charset_size
    params = {}
    for l in range(L):
        in_dim = C if l == 0 else H
        key, k1, k2 = jax.random.split(key, 3)
        w_ih = _xavier_normal(k1, (4 * H, in_dim))   # PyTorch weight_ih_l{l}
        w_hh = _xavier_normal(k2, (4 * H, H))        # PyTorch weight_hh_l{l}
        params[f"w_ih_T_{l}"] = jnp.transpose(w_ih)  # (in_dim, 4H)
        params[f"w_hh_T_{l}"] = jnp.transpose(w_hh)  # (H, 4H)
        params[f"b_{l}"] = jnp.zeros((1, 4 * H), jnp.float32)  # b_ih + b_hh = 0
    key, kf = jax.random.split(key)
    w_fc = _xavier_normal(kf, (C, H))                # fc1.weight
    params["w_fc_T"] = jnp.transpose(w_fc)           # (H, C)
    params["b_fc"] = jnp.zeros((1, C), jnp.float32)  # fc1.bias
    return params


def pack_params(params, *, hidden_size, layer_count, charset_size):
    """Pad H -> Hp and C -> Cp (multiples of 128) with lane-aligned per-gate columns,
    cast matmul weights to bf16, and give padded charset lanes a -1e30 bias."""
    H, L, C = hidden_size, layer_count, charset_size
    Hp = _round_up(H, LANE)
    Cp = _round_up(C, LANE)

    def pad_gate_cols(w):
        # (rows, 4H) -> (rows, 4Hp): gate g occupies lane-aligned cols [g*Hp, g*Hp+H).
        rows = w.shape[0]
        out = jnp.zeros((rows, 4 * Hp), jnp.float32)
        for g in range(4):
            out = out.at[:, g * Hp:g * Hp + H].set(w[:, g * H:(g + 1) * H])
        return out

    packed = {"hidden_pad": Hp, "charset_pad": Cp}
    w_ih_list, w_hh_list, b_list = [], [], []
    for l in range(L):
        w_ih = pad_gate_cols(params[f"w_ih_T_{l}"])               # (in_dim, 4Hp)
        if l > 0:  # pad contraction dim H -> Hp (zero rows: padded h is always 0)
            w_ih = jnp.zeros((Hp, 4 * Hp), jnp.float32).at[:H].set(w_ih)
        w_hh = jnp.zeros((Hp, 4 * Hp), jnp.float32).at[:H].set(
            pad_gate_cols(params[f"w_hh_T_{l}"]))
        w_ih_list.append(w_ih.astype(jnp.bfloat16))
        w_hh_list.append(w_hh.astype(jnp.bfloat16))
        b_list.append(pad_gate_cols(params[f"b_{l}"]))
    packed["w_ih"] = w_ih_list                          # per layer (layer-0 K differs)
    packed["w_hh"] = jnp.stack(w_hh_list)               # (L, Hp, 4Hp) bf16
    packed["b"] = jnp.stack(b_list)                     # (L, 1, 4Hp) f32
    w_fc = jnp.zeros((Hp, Cp), jnp.float32).at[:H, :C].set(params["w_fc_T"])
    packed["w_fc"] = w_fc.astype(jnp.bfloat16)          # (Hp, Cp) bf16
    # Padded charset lanes get ~-inf bias so they drop out of the log-softmax max/sum.
    packed["b_fc"] = jnp.full((1, Cp), -1e30, jnp.float32).at[:, :C].set(
        params["b_fc"])
    return packed


# Pure-JAX f32 reference used as correctness check.
def reference_forward(x, params, *, hidden_size, layer_count):
    S, B, C = x.shape
    H, L = hidden_size, layer_count
    h = jnp.zeros((L, B, H), jnp.float32)
    c = jnp.zeros((L, B, H), jnp.float32)
    outs = []
    for t in range(S):
        inp = x[t]
        hs, cs = [], []
        for l in range(L):
            gates = (inp @ params[f"w_ih_T_{l}"]
                     + h[l] @ params[f"w_hh_T_{l}"]
                     + params[f"b_{l}"])
            i_g = jax.nn.sigmoid(gates[:, :H])
            f_g = jax.nn.sigmoid(gates[:, H:2 * H])
            g_g = jnp.tanh(gates[:, 2 * H:3 * H])
            o_g = jax.nn.sigmoid(gates[:, 3 * H:])
            cc = f_g * c[l] + i_g * g_g
            hh = o_g * jnp.tanh(cc)
            hs.append(hh)
            cs.append(cc)
            inp = hh
        h = jnp.stack(hs)
        c = jnp.stack(cs)
        outs.append(inp)
    out = jnp.stack(outs)
    logits = jnp.tanh(out) @ params["w_fc_T"] + params["b_fc"]
    return jax.nn.log_softmax(logits, axis=2), h, c


if __name__ == "__main__":
    # Small shapes consistent with the module: inputs (seq, batch, charset_size).
    SEQ, BATCH = 8, 4
    CHARSET_SIZE = 16
    HIDDEN_SIZE = 32
    LAYER_COUNT = 2

    key = jax.random.PRNGKey(0)
    key_x, key_p = jax.random.split(key)
    x = jax.random.normal(key_x, (SEQ, BATCH, CHARSET_SIZE), dtype=jnp.float32)
    params = init_params(key_p, hidden_size=HIDDEN_SIZE,
                         layer_count=LAYER_COUNT, charset_size=CHARSET_SIZE)
    packed = pack_params(params, hidden_size=HIDDEN_SIZE,
                         layer_count=LAYER_COUNT, charset_size=CHARSET_SIZE)

    ref_lp, ref_h, ref_c = reference_forward(
        x, params, hidden_size=HIDDEN_SIZE, layer_count=LAYER_COUNT)

    # t_block=4: even split (grid=2, cross-block state carry).
    # t_block=6: ragged tail (grid=2, last block = 2 valid + 4 masked timesteps).
    for tb in (4, 6):
        log_probs, h_n, c_n = lstm_policy_forward(
            x, packed, hidden_size=HIDDEN_SIZE, layer_count=LAYER_COUNT,
            charset_size=CHARSET_SIZE, t_block=tb)
        jax.block_until_ready((log_probs, h_n, c_n))

        assert log_probs.shape == (SEQ, BATCH, CHARSET_SIZE)
        assert h_n.shape == (LAYER_COUNT, BATCH, HIDDEN_SIZE)
        assert c_n.shape == (LAYER_COUNT, BATCH, HIDDEN_SIZE)
        # bf16 MXU operands (f32 accumulation) -> relaxed tolerance vs. f32 reference.
        assert jnp.allclose(log_probs, ref_lp, atol=5e-2, rtol=5e-2)
        assert jnp.allclose(h_n, ref_h, atol=5e-2, rtol=5e-2)
        assert jnp.allclose(c_n, ref_c, atol=5e-2, rtol=5e-2)

    print("KERNEL_OK")
</pallas_src>

<mosaic_0001>
module attributes {stable_mosaic.version = 11 : i64} {
  func.func @_lstm_policy_kernel(%arg0: i32, %arg1: memref<32x16xbf16, #tpu.memory_space<vmem>>, %arg2: memref<16x512xbf16, #tpu.memory_space<vmem>>, %arg3: memref<128x512xbf16, #tpu.memory_space<vmem>>, %arg4: memref<2x128x512xbf16, #tpu.memory_space<vmem>>, %arg5: memref<2x1x512xf32, #tpu.memory_space<vmem>>, %arg6: memref<128x128xbf16, #tpu.memory_space<vmem>>, %arg7: memref<1x128xf32, #tpu.memory_space<vmem>>, %arg8: memref<32x128xf32, #tpu.memory_space<vmem>>, %arg9: memref<2x8x128xf32, #tpu.memory_space<vmem>>, %arg10: memref<2x8x128xf32, #tpu.memory_space<vmem>>, %arg11: memref<4x8x512xf32, #tpu.memory_space<vmem>>, %arg12: memref<4x8x128xf32, #tpu.memory_space<vmem>>) attributes {dimension_semantics = [#tpu.dimension_semantics<arbitrary>], iteration_bounds = array<i64: 2>, scalar_prefetch = 0 : i64, scratch_operands = 2 : i64, tpu.core_type = #tpu.core_type<tc>, window_params = [{transform_indices = @transform_0, window_bounds = array<i64: 32, 16>}, {pipeline_mode = #tpu.pipeline_mode<synchronous>, transform_indices = @transform_1, window_bounds = array<i64: 16, 512>}, {pipeline_mode = #tpu.pipeline_mode<synchronous>, transform_indices = @transform_2, window_bounds = array<i64: 128, 512>}, {pipeline_mode = #tpu.pipeline_mode<synchronous>, transform_indices = @transform_3, window_bounds = array<i64: 2, 128, 512>}, {pipeline_mode = #tpu.pipeline_mode<synchronous>, transform_indices = @transform_4, window_bounds = array<i64: 2, 1, 512>}, {pipeline_mode = #tpu.pipeline_mode<synchronous>, transform_indices = @transform_5, window_bounds = array<i64: 128, 128>}, {pipeline_mode = #tpu.pipeline_mode<synchronous>, transform_indices = @transform_6, window_bounds = array<i64: 1, 128>}, {transform_indices = @transform_7, window_bounds = array<i64: 32, 128>}, {pipeline_mode = #tpu.pipeline_mode<synchronous>, transform_indices = @transform_8, window_bounds = array<i64: 2, 8, 128>}, {pipeline_mode = #tpu.pipeline_mode<synchronous>, transform_indices = @transform_9, window_bounds = array<i64: 2, 8, 128>}]} {
    %c4_i32 = arith.constant 4 : i32
    %0 = arith.muli %arg0, %c4_i32 : i32
    %c0_i32 = arith.constant 0 : i32
    %1 = arith.cmpi eq, %arg0, %c0_i32 : i32
    %2 = arith.extui %1 : i1 to i32
    %c0_i32_0 = arith.constant 0 : i32
    %3 = arith.cmpi ne, %2, %c0_i32_0 : i32
    scf.if %3 {
      %cst_189 = arith.constant 0.000000e+00 : f32
      %429 = vector.broadcast %cst_189 : f32 to vector<2x8x128xf32>
      %c0_190 = arith.constant 0 : index
      %c0_191 = arith.constant 0 : index
      %c0_192 = arith.constant 0 : index
      %430 = vector.load %arg9[%c0_190, %c0_191, %c0_192] : memref<2x8x128xf32, #tpu.memory_space<vmem>>, vector<2x8x128xf32>
      tpu.vector_store %arg9[%c0_190, %c0_191, %c0_192], %429 {strides = array<i32>} : memref<2x8x128xf32, #tpu.memory_space<vmem>>, vector<2x8x128xf32>,
      %cst_193 = arith.constant 0.000000e+00 : f32
      %431 = vector.broadcast %cst_193 : f32 to vector<2x8x128xf32>
      %c0_194 = arith.constant 0 : index
      %c0_195 = arith.constant 0 : index
      %c0_196 = arith.constant 0 : index
      %432 = vector.load %arg10[%c0_194, %c0_195, %c0_196] : memref<2x8x128xf32, #tpu.memory_space<vmem>>, vector<2x8x128xf32>
      tpu.vector_store %arg10[%c0_194, %c0_195, %c0_196], %431 {strides = array<i32>} : memref<2x8x128xf32, #tpu.memory_space<vmem>>, vector<2x8x128xf32>,
    } else {
    }
    %c0 = arith.constant 0 : index
    %c0_1 = arith.constant 0 : index
    %4 = vector.load %arg1[%c0, %c0_1] : memref<32x16xbf16, #tpu.memory_space<vmem>>, vector<32x16xbf16>
    %c0_2 = arith.constant 0 : index
    %c0_3 = arith.constant 0 : index
    %5 = vector.load %arg2[%c0_2, %c0_3] : memref<16x512xbf16, #tpu.memory_space<vmem>>, vector<16x512xbf16>
    %cst = arith.constant dense<0.000000e+00> : vector<32x512xf32>
    %6 = tpu.matmul %4, %5, %cst {dimension_numbers = #tpu.dot_dimension_numbers<[1], [0], [0], [1], [0, 0, 1, 1], [], []>} : vector<32x16xbf16>, vector<16x512xbf16>, vector<32x512xf32> -> vector<32x512xf32>
    %c0_4 = arith.constant 0 : index
    %c0_5 = arith.constant 0 : index
    %c0_6 = arith.constant 0 : index
    %7 = vector.load %arg5[%c0_4, %c0_5, %c0_6] : memref<2x1x512xf32, #tpu.memory_space<vmem>>, vector<1x1x512xf32>
    %8 = vector.shape_cast %7 : vector<1x1x512xf32> to vector<1x512xf32>
    %9 = vector.broadcast %8 : vector<1x512xf32> to vector<32x512xf32>
    %10 = arith.addf %6, %9 : vector<32x512xf32>
    %11 = vector.shape_cast %10 : vector<32x512xf32> to vector<4x8x512xf32>
    %c0_7 = arith.constant 0 : index
    %c0_8 = arith.constant 0 : index
    %c0_9 = arith.constant 0 : index
    %12 = vector.load %arg11[%c0_7, %c0_8, %c0_9] : memref<4x8x512xf32, #tpu.memory_space<vmem>>, vector<4x8x512xf32>
    tpu.vector_store %arg11[%c0_7, %c0_8, %c0_9], %11 {strides = array<i32>} : memref<4x8x512xf32, #tpu.memory_space<vmem>>, vector<4x8x512xf32>,
    %c0_10 = arith.constant 0 : index
    %c0_11 = arith.constant 0 : index
    %c0_12 = arith.constant 0 : index
    %13 = vector.load %arg4[%c0_10, %c0_11, %c0_12] : memref<2x128x512xbf16, #tpu.memory_space<vmem>>, vector<1x128x512xbf16>
    %14 = vector.shape_cast %13 : vector<1x128x512xbf16> to vector<128x512xbf16>
    %c0_13 = arith.constant 0 : index
    %c0_14 = arith.constant 0 : index
    %c0_15 = arith.constant 0 : index
    %15 = vector.load %arg9[%c0_13, %c0_14, %c0_15] : memref<2x8x128xf32, #tpu.memory_space<vmem>>, vector<1x8x128xf32>
    %16 = vector.shape_cast %15 : vector<1x8x128xf32> to vector<8x128xf32>
    %c0_16 = arith.constant 0 : index
    %c0_17 = arith.constant 0 : index
    %c0_18 = arith.constant 0 : index
    %17 = vector.load %arg10[%c0_16, %c0_17, %c0_18] : memref<2x8x128xf32, #tpu.memory_space<vmem>>, vector<1x8x128xf32>
    %18 = vector.shape_cast %17 : vector<1x8x128xf32> to vector<8x128xf32>
    %c0_i32_19 = arith.constant 0 : i32
    %19 = arith.index_cast %c0_i32_19 : i32 to index
    %c0_20 = arith.constant 0 : index
    %c0_21 = arith.constant 0 : index
    %20 = vector.load %arg11[%19, %c0_20, %c0_21] : memref<4x8x512xf32, #tpu.memory_space<vmem>>, vector<1x8x512xf32>
    %21 = vector.shape_cast %20 : vector<1x8x512xf32> to vector<8x512xf32>
    %22 = arith.truncf %16 : vector<8x128xf32> to vector<8x128xbf16>
    %cst_22 = arith.constant dense<0.000000e+00> : vector<8x512xf32>
    %23 = tpu.matmul %22, %14, %cst_22 {dimension_numbers = #tpu.dot_dimension_numbers<[1], [0], [0], [1], [0, 0, 1, 1], [], []>} : vector<8x128xbf16>, vector<128x512xbf16>, vector<8x512xf32> -> vector<8x512xf32>
    %24 = arith.addf %21, %23 : vector<8x512xf32>
    %25 = vector.extract_strided_slice %24 {offsets = [0, 0], sizes = [8, 128], strides = [1, 1]} : vector<8x512xf32> to vector<8x128xf32>
    %cst_23 = arith.constant 5.000000e-01 : f32
    %26 = vector.broadcast %cst_23 : f32 to vector<8x128xf32>
    %27 = arith.mulf %26, %25 : vector<8x128xf32>
    %28 = math.tanh %27 : vector<8x128xf32>
    %cst_24 = arith.constant 1.000000e+00 : f32
    %29 = vector.broadcast %cst_24 : f32 to vector<8x128xf32>
    %30 = arith.addf %28, %29 : vector<8x128xf32>
    %cst_25 = arith.constant 5.000000e-01 : f32
    %31 = vector.broadcast %cst_25 : f32 to vector<8x128xf32>
    %32 = arith.mulf %31, %30 : vector<8x128xf32>
    %33 = vector.extract_strided_slice %24 {offsets = [0, 128], sizes = [8, 128], strides = [1, 1]} : vector<8x512xf32> to vector<8x128xf32>
    %cst_26 = arith.constant 5.000000e-01 : f32
    %34 = vector.broadcast %cst_26 : f32 to vector<8x128xf32>
    %35 = arith.mulf %34, %33 : vector<8x128xf32>
    %36 = math.tanh %35 : vector<8x128xf32>
    %cst_27 = arith.constant 1.000000e+00 : f32
    %37 = vector.broadcast %cst_27 : f32 to vector<8x128xf32>
    %38 = arith.addf %36, %37 : vector<8x128xf32>
    %cst_28 = arith.constant 5.000000e-01 : f32
    %39 = vector.broadcast %cst_28 : f32 to vector<8x128xf32>
    %40 = arith.mulf %39, %38 : vector<8x128xf32>
    %41 = vector.extract_strided_slice %24 {offsets = [0, 256], sizes = [8, 128], strides = [1, 1]} : vector<8x512xf32> to vector<8x128xf32>
    %42 = math.tanh %41 : vector<8x128xf32>
    %43 = vector.extract_strided_slice %24 {offsets = [0, 384], sizes = [8, 128], strides = [1, 1]} : vector<8x512xf32> to vector<8x128xf32>
    %cst_29 = arith.constant 5.000000e-01 : f32
    %44 = vector.broadcast %cst_29 : f32 to vector<8x128xf32>
    %45 = arith.mulf %44, %43 : vector<8x128xf32>
    %46 = math.tanh %45 : vector<8x128xf32>
    %cst_30 = arith.constant 1.000000e+00 : f32
    %47 = vector.broadcast %cst_30 : f32 to vector<8x128xf32>
    %48 = arith.addf %46, %47 : vector<8x128xf32>
    %cst_31 = arith.constant 5.000000e-01 : f32
    %49 = vector.broadcast %cst_31 : f32 to vector<8x128xf32>
    %50 = arith.mulf %49, %48 : vector<8x128xf32>
    %51 = arith.mulf %40, %18 : vector<8x128xf32>
    %52 = arith.mulf %32, %42 : vector<8x128xf32>
    %53 = arith.addf %51, %52 : vector<8x128xf32>
    %54 = math.tanh %53 : vector<8x128xf32>
    %55 = arith.mulf %50, %54 : vector<8x128xf32>
    %56 = arith.addi %0, %c0_i32_19 : i32
    %c8_i32 = arith.constant 8 : i32
    %57 = arith.cmpi slt, %56, %c8_i32 : i32
    %58 = arith.select %57, %55, %16 : vector<8x128xf32>
    %59 = arith.select %57, %53, %18 : vector<8x128xf32>
    %60 = arith.index_cast %c0_i32_19 : i32 to index
    %c0_32 = arith.constant 0 : index
    %c0_33 = arith.constant 0 : index
    %61 = vector.load %arg12[%60, %c0_32, %c0_33] : memref<4x8x128xf32, #tpu.memory_space<vmem>>, vector<1x8x128xf32>
    %62 = vector.shape_cast %61 : vector<1x8x128xf32> to vector<8x128xf32>
    %63 = vector.shape_cast %58 : vector<8x128xf32> to vector<1x8x128xf32>
    tpu.vector_store %arg12[%60, %c0_32, %c0_33], %63 {strides = array<i32>} : memref<4x8x128xf32, #tpu.memory_space<vmem>>, vector<1x8x128xf32>,
    %c1_i32 = arith.constant 1 : i32
    %64 = arith.index_cast %c1_i32 : i32 to index
    %c0_34 = arith.constant 0 : index
    %c0_35 = arith.constant 0 : index
    %65 = vector.load %arg11[%64, %c0_34, %c0_35] : memref<4x8x512xf32, #tpu.memory_space<vmem>>, vector<1x8x512xf32>
    %66 = vector.shape_cast %65 : vector<1x8x512xf32> to vector<8x512xf32>
    %67 = arith.truncf %58 : vector<8x128xf32> to vector<8x128xbf16>
    %cst_36 = arith.constant dense<0.000000e+00> : vector<8x512xf32>
    %68 = tpu.matmul %67, %14, %cst_36 {dimension_numbers = #tpu.dot_dimension_numbers<[1], [0], [0], [1], [0, 0, 1, 1], [], []>} : vector<8x128xbf16>, vector<128x512xbf16>, vector<8x512xf32> -> vector<8x512xf32>
    %69 = arith.addf %66, %68 : vector<8x512xf32>
    %70 = vector.extract_strided_slice %69 {offsets = [0, 0], sizes = [8, 128], strides = [1, 1]} : vector<8x512xf32> to vector<8x128xf32>
    %cst_37 = arith.constant 5.000000e-01 : f32
    %71 = vector.broadcast %cst_37 : f32 to vector<8x128xf32>
    %72 = arith.mulf %71, %70 : vector<8x128xf32>
    %73 = math.tanh %72 : vector<8x128xf32>
    %cst_38 = arith.constant 1.000000e+00 : f32
    %74 = vector.broadcast %cst_38 : f32 to vector<8x128xf32>
    %75 = arith.addf %73, %74 : vector<8x128xf32>
    %cst_39 = arith.constant 5.000000e-01 : f32
    %76 = vector.broadcast %cst_39 : f32 to vector<8x128xf32>
    %77 = arith.mulf %76, %75 : vector<8x128xf32>
    %78 = vector.extract_strided_slice %69 {offsets = [0, 128], sizes = [8, 128], strides = [1, 1]} : vector<8x512xf32> to vector<8x128xf32>
    %cst_40 = arith.constant 5.000000e-01 : f32
    %79 = vector.broadcast %cst_40 : f32 to vector<8x128xf32>
    %80 = arith.mulf %79, %78 : vector<8x128xf32>
    %81 = math.tanh %80 : vector<8x128xf32>
    %cst_41 = arith.constant 1.000000e+00 : f32
    %82 = vector.broadcast %cst_41 : f32 to vector<8x128xf32>
    %83 = arith.addf %81, %82 : vector<8x128xf32>
    %cst_42 = arith.constant 5.000000e-01 : f32
    %84 = vector.broadcast %cst_42 : f32 to vector<8x128xf32>
    %85 = arith.mulf %84, %83 : vector<8x128xf32>
    %86 = vector.extract_strided_slice %69 {offsets = [0, 256], sizes = [8, 128], strides = [1, 1]} : vector<8x512xf32> to vector<8x128xf32>
    %87 = math.tanh %86 : vector<8x128xf32>
    %88 = vector.extract_strided_slice %69 {offsets = [0, 384], sizes = [8, 128], strides = [1, 1]} : vector<8x512xf32> to vector<8x128xf32>
    %cst_43 = arith.constant 5.000000e-01 : f32
    %89 = vector.broadcast %cst_43 : f32 to vector<8x128xf32>
    %90 = arith.mulf %89, %88 : vector<8x128xf32>
    %91 = math.tanh %90 : vector<8x128xf32>
    %cst_44 = arith.constant 1.000000e+00 : f32
    %92 = vector.broadcast %cst_44 : f32 to vector<8x128xf32>
    %93 = arith.addf %91, %92 : vector<8x128xf32>
    %cst_45 = arith.constant 5.000000e-01 : f32
    %94 = vector.broadcast %cst_45 : f32 to vector<8x128xf32>
    %95 = arith.mulf %94, %93 : vector<8x128xf32>
    %96 = arith.mulf %85, %59 : vector<8x128xf32>
    %97 = arith.mulf %77, %87 : vector<8x128xf32>
    %98 = arith.addf %96, %97 : vector<8x128xf32>
    %99 = math.tanh %98 : vector<8x128xf32>
    %100 = arith.mulf %95, %99 : vector<8x128xf32>
    %101 = arith.addi %0, %c1_i32 : i32
    %c8_i32_46 = arith.constant 8 : i32
    %102 = arith.cmpi slt, %101, %c8_i32_46 : i32
    %103 = arith.select %102, %100, %58 : vector<8x128xf32>
    %104 = arith.select %102, %98, %59 : vector<8x128xf32>
    %105 = arith.index_cast %c1_i32 : i32 to index
    %c0_47 = arith.constant 0 : index
    %c0_48 = arith.constant 0 : index
    %106 = vector.load %arg12[%105, %c0_47, %c0_48] : memref<4x8x128xf32, #tpu.memory_space<vmem>>, vector<1x8x128xf32>
    %107 = vector.shape_cast %106 : vector<1x8x128xf32> to vector<8x128xf32>
    %108 = vector.shape_cast %103 : vector<8x128xf32> to vector<1x8x128xf32>
    tpu.vector_store %arg12[%105, %c0_47, %c0_48], %108 {strides = array<i32>} : memref<4x8x128xf32, #tpu.memory_space<vmem>>, vector<1x8x128xf32>,
    %c2_i32 = arith.constant 2 : i32
    %109 = arith.index_cast %c2_i32 : i32 to index
    %c0_49 = arith.constant 0 : index
    %c0_50 = arith.constant 0 : index
    %110 = vector.load %arg11[%109, %c0_49, %c0_50] : memref<4x8x512xf32, #tpu.memory_space<vmem>>, vector<1x8x512xf32>
    %111 = vector.shape_cast %110 : vector<1x8x512xf32> to vector<8x512xf32>
    %112 = arith.truncf %103 : vector<8x128xf32> to vector<8x128xbf16>
    %cst_51 = arith.constant dense<0.000000e+00> : vector<8x512xf32>
    %113 = tpu.matmul %112, %14, %cst_51 {dimension_numbers = #tpu.dot_dimension_numbers<[1], [0], [0], [1], [0, 0, 1, 1], [], []>} : vector<8x128xbf16>, vector<128x512xbf16>, vector<8x512xf32> -> vector<8x512xf32>
    %114 = arith.addf %111, %113 : vector<8x512xf32>
    %115 = vector.extract_strided_slice %114 {offsets = [0, 0], sizes = [8, 128], strides = [1, 1]} : vector<8x512xf32> to vector<8x128xf32>
    %cst_52 = arith.constant 5.000000e-01 : f32
    %116 = vector.broadcast %cst_52 : f32 to vector<8x128xf32>
    %117 = arith.mulf %116, %115 : vector<8x128xf32>
    %118 = math.tanh %117 : vector<8x128xf32>
    %cst_53 = arith.constant 1.000000e+00 : f32
    %119 = vector.broadcast %cst_53 : f32 to vector<8x128xf32>
    %120 = arith.addf %118, %119 : vector<8x128xf32>
    %cst_54 = arith.constant 5.000000e-01 : f32
    %121 = vector.broadcast %cst_54 : f32 to vector<8x128xf32>
    %122 = arith.mulf %121, %120 : vector<8x128xf32>
    %123 = vector.extract_strided_slice %114 {offsets = [0, 128], sizes = [8, 128], strides = [1, 1]} : vector<8x512xf32> to vector<8x128xf32>
    %cst_55 = arith.constant 5.000000e-01 : f32
    %124 = vector.broadcast %cst_55 : f32 to vector<8x128xf32>
    %125 = arith.mulf %124, %123 : vector<8x128xf32>
    %126 = math.tanh %125 : vector<8x128xf32>
    %cst_56 = arith.constant 1.000000e+00 : f32
    %127 = vector.broadcast %cst_56 : f32 to vector<8x128xf32>
    %128 = arith.addf %126, %127 : vector<8x128xf32>
    %cst_57 = arith.constant 5.000000e-01 : f32
    %129 = vector.broadcast %cst_57 : f32 to vector<8x128xf32>
    %130 = arith.mulf %129, %128 : vector<8x128xf32>
    %131 = vector.extract_strided_slice %114 {offsets = [0, 256], sizes = [8, 128], strides = [1, 1]} : vector<8x512xf32> to vector<8x128xf32>
    %132 = math.tanh %131 : vector<8x128xf32>
    %133 = vector.extract_strided_slice %114 {offsets = [0, 384], sizes = [8, 128], strides = [1, 1]} : vector<8x512xf32> to vector<8x128xf32>
    %cst_58 = arith.constant 5.000000e-01 : f32
    %134 = vector.broadcast %cst_58 : f32 to vector<8x128xf32>
    %135 = arith.mulf %134, %133 : vector<8x128xf32>
    %136 = math.tanh %135 : vector<8x128xf32>
    %cst_59 = arith.constant 1.000000e+00 : f32
    %137 = vector.broadcast %cst_59 : f32 to vector<8x128xf32>
    %138 = arith.addf %136, %137 : vector<8x128xf32>
    %cst_60 = arith.constant 5.000000e-01 : f32
    %139 = vector.broadcast %cst_60 : f32 to vector<8x128xf32>
    %140 = arith.mulf %139, %138 : vector<8x128xf32>
    %141 = arith.mulf %130, %104 : vector<8x128xf32>
    %142 = arith.mulf %122, %132 : vector<8x128xf32>
    %143 = arith.addf %141, %142 : vector<8x128xf32>
    %144 = math.tanh %143 : vector<8x128xf32>
    %145 = arith.mulf %140, %144 : vector<8x128xf32>
    %146 = arith.addi %0, %c2_i32 : i32
    %c8_i32_61 = arith.constant 8 : i32
    %147 = arith.cmpi slt, %146, %c8_i32_61 : i32
    %148 = arith.select %147, %145, %103 : vector<8x128xf32>
    %149 = arith.select %147, %143, %104 : vector<8x128xf32>
    %150 = arith.index_cast %c2_i32 : i32 to index
    %c0_62 = arith.constant 0 : index
    %c0_63 = arith.constant 0 : index
    %151 = vector.load %arg12[%150, %c0_62, %c0_63] : memref<4x8x128xf32, #tpu.memory_space<vmem>>, vector<1x8x128xf32>
    %152 = vector.shape_cast %151 : vector<1x8x128xf32> to vector<8x128xf32>
    %153 = vector.shape_cast %148 : vector<8x128xf32> to vector<1x8x128xf32>
    tpu.vector_store %arg12[%150, %c0_62, %c0_63], %153 {strides = array<i32>} : memref<4x8x128xf32, #tpu.memory_space<vmem>>, vector<1x8x128xf32>,
    %c3_i32 = arith.constant 3 : i32
    %154 = arith.index_cast %c3_i32 : i32 to index
    %c0_64 = arith.constant 0 : index
    %c0_65 = arith.constant 0 : index
    %155 = vector.load %arg11[%154, %c0_64, %c0_65] : memref<4x8x512xf32, #tpu.memory_space<vmem>>, vector<1x8x512xf32>
    %156 = vector.shape_cast %155 : vector<1x8x512xf32> to vector<8x512xf32>
    %157 = arith.truncf %148 : vector<8x128xf32> to vector<8x128xbf16>
    %cst_66 = arith.constant dense<0.000000e+00> : vector<8x512xf32>
    %158 = tpu.matmul %157, %14, %cst_66 {dimension_numbers = #tpu.dot_dimension_numbers<[1], [0], [0], [1], [0, 0, 1, 1], [], []>} : vector<8x128xbf16>, vector<128x512xbf16>, vector<8x512xf32> -> vector<8x512xf32>
    %159 = arith.addf %156, %158 : vector<8x512xf32>
    %160 = vector.extract_strided_slice %159 {offsets = [0, 0], sizes = [8, 128], strides = [1, 1]} : vector<8x512xf32> to vector<8x128xf32>
    %cst_67 = arith.constant 5.000000e-01 : f32
    %161 = vector.broadcast %cst_67 : f32 to vector<8x128xf32>
    %162 = arith.mulf %161, %160 : vector<8x128xf32>
    %163 = math.tanh %162 : vector<8x128xf32>
    %cst_68 = arith.constant 1.000000e+00 : f32
    %164 = vector.broadcast %cst_68 : f32 to vector<8x128xf32>
    %165 = arith.addf %163, %164 : vector<8x128xf32>
    %cst_69 = arith.constant 5.000000e-01 : f32
    %166 = vector.broadcast %cst_69 : f32 to vector<8x128xf32>
    %167 = arith.mulf %166, %165 : vector<8x128xf32>
    %168 = vector.extract_strided_slice %159 {offsets = [0, 128], sizes = [8, 128], strides = [1, 1]} : vector<8x512xf32> to vector<8x128xf32>
    %cst_70 = arith.constant 5.000000e-01 : f32
    %169 = vector.broadcast %cst_70 : f32 to vector<8x128xf32>
    %170 = arith.mulf %169, %168 : vector<8x128xf32>
    %171 = math.tanh %170 : vector<8x128xf32>
    %cst_71 = arith.constant 1.000000e+00 : f32
    %172 = vector.broadcast %cst_71 : f32 to vector<8x128xf32>
    %173 = arith.addf %171, %172 : vector<8x128xf32>
    %cst_72 = arith.constant 5.000000e-01 : f32
    %174 = vector.broadcast %cst_72 : f32 to vector<8x128xf32>
    %175 = arith.mulf %174, %173 : vector<8x128xf32>
    %176 = vector.extract_strided_slice %159 {offsets = [0, 256], sizes = [8, 128], strides = [1, 1]} : vector<8x512xf32> to vector<8x128xf32>
    %177 = math.tanh %176 : vector<8x128xf32>
    %178 = vector.extract_strided_slice %159 {offsets = [0, 384], sizes = [8, 128], strides = [1, 1]} : vector<8x512xf32> to vector<8x128xf32>
    %cst_73 = arith.constant 5.000000e-01 : f32
    %179 = vector.broadcast %cst_73 : f32 to vector<8x128xf32>
    %180 = arith.mulf %179, %178 : vector<8x128xf32>
    %181 = math.tanh %180 : vector<8x128xf32>
    %cst_74 = arith.constant 1.000000e+00 : f32
    %182 = vector.broadcast %cst_74 : f32 to vector<8x128xf32>
    %183 = arith.addf %181, %182 : vector<8x128xf32>
    %cst_75 = arith.constant 5.000000e-01 : f32
    %184 = vector.broadcast %cst_75 : f32 to vector<8x128xf32>
    %185 = arith.mulf %184, %183 : vector<8x128xf32>
    %186 = arith.mulf %175, %149 : vector<8x128xf32>
    %187 = arith.mulf %167, %177 : vector<8x128xf32>
    %188 = arith.addf %186, %187 : vector<8x128xf32>
    %189 = math.tanh %188 : vector<8x128xf32>
    %190 = arith.mulf %185, %189 : vector<8x128xf32>
    %191 = arith.addi %0, %c3_i32 : i32
    %c8_i32_76 = arith.constant 8 : i32
    %192 = arith.cmpi slt, %191, %c8_i32_76 : i32
    %193 = arith.select %192, %190, %148 : vector<8x128xf32>
    %194 = arith.select %192, %188, %149 : vector<8x128xf32>
    %195 = arith.index_cast %c3_i32 : i32 to index
    %c0_77 = arith.constant 0 : index
    %c0_78 = arith.constant 0 : index
    %196 = vector.load %arg12[%195, %c0_77, %c0_78] : memref<4x8x128xf32, #tpu.memory_space<vmem>>, vector<1x8x128xf32>
    %197 = vector.shape_cast %196 : vector<1x8x128xf32> to vector<8x128xf32>
    %198 = vector.shape_cast %193 : vector<8x128xf32> to vector<1x8x128xf32>
    tpu.vector_store %arg12[%195, %c0_77, %c0_78], %198 {strides = array<i32>} : memref<4x8x128xf32, #tpu.memory_space<vmem>>, vector<1x8x128xf32>,
    %c4_i32_79 = arith.constant 4 : i32
    %c0_80 = arith.constant 0 : index
    %c0_81 = arith.constant 0 : index
    %c0_82 = arith.constant 0 : index
    %199 = vector.load %arg9[%c0_80, %c0_81, %c0_82] : memref<2x8x128xf32, #tpu.memory_space<vmem>>, vector<1x8x128xf32>
    %200 = vector.shape_cast %199 : vector<1x8x128xf32> to vector<8x128xf32>
    %201 = vector.shape_cast %193 : vector<8x128xf32> to vector<1x8x128xf32>
    tpu.vector_store %arg9[%c0_80, %c0_81, %c0_82], %201 {strides = array<i32>} : memref<2x8x128xf32, #tpu.memory_space<vmem>>, vector<1x8x128xf32>,
    %c0_83 = arith.constant 0 : index
    %c0_84 = arith.constant 0 : index
    %c0_85 = arith.constant 0 : index
    %202 = vector.load %arg10[%c0_83, %c0_84, %c0_85] : memref<2x8x128xf32, #tpu.memory_space<vmem>>, vector<1x8x128xf32>
    %203 = vector.shape_cast %202 : vector<1x8x128xf32> to vector<8x128xf32>
    %204 = vector.shape_cast %194 : vector<8x128xf32> to vector<1x8x128xf32>
    tpu.vector_store %arg10[%c0_83, %c0_84, %c0_85], %204 {strides = array<i32>} : memref<2x8x128xf32, #tpu.memory_space<vmem>>, vector<1x8x128xf32>,
    %c0_86 = arith.constant 0 : index
    %c0_87 = arith.constant 0 : index
    %c0_88 = arith.constant 0 : index
    %205 = vector.load %arg12[%c0_86, %c0_87, %c0_88] : memref<4x8x128xf32, #tpu.memory_space<vmem>>, vector<4x8x128xf32>
    %206 = vector.shape_cast %205 : vector<4x8x128xf32> to vector<32x128xf32>
    %207 = arith.truncf %206 : vector<32x128xf32> to vector<32x128xbf16>
    %c0_89 = arith.constant 0 : index
    %c0_90 = arith.constant 0 : index
    %208 = vector.load %arg3[%c0_89, %c0_90] : memref<128x512xbf16, #tpu.memory_space<vmem>>, vector<128x512xbf16>
    %cst_91 = arith.constant dense<0.000000e+00> : vector<32x512xf32>
    %209 = tpu.matmul %207, %208, %cst_91 {dimension_numbers = #tpu.dot_dimension_numbers<[1], [0], [0], [1], [0, 0, 1, 1], [], []>} : vector<32x128xbf16>, vector<128x512xbf16>, vector<32x512xf32> -> vector<32x512xf32>
    %c1 = arith.constant 1 : index
    %c0_92 = arith.constant 0 : index
    %c0_93 = arith.constant 0 : index
    %210 = vector.load %arg5[%c1, %c0_92, %c0_93] : memref<2x1x512xf32, #tpu.memory_space<vmem>>, vector<1x1x512xf32>
    %211 = vector.shape_cast %210 : vector<1x1x512xf32> to vector<1x512xf32>
    %212 = vector.broadcast %211 : vector<1x512xf32> to vector<32x512xf32>
    %213 = arith.addf %209, %212 : vector<32x512xf32>
    %214 = vector.shape_cast %213 : vector<32x512xf32> to vector<4x8x512xf32>
    %c0_94 = arith.constant 0 : index
    %c0_95 = arith.constant 0 : index
    %c0_96 = arith.constant 0 : index
    %215 = vector.load %arg11[%c0_94, %c0_95, %c0_96] : memref<4x8x512xf32, #tpu.memory_space<vmem>>, vector<4x8x512xf32>
    tpu.vector_store %arg11[%c0_94, %c0_95, %c0_96], %214 {strides = array<i32>} : memref<4x8x512xf32, #tpu.memory_space<vmem>>, vector<4x8x512xf32>,
    %c1_97 = arith.constant 1 : index
    %c0_98 = arith.constant 0 : index
    %c0_99 = arith.constant 0 : index
    %216 = vector.load %arg4[%c1_97, %c0_98, %c0_99] : memref<2x128x512xbf16, #tpu.memory_space<vmem>>, vector<1x128x512xbf16>
    %217 = vector.shape_cast %216 : vector<1x128x512xbf16> to vector<128x512xbf16>
    %c1_100 = arith.constant 1 : index
    %c0_101 = arith.constant 0 : index
    %c0_102 = arith.constant 0 : index
    %218 = vector.load %arg9[%c1_100, %c0_101, %c0_102] : memref<2x8x128xf32, #tpu.memory_space<vmem>>, vector<1x8x128xf32>
    %219 = vector.shape_cast %218 : vector<1x8x128xf32> to vector<8x128xf32>
    %c1_103 = arith.constant 1 : index
    %c0_104 = arith.constant 0 : index
    %c0_105 = arith.constant 0 : index
    %220 = vector.load %arg10[%c1_103, %c0_104, %c0_105] : memref<2x8x128xf32, #tpu.memory_space<vmem>>, vector<1x8x128xf32>
    %221 = vector.shape_cast %220 : vector<1x8x128xf32> to vector<8x128xf32>
    %c0_i32_106 = arith.constant 0 : i32
    %222 = arith.index_cast %c0_i32_106 : i32 to index
    %c0_107 = arith.constant 0 : index
    %c0_108 = arith.constant 0 : index
    %223 = vector.load %arg11[%222, %c0_107, %c0_108] : memref<4x8x512xf32, #tpu.memory_space<vmem>>, vector<1x8x512xf32>
    %224 = vector.shape_cast %223 : vector<1x8x512xf32> to vector<8x512xf32>
    %225 = arith.truncf %219 : vector<8x128xf32> to vector<8x128xbf16>
    %cst_109 = arith.constant dense<0.000000e+00> : vector<8x512xf32>
    %226 = tpu.matmul %225, %217, %cst_109 {dimension_numbers = #tpu.dot_dimension_numbers<[1], [0], [0], [1], [0, 0, 1, 1], [], []>} : vector<8x128xbf16>, vector<128x512xbf16>, vector<8x512xf32> -> vector<8x512xf32>
    %227 = arith.addf %224, %226 : vector<8x512xf32>
    %228 = vector.extract_strided_slice %227 {offsets = [0, 0], sizes = [8, 128], strides = [1, 1]} : vector<8x512xf32> to vector<8x128xf32>
    %cst_110 = arith.constant 5.000000e-01 : f32
    %229 = vector.broadcast %cst_110 : f32 to vector<8x128xf32>
    %230 = arith.mulf %229, %228 : vector<8x128xf32>
    %231 = math.tanh %230 : vector<8x128xf32>
    %cst_111 = arith.constant 1.000000e+00 : f32
    %232 = vector.broadcast %cst_111 : f32 to vector<8x128xf32>
    %233 = arith.addf %231, %232 : vector<8x128xf32>
    %cst_112 = arith.constant 5.000000e-01 : f32
    %234 = vector.broadcast %cst_112 : f32 to vector<8x128xf32>
    %235 = arith.mulf %234, %233 : vector<8x128xf32>
    %236 = vector.extract_strided_slice %227 {offsets = [0, 128], sizes = [8, 128], strides = [1, 1]} : vector<8x512xf32> to vector<8x128xf32>
    %cst_113 = arith.constant 5.000000e-01 : f32
    %237 = vector.broadcast %cst_113 : f32 to vector<8x128xf32>
    %238 = arith.mulf %237, %236 : vector<8x128xf32>
    %239 = math.tanh %238 : vector<8x128xf32>
    %cst_114 = arith.constant 1.000000e+00 : f32
    %240 = vector.broadcast %cst_114 : f32 to vector<8x128xf32>
    %241 = arith.addf %239, %240 : vector<8x128xf32>
    %cst_115 = arith.constant 5.000000e-01 : f32
    %242 = vector.broadcast %cst_115 : f32 to vector<8x128xf32>
    %243 = arith.mulf %242, %241 : vector<8x128xf32>
    %244 = vector.extract_strided_slice %227 {offsets = [0, 256], sizes = [8, 128], strides = [1, 1]} : vector<8x512xf32> to vector<8x128xf32>
    %245 = math.tanh %244 : vector<8x128xf32>
    %246 = vector.extract_strided_slice %227 {offsets = [0, 384], sizes = [8, 128], strides = [1, 1]} : vector<8x512xf32> to vector<8x128xf32>
    %cst_116 = arith.constant 5.000000e-01 : f32
    %247 = vector.broadcast %cst_116 : f32 to vector<8x128xf32>
    %248 = arith.mulf %247, %246 : vector<8x128xf32>
    %249 = math.tanh %248 : vector<8x128xf32>
    %cst_117 = arith.constant 1.000000e+00 : f32
    %250 = vector.broadcast %cst_117 : f32 to vector<8x128xf32>
    %251 = arith.addf %249, %250 : vector<8x128xf32>
    %cst_118 = arith.constant 5.000000e-01 : f32
    %252 = vector.broadcast %cst_118 : f32 to vector<8x128xf32>
    %253 = arith.mulf %252, %251 : vector<8x128xf32>
    %254 = arith.mulf %243, %221 : vector<8x128xf32>
    %255 = arith.mulf %235, %245 : vector<8x128xf32>
    %256 = arith.addf %254, %255 : vector<8x128xf32>
    %257 = math.tanh %256 : vector<8x128xf32>
    %258 = arith.mulf %253, %257 : vector<8x128xf32>
    %259 = arith.addi %0, %c0_i32_106 : i32
    %c8_i32_119 = arith.constant 8 : i32
    %260 = arith.cmpi slt, %259, %c8_i32_119 : i32
    %261 = arith.select %260, %258, %219 : vector<8x128xf32>
    %262 = arith.select %260, %256, %221 : vector<8x128xf32>
    %263 = arith.index_cast %c0_i32_106 : i32 to index
    %c0_120 = arith.constant 0 : index
    %c0_121 = arith.constant 0 : index
    %264 = vector.load %arg12[%263, %c0_120, %c0_121] : memref<4x8x128xf32, #tpu.memory_space<vmem>>, vector<1x8x128xf32>
    %265 = vector.shape_cast %264 : vector<1x8x128xf32> to vector<8x128xf32>
    %266 = vector.shape_cast %261 : vector<8x128xf32> to vector<1x8x128xf32>
    tpu.vector_store %arg12[%263, %c0_120, %c0_121], %266 {strides = array<i32>} : memref<4x8x128xf32, #tpu.memory_space<vmem>>, vector<1x8x128xf32>,
    %c1_i32_122 = arith.constant 1 : i32
    %267 = arith.index_cast %c1_i32_122 : i32 to index
    %c0_123 = arith.constant 0 : index
    %c0_124 = arith.constant 0 : index
    %268 = vector.load %arg11[%267, %c0_123, %c0_124] : memref<4x8x512xf32, #tpu.memory_space<vmem>>, vector<1x8x512xf32>
    %269 = vector.shape_cast %268 : vector<1x8x512xf32> to vector<8x512xf32>
    %270 = arith.truncf %261 : vector<8x128xf32> to vector<8x128xbf16>
    %cst_125 = arith.constant dense<0.000000e+00> : vector<8x512xf32>
    %271 = tpu.matmul %270, %217, %cst_125 {dimension_numbers = #tpu.dot_dimension_numbers<[1], [0], [0], [1], [0, 0, 1, 1], [], []>} : vector<8x128xbf16>, vector<128x512xbf16>, vector<8x512xf32> -> vector<8x512xf32>
    %272 = arith.addf %269, %271 : vector<8x512xf32>
    %273 = vector.extract_strided_slice %272 {offsets = [0, 0], sizes = [8, 128], strides = [1, 1]} : vector<8x512xf32> to vector<8x128xf32>
    %cst_126 = arith.constant 5.000000e-01 : f32
    %274 = vector.broadcast %cst_126 : f32 to vector<8x128xf32>
    %275 = arith.mulf %274, %273 : vector<8x128xf32>
    %276 = math.tanh %275 : vector<8x128xf32>
    %cst_127 = arith.constant 1.000000e+00 : f32
    %277 = vector.broadcast %cst_127 : f32 to vector<8x128xf32>
    %278 = arith.addf %276, %277 : vector<8x128xf32>
    %cst_128 = arith.constant 5.000000e-01 : f32
    %279 = vector.broadcast %cst_128 : f32 to vector<8x128xf32>
    %280 = arith.mulf %279, %278 : vector<8x128xf32>
    %281 = vector.extract_strided_slice %272 {offsets = [0, 128], sizes = [8, 128], strides = [1, 1]} : vector<8x512xf32> to vector<8x128xf32>
    %cst_129 = arith.constant 5.000000e-01 : f32
    %282 = vector.broadcast %cst_129 : f32 to vector<8x128xf32>
    %283 = arith.mulf %282, %281 : vector<8x128xf32>
    %284 = math.tanh %283 : vector<8x128xf32>
    %cst_130 = arith.constant 1.000000e+00 : f32
    %285 = vector.broadcast %cst_130 : f32 to vector<8x128xf32>
    %286 = arith.addf %284, %285 : vector<8x128xf32>
    %cst_131 = arith.constant 5.000000e-01 : f32
    %287 = vector.broadcast %cst_131 : f32 to vector<8x128xf32>
    %288 = arith.mulf %287, %286 : vector<8x128xf32>
    %289 = vector.extract_strided_slice %272 {offsets = [0, 256], sizes = [8, 128], strides = [1, 1]} : vector<8x512xf32> to vector<8x128xf32>
    %290 = math.tanh %289 : vector<8x128xf32>
    %291 = vector.extract_strided_slice %272 {offsets = [0, 384], sizes = [8, 128], strides = [1, 1]} : vector<8x512xf32> to vector<8x128xf32>
    %cst_132 = arith.constant 5.000000e-01 : f32
    %292 = vector.broadcast %cst_132 : f32 to vector<8x128xf32>
    %293 = arith.mulf %292, %291 : vector<8x128xf32>
    %294 = math.tanh %293 : vector<8x128xf32>
    %cst_133 = arith.constant 1.000000e+00 : f32
    %295 = vector.broadcast %cst_133 : f32 to vector<8x128xf32>
    %296 = arith.addf %294, %295 : vector<8x128xf32>
    %cst_134 = arith.constant 5.000000e-01 : f32
    %297 = vector.broadcast %cst_134 : f32 to vector<8x128xf32>
    %298 = arith.mulf %297, %296 : vector<8x128xf32>
    %299 = arith.mulf %288, %262 : vector<8x128xf32>
    %300 = arith.mulf %280, %290 : vector<8x128xf32>
    %301 = arith.addf %299, %300 : vector<8x128xf32>
    %302 = math.tanh %301 : vector<8x128xf32>
    %303 = arith.mulf %298, %302 : vector<8x128xf32>
    %304 = arith.addi %0, %c1_i32_122 : i32
    %c8_i32_135 = arith.constant 8 : i32
    %305 = arith.cmpi slt, %304, %c8_i32_135 : i32
    %306 = arith.select %305, %303, %261 : vector<8x128xf32>
    %307 = arith.select %305, %301, %262 : vector<8x128xf32>
    %308 = arith.index_cast %c1_i32_122 : i32 to index
    %c0_136 = arith.constant 0 : index
    %c0_137 = arith.constant 0 : index
    %309 = vector.load %arg12[%308, %c0_136, %c0_137] : memref<4x8x128xf32, #tpu.memory_space<vmem>>, vector<1x8x128xf32>
    %310 = vector.shape_cast %309 : vector<1x8x128xf32> to vector<8x128xf32>
    %311 = vector.shape_cast %306 : vector<8x128xf32> to vector<1x8x128xf32>
    tpu.vector_store %arg12[%308, %c0_136, %c0_137], %311 {strides = array<i32>} : memref<4x8x128xf32, #tpu.memory_space<vmem>>, vector<1x8x128xf32>,
    %c2_i32_138 = arith.constant 2 : i32
    %312 = arith.index_cast %c2_i32_138 : i32 to index
    %c0_139 = arith.constant 0 : index
    %c0_140 = arith.constant 0 : index
    %313 = vector.load %arg11[%312, %c0_139, %c0_140] : memref<4x8x512xf32, #tpu.memory_space<vmem>>, vector<1x8x512xf32>
    %314 = vector.shape_cast %313 : vector<1x8x512xf32> to vector<8x512xf32>
    %315 = arith.truncf %306 : vector<8x128xf32> to vector<8x128xbf16>
    %cst_141 = arith.constant dense<0.000000e+00> : vector<8x512xf32>
    %316 = tpu.matmul %315, %217, %cst_141 {dimension_numbers = #tpu.dot_dimension_numbers<[1], [0], [0], [1], [0, 0, 1, 1], [], []>} : vector<8x128xbf16>, vector<128x512xbf16>, vector<8x512xf32> -> vector<8x512xf32>
    %317 = arith.addf %314, %316 : vector<8x512xf32>
    %318 = vector.extract_strided_slice %317 {offsets = [0, 0], sizes = [8, 128], strides = [1, 1]} : vector<8x512xf32> to vector<8x128xf32>
    %cst_142 = arith.constant 5.000000e-01 : f32
    %319 = vector.broadcast %cst_142 : f32 to vector<8x128xf32>
    %320 = arith.mulf %319, %318 : vector<8x128xf32>
    %321 = math.tanh %320 : vector<8x128xf32>
    %cst_143 = arith.constant 1.000000e+00 : f32
    %322 = vector.broadcast %cst_143 : f32 to vector<8x128xf32>
    %323 = arith.addf %321, %322 : vector<8x128xf32>
    %cst_144 = arith.constant 5.000000e-01 : f32
    %324 = vector.broadcast %cst_144 : f32 to vector<8x128xf32>
    %325 = arith.mulf %324, %323 : vector<8x128xf32>
    %326 = vector.extract_strided_slice %317 {offsets = [0, 128], sizes = [8, 128], strides = [1, 1]} : vector<8x512xf32> to vector<8x128xf32>
    %cst_145 = arith.constant 5.000000e-01 : f32
    %327 = vector.broadcast %cst_145 : f32 to vector<8x128xf32>
    %328 = arith.mulf %327, %326 : vector<8x128xf32>
    %329 = math.tanh %328 : vector<8x128xf32>
    %cst_146 = arith.constant 1.000000e+00 : f32
    %330 = vector.broadcast %cst_146 : f32 to vector<8x128xf32>
    %331 = arith.addf %329, %330 : vector<8x128xf32>
    %cst_147 = arith.constant 5.000000e-01 : f32
    %332 = vector.broadcast %cst_147 : f32 to vector<8x128xf32>
    %333 = arith.mulf %332, %331 : vector<8x128xf32>
    %334 = vector.extract_strided_slice %317 {offsets = [0, 256], sizes = [8, 128], strides = [1, 1]} : vector<8x512xf32> to vector<8x128xf32>
    %335 = math.tanh %334 : vector<8x128xf32>
    %336 = vector.extract_strided_slice %317 {offsets = [0, 384], sizes = [8, 128], strides = [1, 1]} : vector<8x512xf32> to vector<8x128xf32>
    %cst_148 = arith.constant 5.000000e-01 : f32
    %337 = vector.broadcast %cst_148 : f32 to vector<8x128xf32>
    %338 = arith.mulf %337, %336 : vector<8x128xf32>
    %339 = math.tanh %338 : vector<8x128xf32>
    %cst_149 = arith.constant 1.000000e+00 : f32
    %340 = vector.broadcast %cst_149 : f32 to vector<8x128xf32>
    %341 = arith.addf %339, %340 : vector<8x128xf32>
    %cst_150 = arith.constant 5.000000e-01 : f32
    %342 = vector.broadcast %cst_150 : f32 to vector<8x128xf32>
    %343 = arith.mulf %342, %341 : vector<8x128xf32>
    %344 = arith.mulf %333, %307 : vector<8x128xf32>
    %345 = arith.mulf %325, %335 : vector<8x128xf32>
    %346 = arith.addf %344, %345 : vector<8x128xf32>
    %347 = math.tanh %346 : vector<8x128xf32>
    %348 = arith.mulf %343, %347 : vector<8x128xf32>
    %349 = arith.addi %0, %c2_i32_138 : i32
    %c8_i32_151 = arith.constant 8 : i32
    %350 = arith.cmpi slt, %349, %c8_i32_151 : i32
    %351 = arith.select %350, %348, %306 : vector<8x128xf32>
    %352 = arith.select %350, %346, %307 : vector<8x128xf32>
    %353 = arith.index_cast %c2_i32_138 : i32 to index
    %c0_152 = arith.constant 0 : index
    %c0_153 = arith.constant 0 : index
    %354 = vector.load %arg12[%353, %c0_152, %c0_153] : memref<4x8x128xf32, #tpu.memory_space<vmem>>, vector<1x8x128xf32>
    %355 = vector.shape_cast %354 : vector<1x8x128xf32> to vector<8x128xf32>
    %356 = vector.shape_cast %351 : vector<8x128xf32> to vector<1x8x128xf32>
    tpu.vector_store %arg12[%353, %c0_152, %c0_153], %356 {strides = array<i32>} : memref<4x8x128xf32, #tpu.memory_space<vmem>>, vector<1x8x128xf32>,
    %c3_i32_154 = arith.constant 3 : i32
    %357 = arith.index_cast %c3_i32_154 : i32 to index
    %c0_155 = arith.constant 0 : index
    %c0_156 = arith.constant 0 : index
    %358 = vector.load %arg11[%357, %c0_155, %c0_156] : memref<4x8x512xf32, #tpu.memory_space<vmem>>, vector<1x8x512xf32>
    %359 = vector.shape_cast %358 : vector<1x8x512xf32> to vector<8x512xf32>
    %360 = arith.truncf %351 : vector<8x128xf32> to vector<8x128xbf16>
    %cst_157 = arith.constant dense<0.000000e+00> : vector<8x512xf32>
    %361 = tpu.matmul %360, %217, %cst_157 {dimension_numbers = #tpu.dot_dimension_numbers<[1], [0], [0], [1], [0, 0, 1, 1], [], []>} : vector<8x128xbf16>, vector<128x512xbf16>, vector<8x512xf32> -> vector<8x512xf32>
    %362 = arith.addf %359, %361 : vector<8x512xf32>
    %363 = vector.extract_strided_slice %362 {offsets = [0, 0], sizes = [8, 128], strides = [1, 1]} : vector<8x512xf32> to vector<8x128xf32>
    %cst_158 = arith.constant 5.000000e-01 : f32
    %364 = vector.broadcast %cst_158 : f32 to vector<8x128xf32>
    %365 = arith.mulf %364, %363 : vector<8x128xf32>
    %366 = math.tanh %365 : vector<8x128xf32>
    %cst_159 = arith.constant 1.000000e+00 : f32
    %367 = vector.broadcast %cst_159 : f32 to vector<8x128xf32>
    %368 = arith.addf %366, %367 : vector<8x128xf32>
    %cst_160 = arith.constant 5.000000e-01 : f32
    %369 = vector.broadcast %cst_160 : f32 to vector<8x128xf32>
    %370 = arith.mulf %369, %368 : vector<8x128xf32>
    %371 = vector.extract_strided_slice %362 {offsets = [0, 128], sizes = [8, 128], strides = [1, 1]} : vector<8x512xf32> to vector<8x128xf32>
    %cst_161 = arith.constant 5.000000e-01 : f32
    %372 = vector.broadcast %cst_161 : f32 to vector<8x128xf32>
    %373 = arith.mulf %372, %371 : vector<8x128xf32>
    %374 = math.tanh %373 : vector<8x128xf32>
    %cst_162 = arith.constant 1.000000e+00 : f32
    %375 = vector.broadcast %cst_162 : f32 to vector<8x128xf32>
    %376 = arith.addf %374, %375 : vector<8x128xf32>
    %cst_163 = arith.constant 5.000000e-01 : f32
    %377 = vector.broadcast %cst_163 : f32 to vector<8x128xf32>
    %378 = arith.mulf %377, %376 : vector<8x128xf32>
    %379 = vector.extract_strided_slice %362 {offsets = [0, 256], sizes = [8, 128], strides = [1, 1]} : vector<8x512xf32> to vector<8x128xf32>
    %380 = math.tanh %379 : vector<8x128xf32>
    %381 = vector.extract_strided_slice %362 {offsets = [0, 384], sizes = [8, 128], strides = [1, 1]} : vector<8x512xf32> to vector<8x128xf32>
    %cst_164 = arith.constant 5.000000e-01 : f32
    %382 = vector.broadcast %cst_164 : f32 to vector<8x128xf32>
    %383 = arith.mulf %382, %381 : vector<8x128xf32>
    %384 = math.tanh %383 : vector<8x128xf32>
    %cst_165 = arith.constant 1.000000e+00 : f32
    %385 = vector.broadcast %cst_165 : f32 to vector<8x128xf32>
    %386 = arith.addf %384, %385 : vector<8x128xf32>
    %cst_166 = arith.constant 5.000000e-01 : f32
    %387 = vector.broadcast %cst_166 : f32 to vector<8x128xf32>
    %388 = arith.mulf %387, %386 : vector<8x128xf32>
    %389 = arith.mulf %378, %352 : vector<8x128xf32>
    %390 = arith.mulf %370, %380 : vector<8x128xf32>
    %391 = arith.addf %389, %390 : vector<8x128xf32>
    %392 = math.tanh %391 : vector<8x128xf32>
    %393 = arith.mulf %388, %392 : vector<8x128xf32>
    %394 = arith.addi %0, %c3_i32_154 : i32
    %c8_i32_167 = arith.constant 8 : i32
    %395 = arith.cmpi slt, %394, %c8_i32_167 : i32
    %396 = arith.select %395, %393, %351 : vector<8x128xf32>
    %397 = arith.select %395, %391, %352 : vector<8x128xf32>
    %398 = arith.index_cast %c3_i32_154 : i32 to index
    %c0_168 = arith.constant 0 : index
    %c0_169 = arith.constant 0 : index
    %399 = vector.load %arg12[%398, %c0_168, %c0_169] : memref<4x8x128xf32, #tpu.memory_space<vmem>>, vector<1x8x128xf32>
    %400 = vector.shape_cast %399 : vector<1x8x128xf32> to vector<8x128xf32>
    %401 = vector.shape_cast %396 : vector<8x128xf32> to vector<1x8x128xf32>
    tpu.vector_store %arg12[%398, %c0_168, %c0_169], %401 {strides = array<i32>} : memref<4x8x128xf32, #tpu.memory_space<vmem>>, vector<1x8x128xf32>,
    %c4_i32_170 = arith.constant 4 : i32
    %c1_171 = arith.constant 1 : index
    %c0_172 = arith.constant 0 : index
    %c0_173 = arith.constant 0 : index
    %402 = vector.load %arg9[%c1_171, %c0_172, %c0_173] : memref<2x8x128xf32, #tpu.memory_space<vmem>>, vector<1x8x128xf32>
    %403 = vector.shape_cast %402 : vector<1x8x128xf32> to vector<8x128xf32>
    %404 = vector.shape_cast %396 : vector<8x128xf32> to vector<1x8x128xf32>
    tpu.vector_store %arg9[%c1_171, %c0_172, %c0_173], %404 {strides = array<i32>} : memref<2x8x128xf32, #tpu.memory_space<vmem>>, vector<1x8x128xf32>,
    %c1_174 = arith.constant 1 : index
    %c0_175 = arith.constant 0 : index
    %c0_176 = arith.constant 0 : index
    %405 = vector.load %arg10[%c1_174, %c0_175, %c0_176] : memref<2x8x128xf32, #tpu.memory_space<vmem>>, vector<1x8x128xf32>
    %406 = vector.shape_cast %405 : vector<1x8x128xf32> to vector<8x128xf32>
    %407 = vector.shape_cast %397 : vector<8x128xf32> to vector<1x8x128xf32>
    tpu.vector_store %arg10[%c1_174, %c0_175, %c0_176], %407 {strides = array<i32>} : memref<2x8x128xf32, #tpu.memory_space<vmem>>, vector<1x8x128xf32>,
    %c0_177 = arith.constant 0 : index
    %c0_178 = arith.constant 0 : index
    %c0_179 = arith.constant 0 : index
    %408 = vector.load %arg12[%c0_177, %c0_178, %c0_179] : memref<4x8x128xf32, #tpu.memory_space<vmem>>, vector<4x8x128xf32>
    %409 = math.tanh %408 : vector<4x8x128xf32>
    %410 = vector.shape_cast %409 : vector<4x8x128xf32> to vector<32x128xf32>
    %411 = arith.truncf %410 : vector<32x128xf32> to vector<32x128xbf16>
    %c0_180 = arith.constant 0 : index
    %c0_181 = arith.constant 0 : index
    %412 = vector.load %arg6[%c0_180, %c0_181] : memref<128x128xbf16, #tpu.memory_space<vmem>>, vector<128x128xbf16>
    %cst_182 = arith.constant dense<0.000000e+00> : vector<32x128xf32>
    %413 = tpu.matmul %411, %412, %cst_182 {dimension_numbers = #tpu.dot_dimension_numbers<[1], [0], [0], [1], [0, 0, 1, 1], [], []>} : vector<32x128xbf16>, vector<128x128xbf16>, vector<32x128xf32> -> vector<32x128xf32>
    %c0_183 = arith.constant 0 : index
    %c0_184 = arith.constant 0 : index
    %414 = vector.load %arg7[%c0_183, %c0_184] : memref<1x128xf32, #tpu.memory_space<vmem>>, vector<1x128xf32>
    %415 = vector.broadcast %414 : vector<1x128xf32> to vector<32x128xf32>
    %416 = arith.addf %413, %415 : vector<32x128xf32>
    %cst_185 = arith.constant dense<0xFF800000> : vector<32xf32>
    %417 = vector.multi_reduction <maximumf>, %416, %cst_185 [1] : vector<32x128xf32> to vector<32xf32>
    %418 = vector.shape_cast %417 : vector<32xf32> to vector<32x1xf32>
    %419 = vector.broadcast %418 : vector<32x1xf32> to vector<32x128xf32>
    %420 = arith.subf %416, %419 : vector<32x128xf32>
    %421 = math.exp %420 : vector<32x128xf32>
    %cst_186 = arith.constant dense<0.000000e+00> : vector<32xf32>
    %422 = vector.multi_reduction <add>, %421, %cst_186 [1] : vector<32x128xf32> to vector<32xf32>
    %423 = vector.shape_cast %422 : vector<32xf32> to vector<32x1xf32>
    %424 = math.log %423 : vector<32x1xf32>
    %425 = arith.addf %424, %418 : vector<32x1xf32>
    %426 = vector.broadcast %425 : vector<32x1xf32> to vector<32x128xf32>
    %427 = arith.subf %416, %426 : vector<32x128xf32>
    %c0_187 = arith.constant 0 : index
    %c0_188 = arith.constant 0 : index
    %428 = vector.load %arg8[%c0_187, %c0_188] : memref<32x128xf32, #tpu.memory_space<vmem>>, vector<32x128xf32>
    tpu.vector_store %arg8[%c0_187, %c0_188], %427 {strides = array<i32>} : memref<32x128xf32, #tpu.memory_space<vmem>>, vector<32x128xf32>,
    return
  }
  func.func @transform_0(%arg0: i32) -> (i32, i32) {
    %c0_i32 = arith.constant 0 : i32
    %c0_i32_0 = arith.constant 0 : i32
    return %arg0, %c0_i32 : i32, i32
  }
  func.func @transform_1(%arg0: i32) -> (i32, i32) {
    %c0_i32 = arith.constant 0 : i32
    %c0_i32_0 = arith.constant 0 : i32
    %c0_i32_1 = arith.constant 0 : i32
    return %c0_i32, %c0_i32_0 : i32, i32
  }
  func.func @transform_2(%arg0: i32) -> (i32, i32) {
    %c0_i32 = arith.constant 0 : i32
    %c0_i32_0 = arith.constant 0 : i32
    %c0_i32_1 = arith.constant 0 : i32
    return %c0_i32, %c0_i32_0 : i32, i32
  }
  func.func @transform_3(%arg0: i32) -> (i32, i32, i32) {
    %c0_i32 = arith.constant 0 : i32
    %c0_i32_0 = arith.constant 0 : i32
    %c0_i32_1 = arith.constant 0 : i32
    %c0_i32_2 = arith.constant 0 : i32
    return %c0_i32, %c0_i32_0, %c0_i32_1 : i32, i32, i32
  }
  func.func @transform_4(%arg0: i32) -> (i32, i32, i32) {
    %c0_i32 = arith.constant 0 : i32
    %c0_i32_0 = arith.constant 0 : i32
    %c0_i32_1 = arith.constant 0 : i32
    %c0_i32_2 = arith.constant 0 : i32
    return %c0_i32, %c0_i32_0, %c0_i32_1 : i32, i32, i32
  }
  func.func @transform_5(%arg0: i32) -> (i32, i32) {
    %c0_i32 = arith.constant 0 : i32
    %c0_i32_0 = arith.constant 0 : i32
    %c0_i32_1 = arith.constant 0 : i32
    return %c0_i32, %c0_i32_0 : i32, i32
  }
  func.func @transform_6(%arg0: i32) -> (i32, i32) {
    %c0_i32 = arith.constant 0 : i32
    %c0_i32_0 = arith.constant 0 : i32
    %c0_i32_1 = arith.constant 0 : i32
    return %c0_i32, %c0_i32_0 : i32, i32
  }
  func.func @transform_7(%arg0: i32) -> (i32, i32) {
    %c0_i32 = arith.constant 0 : i32
    %c0_i32_0 = arith.constant 0 : i32
    return %arg0, %c0_i32 : i32, i32
  }
  func.func @transform_8(%arg0: i32) -> (i32, i32, i32) {
    %c0_i32 = arith.constant 0 : i32
    %c0_i32_0 = arith.constant 0 : i32
    %c0_i32_1 = arith.constant 0 : i32
    %c0_i32_2 = arith.constant 0 : i32
    return %c0_i32, %c0_i32_0, %c0_i32_1 : i32, i32, i32
  }
  func.func @transform_9(%arg0: i32) -> (i32, i32, i32) {
    %c0_i32 = arith.constant 0 : i32
    %c0_i32_0 = arith.constant 0 : i32
    %c0_i32_1 = arith.constant 0 : i32
    %c0_i32_2 = arith.constant 0 : i32
    return %c0_i32, %c0_i32_0, %c0_i32_1 : i32, i32, i32
  }
}

</mosaic_0001>

<llo_original>
// kernel: tpu_custom_call.1
$region0: #{tpu_custom_call.1}
  #allocation0 [shape = 'u32[]', space=smem, size = 0x4, offset = 0x4, fixed_abs, tag = 'smem constant byte address 0x4 - core index']
  #allocation1 [shape = 'u32[144,128]{1,0:T(1,128)}', space=vmem, size = 0x12000, scoped, tag = 'internal scratch']
  #allocation2 [shape = 'f32[4,8,512]{2,1,0:T(8,128)}', space=vmem, size = 0x10000, scoped, tag = 'scratch operand']
  #allocation3 [shape = 'f32[4,8,128]{2,1,0:T(8,128)}', space=vmem, size = 0x4000, scoped, tag = 'scratch operand']
  %s0 = inlined_call_operand.vmem [shape: bf16[64,16], index: 0, kind: input, shape index: {}]
  %s1 = inlined_call_operand.vmem [shape: bf16[16,512], index: 1, kind: input, shape index: {}]
  %s2 = inlined_call_operand.hbm [shape: bf16[128,512], index: 2, kind: input, shape index: {}]
  %s3 = inlined_call_operand.hbm [shape: bf16[2,128,512], index: 3, kind: input, shape index: {}]
  %s4 = inlined_call_operand.vmem [shape: f32[2,1,512], index: 4, kind: input, shape index: {}]
  %s5 = inlined_call_operand.hbm [shape: bf16[128,128], index: 5, kind: input, shape index: {}]
  %s6 = inlined_call_operand.vmem [shape: f32[1,128], index: 6, kind: input, shape index: {}]
  %s7 = inlined_call_operand.hbm [shape: f32[64,128], index: 7, kind: output, shape index: {0}]
  %s8 = inlined_call_operand.hbm [shape: f32[2,8,128], index: 8, kind: output, shape index: {1}]
  %s9 = inlined_call_operand.hbm [shape: f32[2,8,128], index: 9, kind: output, shape index: {2}]
  %10 = xla_tuple %s7, %s8, %s9
  %s11 = sld [smem:[#allocation0]]
  $region93: #{tpu_custom_call.1} parent=0
    _
  %s13 = ssub.s32 1, %s11
  %s14 = scalar_select 0, %s13, %s11
  $region1: #{tpu_custom_call.1} parent=0
    #allocation4 [shape = 'u8[131072]{0}', space=vmem, size = 0x20000, scoped, tag = 'input window, operand 2, single buffered']
    #allocation5 [shape = 's32[2]{0}', space=sflag, size = 0x8, scoped, tag = 'scoped memory for tpu_custom_call.1']
    #allocation6 [shape = 's32[2]{0}', space=sflag, size = 0x8, scoped, tag = 'scoped memory for tpu_custom_call.1']
    #allocation7 [shape = 'u8[262144]{0}', space=vmem, size = 0x40000, scoped, tag = 'input window, operand 3, single buffered']
    #allocation8 [shape = 's32[1]{0}', space=sflag, size = 0x4, scoped, tag = 'scoped memory for tpu_custom_call.1']
    #allocation9 [shape = 'u8[32768]{0}', space=vmem, size = 0x8000, scoped, tag = 'input window, operand 5, single buffered']
    #allocation10 [shape = 'u8[32768]{0}', space=vmem, size = 0x8000, scoped, tag = 'output window, operand 0']
    #allocation11 [shape = 'u8[8192]{0}', space=vmem, size = 0x2000, scoped, tag = 'output window, operand 1, single buffered']
    #allocation12 [shape = 's32[1]{0}', space=sflag, size = 0x4, scoped, tag = 'scoped memory for tpu_custom_call.1']
    #allocation13 [shape = 'u8[8192]{0}', space=vmem, size = 0x2000, scoped, tag = 'output window, operand 2, single buffered']
    %15 = vsyncpa [#allocation5], 0
    %16 = vsyncpa [#allocation8], 0
    %17 = vsyncpa [#allocation6], 0
    %s18 = scalar_lea.sflag [#allocation6], 1
    %19 = vsyncpa %s18, 0
    %20 = vsyncpa [#allocation12], 0
    loop: start=0, step=1, limit=4
    $region2: #{tpu_custom_call.1} parent=1 // loop_pre_header
      _
    $region3: #{tpu_custom_call.1} parent=1 // loop_header
      %s22 = sphi 0, %s26
      %p23 = scmp.ge.s32.totalorder %s22, 4
      %s32 = sphi 0, %s34
      %s35 = sphi 0, %s32
      %s36 = sphi 0, %s35
      %s52 = sphi 0, %s36
      %s56 = sphi 0, %s56
      %s58 = sphi 0, %s56
      %s59 = sphi 0, %s58
      %s73 = sphi 0, %s59
      %s77 = sphi 0, %s77
      %s79 = sphi 0, %s77
      %s80 = sphi 0, %s79
      %s94 = sphi 0, %s80
      %s98 = sphi 0, %s98
      %s100 = sphi 0, %s98
      %s101 = sphi 0, %s100
      %s115 = sphi 0, %s101
      %s119 = sphi 0, %s119
      %s121 = sphi 0, %s119
      %s122 = sphi 0, %s121
      %s136 = sphi 0, %s122
      %s140 = sphi 0, %s140
      %s142 = sphi 0, %s140
      %s143 = sphi 0, %s142
      %s157 = sphi 0, %s143
      %s161 = sphi 0, %s161
      %s163 = sphi 0, %s161
      %s164 = sphi 0, %s163
      %s178 = sphi 0, %s164
      %s184 = sphi 0, %s186
      %s187 = sphi 0, %s184
      %s188 = sphi 0, %s187
      %s204 = sphi 0, %s188
      %s208 = sphi 0, %s208
      %s210 = sphi 0, %s208
      %s211 = sphi 0, %s210
      %s225 = sphi 0, %s211
      %s229 = sphi 0, %s229
      %s231 = sphi 0, %s229
      %s232 = sphi 0, %s231
      %s246 = sphi 0, %s232
    $region4: #{tpu_custom_call.1} parent=1 // loop_header_branch
      %25 = sbr.rel (%p23) target = $region8
    $region5: #{tpu_custom_call.1} parent=1 // loop_body
      %s27 = ssub.s32 %s22, 1
      %s28 = ssub.s32 %s22, 2
      %s29 = sadd.s32 %s22, 1
      %s30 = ssub.s32 %s22, %s29
      %p31 = scmp.eq.s32.totalorder %s30, 0
      %s33 = sadd.s32 %s32, 1
      %s34 = scalar_select %p31, %s32, %s33
      %p37 = pneg %p31
      %p38 = scmp.eq.s32.totalorder %s22, 1
      %p39 = por %p37, %p38
      %p40 = scmp.ne.s32.totalorder %s32, %s35
      %p41 = scmp.eq.s32.totalorder %s22, 0
      %p42 = por %p40, %p41
      %p43 = scmp.ne.s32.totalorder %s32, %s35
      %p44 = scmp.eq.s32.totalorder %s27, 1
      %p45 = por %p43, %p44
      %p46 = scmp.ne.s32.totalorder %s35, %s36
      %p47 = scmp.eq.s32.totalorder %s27, 0
      %p48 = por %p46, %p47
      %p49 = scmp.ne.s32.totalorder %s35, %s36
      %p50 = scmp.eq.s32.totalorder %s28, 1
      %p51 = por %p49, %p50
      %p53 = scmp.ne.s32.totalorder %s36, %s52
      %p54 = scmp.eq.s32.totalorder %s28, 0
      %p55 = por %p53, %p54
      %s57 = sadd.s32 %s56, 1
      %p60 = scmp.eq.s32.totalorder %s22, 1
      %p61 = scmp.ne.s32.totalorder %s56, %s58
      %p62 = scmp.eq.s32.totalorder %s22, 0
      %p63 = por %p61, %p62
      %p64 = scmp.ne.s32.totalorder %s56, %s58
      %p65 = scmp.eq.s32.totalorder %s27, 1
      %p66 = por %p64, %p65
      %p67 = scmp.ne.s32.totalorder %s58, %s59
      %p68 = scmp.eq.s32.totalorder %s27, 0
      %p69 = por %p67, %p68
      %p70 = scmp.ne.s32.totalorder %s58, %s59
      %p71 = scmp.eq.s32.totalorder %s28, 1
      %p72 = por %p70, %p71
      %p74 = scmp.ne.s32.totalorder %s59, %s73
      %p75 = scmp.eq.s32.totalorder %s28, 0
      %p76 = por %p74, %p75
      %s78 = sadd.s32 %s77, 1
      %p81 = scmp.eq.s32.totalorder %s22, 1
      %p82 = scmp.ne.s32.totalorder %s77, %s79
      %p83 = scmp.eq.s32.totalorder %s22, 0
      %p84 = por %p82, %p83
      %p85 = scmp.ne.s32.totalorder %s77, %s79
      %p86 = scmp.eq.s32.totalorder %s27, 1
      %p87 = por %p85, %p86
      %p88 = scmp.ne.s32.totalorder %s79, %s80
      %p89 = scmp.eq.s32.totalorder %s27, 0
      %p90 = por %p88, %p89
      %p91 = scmp.ne.s32.totalorder %s79, %s80
      %p92 = scmp.eq.s32.totalorder %s28, 1
      %p93 = por %p91, %p92
      %p95 = scmp.ne.s32.totalorder %s80, %s94
      %p96 = scmp.eq.s32.totalorder %s28, 0
      %p97 = por %p95, %p96
      %s99 = sadd.s32 %s98, 1
      %p102 = scmp.eq.s32.totalorder %s22, 1
      %p103 = scmp.ne.s32.totalorder %s98, %s100
      %p104 = scmp.eq.s32.totalorder %s22, 0
      %p105 = por %p103, %p104
      %p106 = scmp.ne.s32.totalorder %s98, %s100
      %p107 = scmp.eq.s32.totalorder %s27, 1
      %p108 = por %p106, %p107
      %p109 = scmp.ne.s32.totalorder %s100, %s101
      %p110 = scmp.eq.s32.totalorder %s27, 0
      %p111 = por %p109, %p110
      %p112 = scmp.ne.s32.totalorder %s100, %s101
      %p113 = scmp.eq.s32.totalorder %s28, 1
      %p114 = por %p112, %p113
      %p116 = scmp.ne.s32.totalorder %s101, %s115
      %p117 = scmp.eq.s32.totalorder %s28, 0
      %p118 = por %p116, %p117
      %s120 = sadd.s32 %s119, 1
      %p123 = scmp.eq.s32.totalorder %s22, 1
      %p124 = scmp.ne.s32.totalorder %s119, %s121
      %p125 = scmp.eq.s32.totalorder %s22, 0
      %p126 = por %p124, %p125
      %p127 = scmp.ne.s32.totalorder %s119, %s121
      %p128 = scmp.eq.s32.totalorder %s27, 1
      %p129 = por %p127, %p128
      %p130 = scmp.ne.s32.totalorder %s121, %s122
      %p131 = scmp.eq.s32.totalorder %s27, 0
      %p132 = por %p130, %p131
      %p133 = scmp.ne.s32.totalorder %s121, %s122
      %p134 = scmp.eq.s32.totalorder %s28, 1
      %p135 = por %p133, %p134
      %p137 = scmp.ne.s32.totalorder %s122, %s136
      %p138 = scmp.eq.s32.totalorder %s28, 0
      %p139 = por %p137, %p138
      %s141 = sadd.s32 %s140, 1
      %p144 = scmp.eq.s32.totalorder %s22, 1
      %p145 = scmp.ne.s32.totalorder %s140, %s142
      %p146 = scmp.eq.s32.totalorder %s22, 0
      %p147 = por %p145, %p146
      %p148 = scmp.ne.s32.totalorder %s140, %s142
      %p149 = scmp.eq.s32.totalorder %s27, 1
      %p150 = por %p148, %p149
      %p151 = scmp.ne.s32.totalorder %s142, %s143
      %p152 = scmp.eq.s32.totalorder %s27, 0
      %p153 = por %p151, %p152
      %p154 = scmp.ne.s32.totalorder %s142, %s143
      %p155 = scmp.eq.s32.totalorder %s28, 1
      %p156 = por %p154, %p155
      %p158 = scmp.ne.s32.totalorder %s143, %s157
      %p159 = scmp.eq.s32.totalorder %s28, 0
      %p160 = por %p158, %p159
      %s162 = sadd.s32 %s161, 1
      %p165 = scmp.eq.s32.totalorder %s22, 1
      %p166 = scmp.ne.s32.totalorder %s161, %s163
      %p167 = scmp.eq.s32.totalorder %s22, 0
      %p168 = por %p166, %p167
      %p169 = scmp.ne.s32.totalorder %s161, %s163
      %p170 = scmp.eq.s32.totalorder %s27, 1
      %p171 = por %p169, %p170
      %p172 = scmp.ne.s32.totalorder %s163, %s164
      %p173 = scmp.eq.s32.totalorder %s27, 0
      %p174 = por %p172, %p173
      %p175 = scmp.ne.s32.totalorder %s163, %s164
      %p176 = scmp.eq.s32.totalorder %s28, 1
      %p177 = por %p175, %p176
      %p179 = scmp.ne.s32.totalorder %s164, %s178
      %p180 = scmp.eq.s32.totalorder %s28, 0
      %p181 = por %p179, %p180
      %s182 = ssub.s32 %s22, %s29
      %p183 = scmp.eq.s32.totalorder %s182, 0
      %s185 = sadd.s32 %s184, 1
      %s186 = scalar_select %p183, %s184, %s185
      %p189 = pneg %p183
      %p190 = scmp.eq.s32.totalorder %s22, 1
      %p191 = por %p189, %p190
      %p192 = scmp.ne.s32.totalorder %s184, %s187
      %p193 = scmp.eq.s32.totalorder %s22, 0
      %p194 = por %p192, %p193
      %p195 = scmp.ne.s32.totalorder %s184, %s187
      %p196 = scmp.eq.s32.totalorder %s27, 1
      %p197 = por %p195, %p196
      %p198 = scmp.ne.s32.totalorder %s187, %s188
      %p199 = scmp.eq.s32.totalorder %s27, 0
      %p200 = por %p198, %p199
      %p201 = scmp.ne.s32.totalorder %s187, %s188
      %p202 = scmp.eq.s32.totalorder %s28, 1
      %p203 = por %p201, %p202
      %p205 = scmp.ne.s32.totalorder %s188, %s204
      %p206 = scmp.eq.s32.totalorder %s28, 0
      %p207 = por %p205, %p206
      %s209 = sadd.s32 %s208, 1
      %p212 = scmp.eq.s32.totalorder %s22, 1
      %p213 = scmp.ne.s32.totalorder %s208, %s210
      %p214 = scmp.eq.s32.totalorder %s22, 0
      %p215 = por %p213, %p214
      %p216 = scmp.ne.s32.totalorder %s208, %s210
      %p217 = scmp.eq.s32.totalorder %s27, 1
      %p218 = por %p216, %p217
      %p219 = scmp.ne.s32.totalorder %s210, %s211
      %p220 = scmp.eq.s32.totalorder %s27, 0
      %p221 = por %p219, %p220
      %p222 = scmp.ne.s32.totalorder %s210, %s211
      %p223 = scmp.eq.s32.totalorder %s28, 1
      %p224 = por %p222, %p223
      %p226 = scmp.ne.s32.totalorder %s211, %s225
      %p227 = scmp.eq.s32.totalorder %s28, 0
      %p228 = por %p226, %p227
      %s230 = sadd.s32 %s229, 1
      %p233 = scmp.eq.s32.totalorder %s22, 1
      %p234 = scmp.ne.s32.totalorder %s229, %s231
      %p235 = scmp.eq.s32.totalorder %s22, 0
      %p236 = por %p234, %p235
      %p237 = scmp.ne.s32.totalorder %s229, %s231
      %p238 = scmp.eq.s32.totalorder %s27, 1
      %p239 = por %p237, %p238
      %p240 = scmp.ne.s32.totalorder %s231, %s232
      %p241 = scmp.eq.s32.totalorder %s27, 0
      %p242 = por %p240, %p241
      %p243 = scmp.ne.s32.totalorder %s231, %s232
      %p244 = scmp.eq.s32.totalorder %s28, 1
      %p245 = por %p243, %p244
      %p247 = scmp.ne.s32.totalorder %s232, %s246
      %p248 = scmp.eq.s32.totalorder %s28, 0
      %p249 = por %p247, %p248
      %p250 = scmp.le.s32.totalorder 1, %s22
      %p251 = scmp.lt.s32.totalorder %s22, 3
      %p252 = pnand %p250, %p251
      %p253 = pneg %p252
      // Predicated region
      $region9: #{tpu_custom_call.1} parent=5 // pred_check
        _
      $region10: #{tpu_custom_call.1} parent=5 // pred_check_branch
        %255 = sbr.rel (%p252) target = $region12
      $region11: #{tpu_custom_call.1} parent=5 // pred_region
        %s256 = ssub.s32 %s22, 1
        // Predicated region
        $region13: #{tpu_custom_call.1} parent=11 // pred_check
          %p257 = pneg %p69
        $region14: #{tpu_custom_call.1} parent=11 // pred_check_branch
          %259 = sbr.rel (%p257) target = $region16
        $region15: #{tpu_custom_call.1} parent=11 // pred_region
          _
        $region16: #{tpu_custom_call.1} parent=11 // pred_fallthru
          _
        // Predicated region
        $region17: #{tpu_custom_call.1} parent=11 // pred_check
          %p260 = pneg %p90
        $region18: #{tpu_custom_call.1} parent=11 // pred_check_branch
          %262 = sbr.rel (%p260) target = $region20
        $region19: #{tpu_custom_call.1} parent=11 // pred_region
          %s264 = ssub.s32 4096, 4096
          %265 = vsyncadd [#allocation5], %s264
          %s266 = sshll.u32 [#allocation4], 4
          %s267 = int_to_ptr.vmem [resolvable:$true] %s266
          %272 = dma.hbm_to_vmem [thread:$0]  %s2, 4096, %s267, [#allocation5], 256, 256, 16
        $region20: #{tpu_custom_call.1} parent=11 // pred_fallthru
          _
        // Predicated region
        $region21: #{tpu_custom_call.1} parent=11 // pred_check
          %p273 = pneg %p111
        $region22: #{tpu_custom_call.1} parent=11 // pred_check_branch
          %275 = sbr.rel (%p273) target = $region24
        $region23: #{tpu_custom_call.1} parent=11 // pred_region
          %s277 = ssub.s32 8192, 8192
          %278 = vsyncadd [#allocation8], %s277
          %s279 = sshll.u32 [#allocation7], 4
          %s280 = int_to_ptr.vmem [resolvable:$true] %s279
          %285 = dma.hbm_to_vmem [thread:$0]  %s3, 8192, %s280, [#allocation8], 256, 256, 16
        $region24: #{tpu_custom_call.1} parent=11 // pred_fallthru
          _
        // Predicated region
        $region25: #{tpu_custom_call.1} parent=11 // pred_check
          %p286 = pneg %p132
        $region26: #{tpu_custom_call.1} parent=11 // pred_check_branch
          %288 = sbr.rel (%p286) target = $region28
        $region27: #{tpu_custom_call.1} parent=11 // pred_region
          _
        $region28: #{tpu_custom_call.1} parent=11 // pred_fallthru
          _
        // Predicated region
        $region29: #{tpu_custom_call.1} parent=11 // pred_check
          %p289 = pneg %p153
        $region30: #{tpu_custom_call.1} parent=11 // pred_check_branch
          %291 = sbr.rel (%p289) target = $region32
        $region31: #{tpu_custom_call.1} parent=11 // pred_region
          %s293 = ssub.s32 1024, 1024
          %294 = vsyncadd [#allocation8], %s293
          %s295 = sshll.u32 [#allocation9], 4
          %s296 = int_to_ptr.vmem [resolvable:$true] %s295
          %301 = dma.hbm_to_vmem [thread:$0]  %s5, 1024, %s296, [#allocation8], 64, 64, 4
        $region32: #{tpu_custom_call.1} parent=11 // pred_fallthru
          _
        // Predicated region
        $region33: #{tpu_custom_call.1} parent=11 // pred_check
          %p302 = pneg %p174
        $region34: #{tpu_custom_call.1} parent=11 // pred_check_branch
          %304 = sbr.rel (%p302) target = $region36
        $region35: #{tpu_custom_call.1} parent=11 // pred_region
          _
        $region36: #{tpu_custom_call.1} parent=11 // pred_fallthru
          _
      $region12: #{tpu_custom_call.1} parent=5 // pred_fallthru
        _
      %p305 = scmp.lt.s32.totalorder %s22, 2
      // Predicated region
      $region37: #{tpu_custom_call.1} parent=5 // pred_check
        %p306 = pneg %p305
      $region38: #{tpu_custom_call.1} parent=5 // pred_check_branch
        %308 = sbr.rel (%p306) target = $region40
      $region39: #{tpu_custom_call.1} parent=5 // pred_region
        // Predicated region
        $region41: #{tpu_custom_call.1} parent=39 // pred_check
          %p309 = pneg %p42
        $region42: #{tpu_custom_call.1} parent=39 // pred_check_branch
          %311 = sbr.rel (%p309) target = $region44
        $region43: #{tpu_custom_call.1} parent=39 // pred_region
          %s312 = smul.u32 4, %s22
          %p313 = scmp.lt.s32.totalorder %s312, 7
          %s314 = scalar_select %p313, %s312, 7
          %s315 = smul.addr %s314, 4
          %s316 = scalar_lea.vmem %s0, %s315
          %s317 = smul.u32 4, %s22
        $region44: #{tpu_custom_call.1} parent=39 // pred_fallthru
          _
      $region40: #{tpu_custom_call.1} parent=5 // pred_fallthru
        _
      %p318 = scmp.le.s32.totalorder 1, %s22
      %p319 = scmp.lt.s32.totalorder %s22, 3
      %p320 = pnand %p318, %p319
      %p321 = pneg %p320
      // Predicated region
      $region45: #{tpu_custom_call.1} parent=5 // pred_check
        _
      $region46: #{tpu_custom_call.1} parent=5 // pred_check_branch
        %323 = sbr.rel (%p320) target = $region48
      $region47: #{tpu_custom_call.1} parent=5 // pred_region
        %s324 = ssub.s32 %s22, 1
        // Predicated region
        $region49: #{tpu_custom_call.1} parent=47 // pred_check
          %p325 = pneg %p90
        $region50: #{tpu_custom_call.1} parent=47 // pred_check_branch
          %327 = sbr.rel (%p325) target = $region52
        $region51: #{tpu_custom_call.1} parent=47 // pred_region
          %328 = dma.done [#allocation5], 4096
        $region52: #{tpu_custom_call.1} parent=47 // pred_fallthru
          _
        // Predicated region
        $region53: #{tpu_custom_call.1} parent=47 // pred_check
          %p329 = pneg %p111
        $region54: #{tpu_custom_call.1} parent=47 // pred_check_branch
          %331 = sbr.rel (%p329) target = $region56
        $region55: #{tpu_custom_call.1} parent=47 // pred_region
          %332 = dma.done [#allocation8], 8192
        $region56: #{tpu_custom_call.1} parent=47 // pred_fallthru
          _
        // Predicated region
        $region57: #{tpu_custom_call.1} parent=47 // pred_check
          %p333 = pneg %p153
        $region58: #{tpu_custom_call.1} parent=47 // pred_check_branch
          %335 = sbr.rel (%p333) target = $region60
        $region59: #{tpu_custom_call.1} parent=47 // pred_region
          %336 = dma.done [#allocation8], 1024
        $region60: #{tpu_custom_call.1} parent=47 // pred_fallthru
          _
        %s337 = smul.u32 4, %s27
        %p338 = scmp.lt.s32.totalorder %s337, 7
        %s339 = scalar_select %p338, %s337, 7
        %s340 = smul.addr %s339, 4
        %s341 = scalar_lea.vmem %s0, %s340
        %p342 = pneg %p48
        %p343 = pneg %p45
        %p344 = pneg %p69
        %p345 = pneg %p66
        %p346 = pneg %p90
        %p347 = pneg %p87
        %p348 = pneg %p111
        %p349 = pneg %p108
        %p350 = pneg %p132
        %p351 = pneg %p129
        %p352 = pneg %p153
        %p353 = pneg %p150
        %p354 = pneg %p174
        %p355 = pneg %p171
        %p356 = pneg %p200
        %p357 = pneg %p197
        %s358 = sand.u32 %s187, 1
        %s359 = scalar_lea.sflag [#allocation6], %s358
        %s360 = sand.u32 %s187, 1
        %s361 = smul.addr %s360, 32
        %s362 = scalar_lea.vmem [#allocation10], %s361
        %p363 = pneg %p221
        %p364 = pneg %p218
        %p365 = pneg %p242
        %p366 = pneg %p239
        %s367 = smul.u32 4, %s27
        %p368 = scmp.lt.s32.totalorder %s367, 7
        %s369 = scalar_select %p368, %s367, 7
        %s370 = smul.addr %s369, 4
        %s371 = scalar_lea.vmem %s0, %s370
        %s372 = smul.u32 4, %s27
        %s373 = smul.u32 4, %s27
        %s375 = smul.u32 %s27, 4
        %p376 = scmp.eq.s32.totalorder %s27, 0
        // Predicated region
        $region61: #{tpu_custom_call.1} parent=47 // pred_check
          %p377 = pneg %p376
        $region62: #{tpu_custom_call.1} parent=47 // pred_check_branch
          %379 = sbr.rel (%p377) target = $region64
        $region63: #{tpu_custom_call.1} parent=47 // pred_region
          %380 = vst [vmem:[#allocation11] sm:$0xff] 0.0
          %381 = vst [vmem:[#allocation11 + $0x8] sm:$0xff] 0.0
          %382 = vst [vmem:[#allocation13] sm:$0xff] 0.0
          %383 = vst [vmem:[#allocation13 + $0x8] sm:$0xff] 0.0
        $region64: #{tpu_custom_call.1} parent=47 // pred_fallthru
          _
        %v384 = vld [vmem:[%s371] sm:$0xf]
        %v385 = vld [vmem:[%s371 + $0x4] sm:$0xf]
        %v386 = vld [vmem:[%s371 + $0x8] sm:$0xf]
        %v387 = vld [vmem:[%s371 + $0xc] sm:$0xf]
        %v388 = vld [vmem:[%s1] sm:$0xff]
        %v389 = vld [vmem:[%s1 + $0x8] sm:$0xff]
        %v390 = vld [vmem:[%s1 + $0x10] sm:$0xff]
        %v391 = vld [vmem:[%s1 + $0x18] sm:$0xff]
        %v392 = vld [vmem:[%s4] sm:$0xf]
        %v394 = vlaneseq
        %v395 = vshrl.u32 %v394, 7
        %v396 = vsub.s32 0, %v395
        %v397 = vrot.slane %v392, %v396
        %v398 = vlaneseq
        %v399 = vshrl.u32 %v398, 7
        %v400 = vsub.s32 1, %v399
        %v401 = vrot.slane %v392, %v400
        %v402 = vlaneseq
        %v403 = vshrl.u32 %v402, 7
        %v404 = vsub.s32 2, %v403
        %v405 = vrot.slane %v392, %v404
        %v406 = vlaneseq
        %v407 = vshrl.u32 %v406, 7
        %v408 = vsub.s32 3, %v407
        %v409 = vrot.slane %v392, %v408
        %v418 = vunpack.c.l.b16 %v384
        %v419 = vunpack.c.l.b16 %v385
        %v420 = vunpack.c.l.b16 %v386
        %v421 = vunpack.c.l.b16 %v387
        %v422 = vpack.c.b16 %v419, %v418
        %v423 = vpack.c.b16 %v421, %v420
        %v428 = vunpack.c.l.b16 %v388
        %v429 = vunpack.c.h.b16 %v388
        %v430 = vunpack.c.l.b16 %v389
        %v431 = vunpack.c.h.b16 %v389
        %v432 = vunpack.c.l.b16 %v390
        %v433 = vunpack.c.h.b16 %v390
        %v434 = vunpack.c.l.b16 %v391
        %v435 = vunpack.c.h.b16 %v391
        %v436 = vpack.c.b16 %v432, %v428
        %v437 = vpack.c.b16 %v433, %v429
        %v438 = vpack.c.b16 %v434, %v430
        %v439 = vpack.c.b16 %v435, %v431
        %vm444 = vcmask 130048
        %v446 = vsel %vm444, %v422, 0
        %v449 = vsel %vm444, %v423, 0
        %451 = vmatprep.subr.bf16.mxu0 %v437
        %452 = vmatpush1.bf16.msra.mxu0 %v436
        %453 = vmatprep.subr.bf16.mxu0 0
        %454 = vmatpush1.bf16.msra.mxu0 0
        %455 = vmatprep.subr.bf16.mxu0 0
        %456 = vmatpush1.bf16.msra.mxu0 0
        %457 = vmatprep.subr.bf16.mxu0 0
        %458 = vmatpush1.bf16.msra.mxu0 0
        %459 = vmatprep.subr.bf16.mxu0 0
        %460 = vmatpush1.bf16.msra.mxu0 0
        %461 = vmatprep.subr.bf16.mxu0 0
        %462 = vmatpush1.bf16.msra.mxu0 0
        %463 = vmatprep.subr.bf16.mxu0 0
        %464 = vmatpush1.bf16.msra.mxu0 0
        %465 = vmatprep.subr.bf16.mxu0 0
        %466 = vmatpush1.bf16.msra.mxu0 0
        %467 = vmatprep.subr.bf16.mxu0 0
        %468 = vmatpush1.bf16.msra.mxu0 0
        %469 = vmatprep.subr.bf16.mxu0 0
        %470 = vmatpush1.bf16.msra.mxu0 0
        %471 = vmatprep.subr.bf16.mxu0 0
        %472 = vmatpush1.bf16.msra.mxu0 0
        %473 = vmatprep.subr.bf16.mxu0 0
        %474 = vmatpush1.bf16.msra.mxu0 0
        %475 = vmatprep.subr.bf16.mxu0 0
        %476 = vmatpush1.bf16.msra.mxu0 0
        %477 = vmatprep.subr.bf16.mxu0 0
        %478 = vmatpush1.bf16.msra.mxu0 0
        %479 = vmatprep.subr.bf16.mxu0 0
        %480 = vmatpush1.bf16.msra.mxu0 0
        %481 = vmatprep.subr.bf16.mxu0 0
        %482 = vmatpush1.bf16.msra.mxu0 0
        %483 = vmatprep.mubr.bf16.mxu0 0
        %484 = vmatmul.mubr.bf16.gmra.mrb[0].mxu0 %v446
        %v485 = vpop.f32.mrb[0].mxu0
        %v486 = vadd.f32 %v397, %v485
        %v487 = vpop.f32.mrb[0].mxu0
        %v488 = vadd.f32 %v401, %v487
        %v489 = vpop.f32.mrb[0].mxu0
        %v490 = vadd.f32 %v397, %v489
        %v491 = vpop.f32.mrb[0].mxu0
        %v492 = vadd.f32 %v401, %v491
        %493 = vmatprep.mubr.bf16.mxu0 0
        %494 = vmatmul.mubr.bf16.gmra.mrb[0].mxu0 %v449
        %v495 = vpop.f32.mrb[0].mxu0
        %v496 = vadd.f32 %v397, %v495
        %v497 = vpop.f32.mrb[0].mxu0
        %v498 = vadd.f32 %v401, %v497
        %v499 = vpop.f32.mrb[0].mxu0
        %v500 = vadd.f32 %v397, %v499
        %v501 = vpop.f32.mrb[0].mxu0
        %v502 = vadd.f32 %v401, %v501
        %503 = vdwg.mxu0
        %504 = vmatprep.subr.bf16.mxu0 %v439
        %505 = vmatpush1.bf16.msra.mxu0 %v438
        %506 = vmatprep.subr.bf16.mxu0 0
        %507 = vmatpush1.bf16.msra.mxu0 0
        %508 = vmatprep.subr.bf16.mxu0 0
        %509 = vmatpush1.bf16.msra.mxu0 0
        %510 = vmatprep.subr.bf16.mxu0 0
        %511 = vmatpush1.bf16.msra.mxu0 0
        %512 = vmatprep.subr.bf16.mxu0 0
        %513 = vmatpush1.bf16.msra.mxu0 0
        %514 = vmatprep.subr.bf16.mxu0 0
        %515 = vmatpush1.bf16.msra.mxu0 0
        %516 = vmatprep.subr.bf16.mxu0 0
        %517 = vmatpush1.bf16.msra.mxu0 0
        %518 = vmatprep.subr.bf16.mxu0 0
        %519 = vmatpush1.bf16.msra.mxu0 0
        %520 = vmatprep.subr.bf16.mxu0 0
        %521 = vmatpush1.bf16.msra.mxu0 0
        %522 = vmatprep.subr.bf16.mxu0 0
        %523 = vmatpush1.bf16.msra.mxu0 0
        %524 = vmatprep.subr.bf16.mxu0 0
        %525 = vmatpush1.bf16.msra.mxu0 0
        %526 = vmatprep.subr.bf16.mxu0 0
        %527 = vmatpush1.bf16.msra.mxu0 0
        %528 = vmatprep.subr.bf16.mxu0 0
        %529 = vmatpush1.bf16.msra.mxu0 0
        %530 = vmatprep.subr.bf16.mxu0 0
        %531 = vmatpush1.bf16.msra.mxu0 0
        %532 = vmatprep.subr.bf16.mxu0 0
        %533 = vmatpush1.bf16.msra.mxu0 0
        %534 = vmatprep.subr.bf16.mxu0 0
        %535 = vmatpush1.bf16.msra.mxu0 0
        %536 = vmatprep.mubr.bf16.mxu0 0
        %537 = vmatmul.mubr.bf16.gmra.mrb[0].mxu0 %v446
        %v538 = vpop.f32.mrb[0].mxu0
        %v539 = vadd.f32 %v405, %v538
        %v540 = vpop.f32.mrb[0].mxu0
        %v541 = vadd.f32 %v409, %v540
        %v542 = vpop.f32.mrb[0].mxu0
        %v543 = vadd.f32 %v405, %v542
        %v544 = vpop.f32.mrb[0].mxu0
        %v545 = vadd.f32 %v409, %v544
        %546 = vmatprep.mubr.bf16.mxu0 0
        %547 = vmatmul.mubr.bf16.gmra.mrb[0].mxu0 %v449
        %v548 = vpop.f32.mrb[0].mxu0
        %v549 = vadd.f32 %v405, %v548
        %v550 = vpop.f32.mrb[0].mxu0
        %v551 = vadd.f32 %v409, %v550
        %v552 = vpop.f32.mrb[0].mxu0
        %v553 = vadd.f32 %v405, %v552
        %v554 = vpop.f32.mrb[0].mxu0
        %v555 = vadd.f32 %v409, %v554
        %556 = vdwg.mxu0
        %557 = vst [vmem:[#allocation2] sm:$0xff] %v486
        %558 = vst [vmem:[#allocation2 + $0x8] sm:$0xff] %v488
        %559 = vst [vmem:[#allocation2 + $0x10] sm:$0xff] %v539
        %560 = vst [vmem:[#allocation2 + $0x18] sm:$0xff] %v541
        %561 = vst [vmem:[#allocation2 + $0x20] sm:$0xff] %v490
        %562 = vst [vmem:[#allocation2 + $0x28] sm:$0xff] %v492
        %563 = vst [vmem:[#allocation2 + $0x30] sm:$0xff] %v543
        %564 = vst [vmem:[#allocation2 + $0x38] sm:$0xff] %v545
        %565 = vst [vmem:[#allocation2 + $0x40] sm:$0xff] %v496
        %566 = vst [vmem:[#allocation2 + $0x48] sm:$0xff] %v498
        %567 = vst [vmem:[#allocation2 + $0x50] sm:$0xff] %v549
        %568 = vst [vmem:[#allocation2 + $0x58] sm:$0xff] %v551
        %569 = vst [vmem:[#allocation2 + $0x60] sm:$0xff] %v500
        %570 = vst [vmem:[#allocation2 + $0x68] sm:$0xff] %v502
        %571 = vst [vmem:[#allocation2 + $0x70] sm:$0xff] %v553
        %572 = vst [vmem:[#allocation2 + $0x78] sm:$0xff] %v555
        %v573 = vld [vmem:[#allocation7] sm:$0xff]
        %v574 = vld [vmem:[#allocation7 + $0x8] sm:$0xff]
        %v575 = vld [vmem:[#allocation7 + $0x10] sm:$0xff]
        %v576 = vld [vmem:[#allocation7 + $0x18] sm:$0xff]
        %v577 = vld [vmem:[#allocation7 + $0x20] sm:$0xff]
        %v578 = vld [vmem:[#allocation7 + $0x28] sm:$0xff]
        %v579 = vld [vmem:[#allocation7 + $0x30] sm:$0xff]
        %v580 = vld [vmem:[#allocation7 + $0x38] sm:$0xff]
        %v581 = vld [vmem:[#allocation7 + $0x40] sm:$0xff]
        %v582 = vld [vmem:[#allocation7 + $0x48] sm:$0xff]
        %v583 = vld [vmem:[#allocation7 + $0x50] sm:$0xff]
        %v584 = vld [vmem:[#allocation7 + $0x58] sm:$0xff]
        %v585 = vld [vmem:[#allocation7 + $0x60] sm:$0xff]
        %v586 = vld [vmem:[#allocation7 + $0x68] sm:$0xff]
        %v587 = vld [vmem:[#allocation7 + $0x70] sm:$0xff]
        %v588 = vld [vmem:[#allocation7 + $0x78] sm:$0xff]
        %v589 = vld [vmem:[#allocation7 + $0x80] sm:$0xff]
        %v590 = vld [vmem:[#allocation7 + $0x88] sm:$0xff]
        %v591 = vld [vmem:[#allocation7 + $0x90] sm:$0xff]
        %v592 = vld [vmem:[#allocation7 + $0x98] sm:$0xff]
        %v593 = vld [vmem:[#allocation7 + $0xa0] sm:$0xff]
        %v594 = vld [vmem:[#allocation7 + $0xa8] sm:$0xff]
        %v595 = vld [vmem:[#allocation7 + $0xb0] sm:$0xff]
        %v596 = vld [vmem:[#allocation7 + $0xb8] sm:$0xff]
        %v597 = vld [vmem:[#allocation7 + $0xc0] sm:$0xff]
        %v598 = vld [vmem:[#allocation7 + $0xc8] sm:$0xff]
        %v599 = vld [vmem:[#allocation7 + $0xd0] sm:$0xff]
        %v600 = vld [vmem:[#allocation7 + $0xd8] sm:$0xff]
        %v601 = vld [vmem:[#allocation7 + $0xe0] sm:$0xff]
        %v602 = vld [vmem:[#allocation7 + $0xe8] sm:$0xff]
        %v603 = vld [vmem:[#allocation7 + $0xf0] sm:$0xff]
        %v604 = vld [vmem:[#allocation7 + $0xf8] sm:$0xff]
        %v605 = vld [vmem:[#allocation11] sm:$0xff]
        %v606 = vld [vmem:[#allocation13] sm:$0xff]
        %v607 = vld [vmem:[#allocation2] sm:$0xff]
        %v608 = vld [vmem:[#allocation2 + $0x8] sm:$0xff]
        %v609 = vld [vmem:[#allocation2 + $0x10] sm:$0xff]
        %v610 = vld [vmem:[#allocation2 + $0x18] sm:$0xff]
        %v611 = vpack.c.bf16 %v605, %v605
        %v644 = vunpack.c.l.b16 %v573
        %v645 = vunpack.c.h.b16 %v573
        %v646 = vunpack.c.l.b16 %v574
        %v647 = vunpack.c.h.b16 %v574
        %v648 = vunpack.c.l.b16 %v575
        %v649 = vunpack.c.h.b16 %v575
        %v650 = vunpack.c.l.b16 %v576
        %v651 = vunpack.c.h.b16 %v576
        %v652 = vunpack.c.l.b16 %v577
        %v653 = vunpack.c.h.b16 %v577
        %v654 = vunpack.c.l.b16 %v578
        %v655 = vunpack.c.h.b16 %v578
        %v656 = vunpack.c.l.b16 %v579
        %v657 = vunpack.c.h.b16 %v579
        %v658 = vunpack.c.l.b16 %v580
        %v659 = vunpack.c.h.b16 %v580
        %v660 = vunpack.c.l.b16 %v581
        %v661 = vunpack.c.h.b16 %v581
        %v662 = vunpack.c.l.b16 %v582
        %v663 = vunpack.c.h.b16 %v582
        %v664 = vunpack.c.l.b16 %v583
        %v665 = vunpack.c.h.b16 %v583
        %v666 = vunpack.c.l.b16 %v584
        %v667 = vunpack.c.h.b16 %v584
        %v668 = vunpack.c.l.b16 %v585
        %v669 = vunpack.c.h.b16 %v585
        %v670 = vunpack.c.l.b16 %v586
        %v671 = vunpack.c.h.b16 %v586
        %v672 = vunpack.c.l.b16 %v587
        %v673 = vunpack.c.h.b16 %v587
        %v674 = vunpack.c.l.b16 %v588
        %v675 = vunpack.c.h.b16 %v588
        %v676 = vunpack.c.l.b16 %v589
        %v677 = vunpack.c.h.b16 %v589
        %v678 = vunpack.c.l.b16 %v590
        %v679 = vunpack.c.h.b16 %v590
        %v680 = vunpack.c.l.b16 %v591
        %v681 = vunpack.c.h.b16 %v591
        %v682 = vunpack.c.l.b16 %v592
        %v683 = vunpack.c.h.b16 %v592
        %v684 = vunpack.c.l.b16 %v593
        %v685 = vunpack.c.h.b16 %v593
        %v686 = vunpack.c.l.b16 %v594
        %v687 = vunpack.c.h.b16 %v594
        %v688 = vunpack.c.l.b16 %v595
        %v689 = vunpack.c.h.b16 %v595
        %v690 = vunpack.c.l.b16 %v596
        %v691 = vunpack.c.h.b16 %v596
        %v692 = vunpack.c.l.b16 %v597
        %v693 = vunpack.c.h.b16 %v597
        %v694 = vunpack.c.l.b16 %v598
        %v695 = vunpack.c.h.b16 %v598
        %v696 = vunpack.c.l.b16 %v599
        %v697 = vunpack.c.h.b16 %v599
        %v698 = vunpack.c.l.b16 %v600
        %v699 = vunpack.c.h.b16 %v600
        %v700 = vunpack.c.l.b16 %v601
        %v701 = vunpack.c.h.b16 %v601
        %v702 = vunpack.c.l.b16 %v602
        %v703 = vunpack.c.h.b16 %v602
        %v704 = vunpack.c.l.b16 %v603
        %v705 = vunpack.c.h.b16 %v603
        %v706 = vunpack.c.l.b16 %v604
        %v707 = vunpack.c.h.b16 %v604
        %v708 = vpack.c.b16 %v648, %v644
        %v709 = vpack.c.b16 %v649, %v645
        %v710 = vpack.c.b16 %v650, %v646
        %v711 = vpack.c.b16 %v651, %v647
        %v712 = vpack.c.b16 %v656, %v652
        %v713 = vpack.c.b16 %v657, %v653
        %v714 = vpack.c.b16 %v658, %v654
        %v715 = vpack.c.b16 %v659, %v655
        %v716 = vpack.c.b16 %v664, %v660
        %v717 = vpack.c.b16 %v665, %v661
        %v718 = vpack.c.b16 %v666, %v662
        %v719 = vpack.c.b16 %v667, %v663
        %v720 = vpack.c.b16 %v672, %v668
        %v721 = vpack.c.b16 %v673, %v669
        %v722 = vpack.c.b16 %v674, %v670
        %v723 = vpack.c.b16 %v675, %v671
        %v724 = vpack.c.b16 %v680, %v676
        %v725 = vpack.c.b16 %v681, %v677
        %v726 = vpack.c.b16 %v682, %v678
        %v727 = vpack.c.b16 %v683, %v679
        %v728 = vpack.c.b16 %v688, %v684
        %v729 = vpack.c.b16 %v689, %v685
        %v730 = vpack.c.b16 %v690, %v686
        %v731 = vpack.c.b16 %v691, %v687
        %v732 = vpack.c.b16 %v696, %v692
        %v733 = vpack.c.b16 %v697, %v693
        %v734 = vpack.c.b16 %v698, %v694
        %v735 = vpack.c.b16 %v699, %v695
        %v736 = vpack.c.b16 %v704, %v700
        %v737 = vpack.c.b16 %v705, %v701
        %v738 = vpack.c.b16 %v706, %v702
        %v739 = vpack.c.b16 %v707, %v703
        %772 = vmatprep.subr.bf16.mxu0 %v709
        %773 = vmatpush1.bf16.msra.mxu0 %v708
        %774 = vmatprep.subr.bf16.mxu0 %v713
        %775 = vmatpush1.bf16.msra.mxu0 %v712
        %776 = vmatprep.subr.bf16.mxu0 %v717
        %777 = vmatpush1.bf16.msra.mxu0 %v716
        %778 = vmatprep.subr.bf16.mxu0 %v721
        %779 = vmatpush1.bf16.msra.mxu0 %v720
        %780 = vmatprep.subr.bf16.mxu0 %v725
        %781 = vmatpush1.bf16.msra.mxu0 %v724
        %782 = vmatprep.subr.bf16.mxu0 %v729
        %783 = vmatpush1.bf16.msra.mxu0 %v728
        %784 = vmatprep.subr.bf16.mxu0 %v733
        %785 = vmatpush1.bf16.msra.mxu0 %v732
        %786 = vmatprep.subr.bf16.mxu0 %v737
        %787 = vmatpush1.bf16.msra.mxu0 %v736
        %788 = vmatprep.subr.bf16.mxu0 0
        %789 = vmatpush1.bf16.msra.mxu0 0
        %790 = vmatprep.subr.bf16.mxu0 0
        %791 = vmatpush1.bf16.msra.mxu0 0
        %792 = vmatprep.subr.bf16.mxu0 0
        %793 = vmatpush1.bf16.msra.mxu0 0
        %794 = vmatprep.subr.bf16.mxu0 0
        %795 = vmatpush1.bf16.msra.mxu0 0
        %796 = vmatprep.subr.bf16.mxu0 0
        %797 = vmatpush1.bf16.msra.mxu0 0
        %798 = vmatprep.subr.bf16.mxu0 0
        %799 = vmatpush1.bf16.msra.mxu0 0
        %800 = vmatprep.subr.bf16.mxu0 0
        %801 = vmatpush1.bf16.msra.mxu0 0
        %802 = vmatprep.subr.bf16.mxu0 0
        %803 = vmatpush1.bf16.msra.mxu0 0
        %804 = vmatprep.mubr.bf16.mxu0 0
        %805 = vmatmul.mubr.bf16.gmra.mrb[0].mxu0 %v611
        %v806 = vpop.f32.mrb[0].mxu0
        %v807 = vadd.f32 0.0, %v806
        %v808 = vpop.f32.mrb[0].mxu0
        %v809 = vadd.f32 0.0, %v808
        %v810 = vpop.f32.mrb[0].mxu0
        %v811 = vpop.f32.mrb[0].mxu0
        %812 = vdwg.mxu0
        %813 = vmatprep.subr.bf16.mxu0 %v711
        %814 = vmatpush1.bf16.msra.mxu0 %v710
        %815 = vmatprep.subr.bf16.mxu0 %v715
        %816 = vmatpush1.bf16.msra.mxu0 %v714
        %817 = vmatprep.subr.bf16.mxu0 %v719
        %818 = vmatpush1.bf16.msra.mxu0 %v718
        %819 = vmatprep.subr.bf16.mxu0 %v723
        %820 = vmatpush1.bf16.msra.mxu0 %v722
        %821 = vmatprep.subr.bf16.mxu0 %v727
        %822 = vmatpush1.bf16.msra.mxu0 %v726
        %823 = vmatprep.subr.bf16.mxu0 %v731
        %824 = vmatpush1.bf16.msra.mxu0 %v730
        %825 = vmatprep.subr.bf16.mxu0 %v735
        %826 = vmatpush1.bf16.msra.mxu0 %v734
        %827 = vmatprep.subr.bf16.mxu0 %v739
        %828 = vmatpush1.bf16.msra.mxu0 %v738
        %829 = vmatprep.subr.bf16.mxu0 0
        %830 = vmatpush1.bf16.msra.mxu0 0
        %831 = vmatprep.subr.bf16.mxu0 0
        %832 = vmatpush1.bf16.msra.mxu0 0
        %833 = vmatprep.subr.bf16.mxu0 0
        %834 = vmatpush1.bf16.msra.mxu0 0
        %835 = vmatprep.subr.bf16.mxu0 0
        %836 = vmatpush1.bf16.msra.mxu0 0
        %837 = vmatprep.subr.bf16.mxu0 0
        %838 = vmatpush1.bf16.msra.mxu0 0
        %839 = vmatprep.subr.bf16.mxu0 0
        %840 = vmatpush1.bf16.msra.mxu0 0
        %841 = vmatprep.subr.bf16.mxu0 0
        %842 = vmatpush1.bf16.msra.mxu0 0
        %843 = vmatprep.subr.bf16.mxu0 0
        %844 = vmatpush1.bf16.msra.mxu0 0
        %845 = vmatprep.mubr.bf16.mxu0 0
        %846 = vmatmul.mubr.bf16.gmra.mrb[0].mxu0 %v611
        %v847 = vpop.f32.mrb[0].mxu0
        %v848 = vadd.f32 0.0, %v847
        %v849 = vpop.f32.mrb[0].mxu0
        %v850 = vadd.f32 0.0, %v849
        %v851 = vpop.f32.mrb[0].mxu0
        %v852 = vpop.f32.mrb[0].mxu0
        %853 = vdwg.mxu0
        %v854 = vadd.f32 %v607, %v807
        %v855 = vadd.f32 %v608, %v809
        %v856 = vadd.f32 %v609, %v848
        %v857 = vadd.f32 %v610, %v850
        %v858 = vmul.f32 %v854, 0.5
        %v859 = vtanh.pop %v858
        %v860 = vadd.f32 %v859, 1.0
        %v861 = vmul.f32 %v860, 0.5
        %v862 = vmul.f32 %v855, 0.5
        %v863 = vtanh.pop %v862
        %v864 = vadd.f32 %v863, 1.0
        %v865 = vmul.f32 %v864, 0.5
        %v866 = vtanh.pop %v856
        %v867 = vmul.f32 %v857, 0.5
        %v868 = vtanh.pop %v867
        %v869 = vadd.f32 %v868, 1.0
        %v870 = vmul.f32 %v869, 0.5
        %v871 = vmul.f32 %v865, %v606
        %v872 = vmul.f32 %v861, %v866
        %v873 = vadd.f32 %v871, %v872
        %v874 = vtanh.pop %v873
        %v875 = vmul.f32 %v870, %v874
        %p876 = scmp.lt.s32.totalorder %s375, 8
        %s877 = scalar_select %p876, 1, 0
        %v878 = vstv %s877
        %vm879 = vcmp.eq.s32.totalorder %v878, 1
        %v880 = vsel %vm879, %v875, %v605
        %v881 = vsel %vm879, %v873, %v606
        %882 = vst [vmem:[#allocation3] sm:$0xff] %v880
        %s883 = scalar_lea.vmem [#allocation2], 32
        %v884 = vld [vmem:[%s883] sm:$0xff]
        %v885 = vld [vmem:[%s883 + $0x8] sm:$0xff]
        %v886 = vld [vmem:[%s883 + $0x10] sm:$0xff]
        %v887 = vld [vmem:[%s883 + $0x18] sm:$0xff]
        %v888 = vpack.c.bf16 %v880, %v880
        %889 = vmatprep.subr.bf16.mxu0 %v709
        %890 = vmatpush1.bf16.msra.mxu0 %v708
        %891 = vmatprep.subr.bf16.mxu0 %v713
        %892 = vmatpush1.bf16.msra.mxu0 %v712
        %893 = vmatprep.subr.bf16.mxu0 %v717
        %894 = vmatpush1.bf16.msra.mxu0 %v716
        %895 = vmatprep.subr.bf16.mxu0 %v721
        %896 = vmatpush1.bf16.msra.mxu0 %v720
        %897 = vmatprep.subr.bf16.mxu0 %v725
        %898 = vmatpush1.bf16.msra.mxu0 %v724
        %899 = vmatprep.subr.bf16.mxu0 %v729
        %900 = vmatpush1.bf16.msra.mxu0 %v728
        %901 = vmatprep.subr.bf16.mxu0 %v733
        %902 = vmatpush1.bf16.msra.mxu0 %v732
        %903 = vmatprep.subr.bf16.mxu0 %v737
        %904 = vmatpush1.bf16.msra.mxu0 %v736
        %905 = vmatprep.subr.bf16.mxu0 0
        %906 = vmatpush1.bf16.msra.mxu0 0
        %907 = vmatprep.subr.bf16.mxu0 0
        %908 = vmatpush1.bf16.msra.mxu0 0
        %909 = vmatprep.subr.bf16.mxu0 0
        %910 = vmatpush1.bf16.msra.mxu0 0
        %911 = vmatprep.subr.bf16.mxu0 0
        %912 = vmatpush1.bf16.msra.mxu0 0
        %913 = vmatprep.subr.bf16.mxu0 0
        %914 = vmatpush1.bf16.msra.mxu0 0
        %915 = vmatprep.subr.bf16.mxu0 0
        %916 = vmatpush1.bf16.msra.mxu0 0
        %917 = vmatprep.subr.bf16.mxu0 0
        %918 = vmatpush1.bf16.msra.mxu0 0
        %919 = vmatprep.subr.bf16.mxu0 0
        %920 = vmatpush1.bf16.msra.mxu0 0
        %921 = vmatprep.mubr.bf16.mxu0 0
        %922 = vmatmul.mubr.bf16.gmra.mrb[0].mxu0 %v888
        %v923 = vpop.f32.mrb[0].mxu0
        %v924 = vadd.f32 0.0, %v923
        %v925 = vpop.f32.mrb[0].mxu0
        %v926 = vadd.f32 0.0, %v925
        %v927 = vpop.f32.mrb[0].mxu0
        %v928 = vpop.f32.mrb[0].mxu0
        %929 = vdwg.mxu0
        %930 = vmatprep.subr.bf16.mxu0 %v711
        %931 = vmatpush1.bf16.msra.mxu0 %v710
        %932 = vmatprep.subr.bf16.mxu0 %v715
        %933 = vmatpush1.bf16.msra.mxu0 %v714
        %934 = vmatprep.subr.bf16.mxu0 %v719
        %935 = vmatpush1.bf16.msra.mxu0 %v718
        %936 = vmatprep.subr.bf16.mxu0 %v723
        %937 = vmatpush1.bf16.msra.mxu0 %v722
        %938 = vmatprep.subr.bf16.mxu0 %v727
        %939 = vmatpush1.bf16.msra.mxu0 %v726
        %940 = vmatprep.subr.bf16.mxu0 %v731
        %941 = vmatpush1.bf16.msra.mxu0 %v730
        %942 = vmatprep.subr.bf16.mxu0 %v735
        %943 = vmatpush1.bf16.msra.mxu0 %v734
        %944 = vmatprep.subr.bf16.mxu0 %v739
        %945 = vmatpush1.bf16.msra.mxu0 %v738
        %946 = vmatprep.subr.bf16.mxu0 0
        %947 = vmatpush1.bf16.msra.mxu0 0
        %948 = vmatprep.subr.bf16.mxu0 0
        %949 = vmatpush1.bf16.msra.mxu0 0
        %950 = vmatprep.subr.bf16.mxu0 0
        %951 = vmatpush1.bf16.msra.mxu0 0
        %952 = vmatprep.subr.bf16.mxu0 0
        %953 = vmatpush1.bf16.msra.mxu0 0
        %954 = vmatprep.subr.bf16.mxu0 0
        %955 = vmatpush1.bf16.msra.mxu0 0
        %956 = vmatprep.subr.bf16.mxu0 0
        %957 = vmatpush1.bf16.msra.mxu0 0
        %958 = vmatprep.subr.bf16.mxu0 0
        %959 = vmatpush1.bf16.msra.mxu0 0
        %960 = vmatprep.subr.bf16.mxu0 0
        %961 = vmatpush1.bf16.msra.mxu0 0
        %962 = vmatprep.mubr.bf16.mxu0 0
        %963 = vmatmul.mubr.bf16.gmra.mrb[0].mxu0 %v888
        %v964 = vpop.f32.mrb[0].mxu0
        %v965 = vadd.f32 0.0, %v964
        %v966 = vpop.f32.mrb[0].mxu0
        %v967 = vadd.f32 0.0, %v966
        %v968 = vpop.f32.mrb[0].mxu0
        %v969 = vpop.f32.mrb[0].mxu0
        %970 = vdwg.mxu0
        %v971 = vadd.f32 %v884, %v924
        %v972 = vadd.f32 %v885, %v926
        %v973 = vadd.f32 %v886, %v965
        %v974 = vadd.f32 %v887, %v967
        %v975 = vmul.f32 %v971, 0.5
        %v976 = vtanh.pop %v975
        %v977 = vadd.f32 %v976, 1.0
        %v978 = vmul.f32 %v977, 0.5
        %v979 = vmul.f32 %v972, 0.5
        %v980 = vtanh.pop %v979
        %v981 = vadd.f32 %v980, 1.0
        %v982 = vmul.f32 %v981, 0.5
        %v983 = vtanh.pop %v973
        %v984 = vmul.f32 %v974, 0.5
        %v985 = vtanh.pop %v984
        %v986 = vadd.f32 %v985, 1.0
        %v987 = vmul.f32 %v986, 0.5
        %v988 = vmul.f32 %v982, %v881
        %v989 = vmul.f32 %v978, %v983
        %v990 = vadd.f32 %v988, %v989
        %v991 = vtanh.pop %v990
        %v992 = vmul.f32 %v987, %v991
        %s993 = sadd.s32 %s375, 1
        %p994 = scmp.lt.s32.totalorder %s993, 8
        %s995 = scalar_select %p994, 1, 0
        %v996 = vstv %s995
        %vm997 = vcmp.eq.s32.totalorder %v996, 1
        %v998 = vsel %vm997, %v992, %v880
        %v999 = vsel %vm997, %v990, %v881
        %s1000 = scalar_lea.vmem [#allocation3], 8
        %1001 = vst [vmem:[%s1000] sm:$0xff] %v998
        %s1002 = scalar_lea.vmem [#allocation2], 64
        %v1003 = vld [vmem:[%s1002] sm:$0xff]
        %v1004 = vld [vmem:[%s1002 + $0x8] sm:$0xff]
        %v1005 = vld [vmem:[%s1002 + $0x10] sm:$0xff]
        %v1006 = vld [vmem:[%s1002 + $0x18] sm:$0xff]
        %v1007 = vpack.c.bf16 %v998, %v998
        %1008 = vmatprep.subr.bf16.mxu0 %v709
        %1009 = vmatpush1.bf16.msra.mxu0 %v708
        %1010 = vmatprep.subr.bf16.mxu0 %v713
        %1011 = vmatpush1.bf16.msra.mxu0 %v712
        %1012 = vmatprep.subr.bf16.mxu0 %v717
        %1013 = vmatpush1.bf16.msra.mxu0 %v716
        %1014 = vmatprep.subr.bf16.mxu0 %v721
        %1015 = vmatpush1.bf16.msra.mxu0 %v720
        %1016 = vmatprep.subr.bf16.mxu0 %v725
        %1017 = vmatpush1.bf16.msra.mxu0 %v724
        %1018 = vmatprep.subr.bf16.mxu0 %v729
        %1019 = vmatpush1.bf16.msra.mxu0 %v728
        %1020 = vmatprep.subr.bf16.mxu0 %v733
        %1021 = vmatpush1.bf16.msra.mxu0 %v732
        %1022 = vmatprep.subr.bf16.mxu0 %v737
        %1023 = vmatpush1.bf16.msra.mxu0 %v736
        %1024 = vmatprep.subr.bf16.mxu0 0
        %1025 = vmatpush1.bf16.msra.mxu0 0
        %1026 = vmatprep.subr.bf16.mxu0 0
        %1027 = vmatpush1.bf16.msra.mxu0 0
        %1028 = vmatprep.subr.bf16.mxu0 0
        %1029 = vmatpush1.bf16.msra.mxu0 0
        %1030 = vmatprep.subr.bf16.mxu0 0
        %1031 = vmatpush1.bf16.msra.mxu0 0
        %1032 = vmatprep.subr.bf16.mxu0 0
        %1033 = vmatpush1.bf16.msra.mxu0 0
        %1034 = vmatprep.subr.bf16.mxu0 0
        %1035 = vmatpush1.bf16.msra.mxu0 0
        %1036 = vmatprep.subr.bf16.mxu0 0
        %1037 = vmatpush1.bf16.msra.mxu0 0
        %1038 = vmatprep.subr.bf16.mxu0 0
        %1039 = vmatpush1.bf16.msra.mxu0 0
        %1040 = vmatprep.mubr.bf16.mxu0 0
        %1041 = vmatmul.mubr.bf16.gmra.mrb[0].mxu0 %v1007
        %v1042 = vpop.f32.mrb[0].mxu0
        %v1043 = vadd.f32 0.0, %v1042
        %v1044 = vpop.f32.mrb[0].mxu0
        %v1045 = vadd.f32 0.0, %v1044
        %v1046 = vpop.f32.mrb[0].mxu0
        %v1047 = vpop.f32.mrb[0].mxu0
        %1048 = vdwg.mxu0
        %1049 = vmatprep.subr.bf16.mxu0 %v711
        %1050 = vmatpush1.bf16.msra.mxu0 %v710
        %1051 = vmatprep.subr.bf16.mxu0 %v715
        %1052 = vmatpush1.bf16.msra.mxu0 %v714
        %1053 = vmatprep.subr.bf16.mxu0 %v719
        %1054 = vmatpush1.bf16.msra.mxu0 %v718
        %1055 = vmatprep.subr.bf16.mxu0 %v723
        %1056 = vmatpush1.bf16.msra.mxu0 %v722
        %1057 = vmatprep.subr.bf16.mxu0 %v727
        %1058 = vmatpush1.bf16.msra.mxu0 %v726
        %1059 = vmatprep.subr.bf16.mxu0 %v731
        %1060 = vmatpush1.bf16.msra.mxu0 %v730
        %1061 = vmatprep.subr.bf16.mxu0 %v735
        %1062 = vmatpush1.bf16.msra.mxu0 %v734
        %1063 = vmatprep.subr.bf16.mxu0 %v739
        %1064 = vmatpush1.bf16.msra.mxu0 %v738
        %1065 = vmatprep.subr.bf16.mxu0 0
        %1066 = vmatpush1.bf16.msra.mxu0 0
        %1067 = vmatprep.subr.bf16.mxu0 0
        %1068 = vmatpush1.bf16.msra.mxu0 0
        %1069 = vmatprep.subr.bf16.mxu0 0
        %1070 = vmatpush1.bf16.msra.mxu0 0
        %1071 = vmatprep.subr.bf16.mxu0 0
        %1072 = vmatpush1.bf16.msra.mxu0 0
        %1073 = vmatprep.subr.bf16.mxu0 0
        %1074 = vmatpush1.bf16.msra.mxu0 0
        %1075 = vmatprep.subr.bf16.mxu0 0
        %1076 = vmatpush1.bf16.msra.mxu0 0
        %1077 = vmatprep.subr.bf16.mxu0 0
        %1078 = vmatpush1.bf16.msra.mxu0 0
        %1079 = vmatprep.subr.bf16.mxu0 0
        %1080 = vmatpush1.bf16.msra.mxu0 0
        %1081 = vmatprep.mubr.bf16.mxu0 0
        %1082 = vmatmul.mubr.bf16.gmra.mrb[0].mxu0 %v1007
        %v1083 = vpop.f32.mrb[0].mxu0
        %v1084 = vadd.f32 0.0, %v1083
        %v1085 = vpop.f32.mrb[0].mxu0
        %v1086 = vadd.f32 0.0, %v1085
        %v1087 = vpop.f32.mrb[0].mxu0
        %v1088 = vpop.f32.mrb[0].mxu0
        %1089 = vdwg.mxu0
        %v1090 = vadd.f32 %v1003, %v1043
        %v1091 = vadd.f32 %v1004, %v1045
        %v1092 = vadd.f32 %v1005, %v1084
        %v1093 = vadd.f32 %v1006, %v1086
        %v1094 = vmul.f32 %v1090, 0.5
        %v1095 = vtanh.pop %v1094
        %v1096 = vadd.f32 %v1095, 1.0
        %v1097 = vmul.f32 %v1096, 0.5
        %v1098 = vmul.f32 %v1091, 0.5
        %v1099 = vtanh.pop %v1098
        %v1100 = vadd.f32 %v1099, 1.0
        %v1101 = vmul.f32 %v1100, 0.5
        %v1102 = vtanh.pop %v1092
        %v1103 = vmul.f32 %v1093, 0.5
        %v1104 = vtanh.pop %v1103
        %v1105 = vadd.f32 %v1104, 1.0
        %v1106 = vmul.f32 %v1105, 0.5
        %v1107 = vmul.f32 %v1101, %v999
        %v1108 = vmul.f32 %v1097, %v1102
        %v1109 = vadd.f32 %v1107, %v1108
        %v1110 = vtanh.pop %v1109
        %v1111 = vmul.f32 %v1106, %v1110
        %s1112 = sadd.s32 %s375, 2
        %p1113 = scmp.lt.s32.totalorder %s1112, 8
        %s1114 = scalar_select %p1113, 1, 0
        %v1115 = vstv %s1114
        %vm1116 = vcmp.eq.s32.totalorder %v1115, 1
        %v1117 = vsel %vm1116, %v1111, %v998
        %v1118 = vsel %vm1116, %v1109, %v999
        %s1119 = scalar_lea.vmem [#allocation3], 16
        %1120 = vst [vmem:[%s1119] sm:$0xff] %v1117
        %s1121 = scalar_lea.vmem [#allocation2], 96
        %v1122 = vld [vmem:[%s1121] sm:$0xff]
        %v1123 = vld [vmem:[%s1121 + $0x8] sm:$0xff]
        %v1124 = vld [vmem:[%s1121 + $0x10] sm:$0xff]
        %v1125 = vld [vmem:[%s1121 + $0x18] sm:$0xff]
        %v1126 = vpack.c.bf16 %v1117, %v1117
        %1127 = vmatprep.subr.bf16.mxu0 %v709
        %1128 = vmatpush1.bf16.msra.mxu0 %v708
        %1129 = vmatprep.subr.bf16.mxu0 %v713
        %1130 = vmatpush1.bf16.msra.mxu0 %v712
        %1131 = vmatprep.subr.bf16.mxu0 %v717
        %1132 = vmatpush1.bf16.msra.mxu0 %v716
        %1133 = vmatprep.subr.bf16.mxu0 %v721
        %1134 = vmatpush1.bf16.msra.mxu0 %v720
        %1135 = vmatprep.subr.bf16.mxu0 %v725
        %1136 = vmatpush1.bf16.msra.mxu0 %v724
        %1137 = vmatprep.subr.bf16.mxu0 %v729
        %1138 = vmatpush1.bf16.msra.mxu0 %v728
        %1139 = vmatprep.subr.bf16.mxu0 %v733
        %1140 = vmatpush1.bf16.msra.mxu0 %v732
        %1141 = vmatprep.subr.bf16.mxu0 %v737
        %1142 = vmatpush1.bf16.msra.mxu0 %v736
        %1143 = vmatprep.subr.bf16.mxu0 0
        %1144 = vmatpush1.bf16.msra.mxu0 0
        %1145 = vmatprep.subr.bf16.mxu0 0
        %1146 = vmatpush1.bf16.msra.mxu0 0
        %1147 = vmatprep.subr.bf16.mxu0 0
        %1148 = vmatpush1.bf16.msra.mxu0 0
        %1149 = vmatprep.subr.bf16.mxu0 0
        %1150 = vmatpush1.bf16.msra.mxu0 0
        %1151 = vmatprep.subr.bf16.mxu0 0
        %1152 = vmatpush1.bf16.msra.mxu0 0
        %1153 = vmatprep.subr.bf16.mxu0 0
        %1154 = vmatpush1.bf16.msra.mxu0 0
        %1155 = vmatprep.subr.bf16.mxu0 0
        %1156 = vmatpush1.bf16.msra.mxu0 0
        %1157 = vmatprep.subr.bf16.mxu0 0
        %1158 = vmatpush1.bf16.msra.mxu0 0
        %1159 = vmatprep.mubr.bf16.mxu0 0
        %1160 = vmatmul.mubr.bf16.gmra.mrb[0].mxu0 %v1126
        %v1161 = vpop.f32.mrb[0].mxu0
        %v1162 = vadd.f32 0.0, %v1161
        %v1163 = vpop.f32.mrb[0].mxu0
        %v1164 = vadd.f32 0.0, %v1163
        %v1165 = vpop.f32.mrb[0].mxu0
        %v1166 = vpop.f32.mrb[0].mxu0
        %1167 = vdwg.mxu0
        %1168 = vmatprep.subr.bf16.mxu0 %v711
        %1169 = vmatpush1.bf16.msra.mxu0 %v710
        %1170 = vmatprep.subr.bf16.mxu0 %v715
        %1171 = vmatpush1.bf16.msra.mxu0 %v714
        %1172 = vmatprep.subr.bf16.mxu0 %v719
        %1173 = vmatpush1.bf16.msra.mxu0 %v718
        %1174 = vmatprep.subr.bf16.mxu0 %v723
        %1175 = vmatpush1.bf16.msra.mxu0 %v722
        %1176 = vmatprep.subr.bf16.mxu0 %v727
        %1177 = vmatpush1.bf16.msra.mxu0 %v726
        %1178 = vmatprep.subr.bf16.mxu0 %v731
        %1179 = vmatpush1.bf16.msra.mxu0 %v730
        %1180 = vmatprep.subr.bf16.mxu0 %v735
        %1181 = vmatpush1.bf16.msra.mxu0 %v734
        %1182 = vmatprep.subr.bf16.mxu0 %v739
        %1183 = vmatpush1.bf16.msra.mxu0 %v738
        %1184 = vmatprep.subr.bf16.mxu0 0
        %1185 = vmatpush1.bf16.msra.mxu0 0
        %1186 = vmatprep.subr.bf16.mxu0 0
        %1187 = vmatpush1.bf16.msra.mxu0 0
        %1188 = vmatprep.subr.bf16.mxu0 0
        %1189 = vmatpush1.bf16.msra.mxu0 0
        %1190 = vmatprep.subr.bf16.mxu0 0
        %1191 = vmatpush1.bf16.msra.mxu0 0
        %1192 = vmatprep.subr.bf16.mxu0 0
        %1193 = vmatpush1.bf16.msra.mxu0 0
        %1194 = vmatprep.subr.bf16.mxu0 0
        %1195 = vmatpush1.bf16.msra.mxu0 0
        %1196 = vmatprep.subr.bf16.mxu0 0
        %1197 = vmatpush1.bf16.msra.mxu0 0
        %1198 = vmatprep.subr.bf16.mxu0 0
        %1199 = vmatpush1.bf16.msra.mxu0 0
        %1200 = vmatprep.mubr.bf16.mxu0 0
        %1201 = vmatmul.mubr.bf16.gmra.mrb[0].mxu0 %v1126
        %v1202 = vpop.f32.mrb[0].mxu0
        %v1203 = vadd.f32 0.0, %v1202
        %v1204 = vpop.f32.mrb[0].mxu0
        %v1205 = vadd.f32 0.0, %v1204
        %v1206 = vpop.f32.mrb[0].mxu0
        %v1207 = vpop.f32.mrb[0].mxu0
        %1208 = vdwg.mxu0
        %v1209 = vadd.f32 %v1122, %v1162
        %v1210 = vadd.f32 %v1123, %v1164
        %v1211 = vadd.f32 %v1124, %v1203
        %v1212 = vadd.f32 %v1125, %v1205
        %v1213 = vmul.f32 %v1209, 0.5
        %v1214 = vtanh.pop %v1213
        %v1215 = vadd.f32 %v1214, 1.0
        %v1216 = vmul.f32 %v1215, 0.5
        %v1217 = vmul.f32 %v1210, 0.5
        %v1218 = vtanh.pop %v1217
        %v1219 = vadd.f32 %v1218, 1.0
        %v1220 = vmul.f32 %v1219, 0.5
        %v1221 = vtanh.pop %v1211
        %v1222 = vmul.f32 %v1212, 0.5
        %v1223 = vtanh.pop %v1222
        %v1224 = vadd.f32 %v1223, 1.0
        %v1225 = vmul.f32 %v1224, 0.5
        %v1226 = vmul.f32 %v1220, %v1118
        %v1227 = vmul.f32 %v1216, %v1221
        %v1228 = vadd.f32 %v1226, %v1227
        %v1229 = vtanh.pop %v1228
        %v1230 = vmul.f32 %v1225, %v1229
        %s1231 = sadd.s32 %s375, 3
        %p1232 = scmp.lt.s32.totalorder %s1231, 8
        %s1233 = scalar_select %p1232, 1, 0
        %v1234 = vstv %s1233
        %vm1235 = vcmp.eq.s32.totalorder %v1234, 1
        %v1236 = vsel %vm1235, %v1230, %v1117
        %v1237 = vsel %vm1235, %v1228, %v1118
        %s1238 = scalar_lea.vmem [#allocation3], 24
        %1239 = vst [vmem:[%s1238] sm:$0xff] %v1236
        %1240 = vst [vmem:[#allocation11] sm:$0xff] %v1236
        %1241 = vst [vmem:[#allocation13] sm:$0xff] %v1237
        %v1242 = vld [vmem:[#allocation3] sm:$0xff]
        %v1243 = vld [vmem:[#allocation3 + $0x8] sm:$0xff]
        %v1244 = vld [vmem:[#allocation3 + $0x10] sm:$0xff]
        %v1245 = vld [vmem:[#allocation3 + $0x18] sm:$0xff]
        %v1246 = vpack.c.bf16 %v1243, %v1242
        %v1247 = vpack.c.bf16 %v1245, %v1244
        %v1248 = vld [vmem:[#allocation4] sm:$0xff]
        %v1249 = vld [vmem:[#allocation4 + $0x8] sm:$0xff]
        %v1250 = vld [vmem:[#allocation4 + $0x10] sm:$0xff]
        %v1251 = vld [vmem:[#allocation4 + $0x18] sm:$0xff]
        %v1252 = vld [vmem:[#allocation4 + $0x20] sm:$0xff]
        %v1253 = vld [vmem:[#allocation4 + $0x28] sm:$0xff]
        %v1254 = vld [vmem:[#allocation4 + $0x30] sm:$0xff]
        %v1255 = vld [vmem:[#allocation4 + $0x38] sm:$0xff]
        %v1256 = vld [vmem:[#allocation4 + $0x40] sm:$0xff]
        %v1257 = vld [vmem:[#allocation4 + $0x48] sm:$0xff]
        %v1258 = vld [vmem:[#allocation4 + $0x50] sm:$0xff]
        %v1259 = vld [vmem:[#allocation4 + $0x58] sm:$0xff]
        %v1260 = vld [vmem:[#allocation4 + $0x60] sm:$0xff]
        %v1261 = vld [vmem:[#allocation4 + $0x68] sm:$0xff]
        %v1262 = vld [vmem:[#allocation4 + $0x70] sm:$0xff]
        %v1263 = vld [vmem:[#allocation4 + $0x78] sm:$0xff]
        %v1264 = vld [vmem:[#allocation4 + $0x80] sm:$0xff]
        %v1265 = vld [vmem:[#allocation4 + $0x88] sm:$0xff]
        %v1266 = vld [vmem:[#allocation4 + $0x90] sm:$0xff]
        %v1267 = vld [vmem:[#allocation4 + $0x98] sm:$0xff]
        %v1268 = vld [vmem:[#allocation4 + $0xa0] sm:$0xff]
        %v1269 = vld [vmem:[#allocation4 + $0xa8] sm:$0xff]
        %v1270 = vld [vmem:[#allocation4 + $0xb0] sm:$0xff]
        %v1271 = vld [vmem:[#allocation4 + $0xb8] sm:$0xff]
        %v1272 = vld [vmem:[#allocation4 + $0xc0] sm:$0xff]
        %v1273 = vld [vmem:[#allocation4 + $0xc8] sm:$0xff]
        %v1274 = vld [vmem:[#allocation4 + $0xd0] sm:$0xff]
        %v1275 = vld [vmem:[#allocation4 + $0xd8] sm:$0xff]
        %v1276 = vld [vmem:[#allocation4 + $0xe0] sm:$0xff]
        %v1277 = vld [vmem:[#allocation4 + $0xe8] sm:$0xff]
        %v1278 = vld [vmem:[#allocation4 + $0xf0] sm:$0xff]
        %v1279 = vld [vmem:[#allocation4 + $0xf8] sm:$0xff]
        %s1280 = scalar_lea.vmem %s4, 4
        %v1281 = vld [vmem:[%s1280] sm:$0xf]
        %v1283 = vlaneseq
        %v1284 = vshrl.u32 %v1283, 7
        %v1285 = vsub.s32 0, %v1284
        %v1286 = vrot.slane %v1281, %v1285
        %v1287 = vlaneseq
        %v1288 = vshrl.u32 %v1287, 7
        %v1289 = vsub.s32 1, %v1288
        %v1290 = vrot.slane %v1281, %v1289
        %v1291 = vlaneseq
        %v1292 = vshrl.u32 %v1291, 7
        %v1293 = vsub.s32 2, %v1292
        %v1294 = vrot.slane %v1281, %v1293
        %v1295 = vlaneseq
        %v1296 = vshrl.u32 %v1295, 7
        %v1297 = vsub.s32 3, %v1296
        %v1298 = vrot.slane %v1281, %v1297
        %v1335 = vunpack.c.l.b16 %v1248
        %v1336 = vunpack.c.h.b16 %v1248
        %v1337 = vunpack.c.l.b16 %v1249
        %v1338 = vunpack.c.h.b16 %v1249
        %v1339 = vunpack.c.l.b16 %v1250
        %v1340 = vunpack.c.h.b16 %v1250
        %v1341 = vunpack.c.l.b16 %v1251
        %v1342 = vunpack.c.h.b16 %v1251
        %v1343 = vunpack.c.l.b16 %v1252
        %v1344 = vunpack.c.h.b16 %v1252
        %v1345 = vunpack.c.l.b16 %v1253
        %v1346 = vunpack.c.h.b16 %v1253
        %v1347 = vunpack.c.l.b16 %v1254
        %v1348 = vunpack.c.h.b16 %v1254
        %v1349 = vunpack.c.l.b16 %v1255
        %v1350 = vunpack.c.h.b16 %v1255
        %v1351 = vunpack.c.l.b16 %v1256
        %v1352 = vunpack.c.h.b16 %v1256
        %v1353 = vunpack.c.l.b16 %v1257
        %v1354 = vunpack.c.h.b16 %v1257
        %v1355 = vunpack.c.l.b16 %v1258
        %v1356 = vunpack.c.h.b16 %v1258
        %v1357 = vunpack.c.l.b16 %v1259
        %v1358 = vunpack.c.h.b16 %v1259
        %v1359 = vunpack.c.l.b16 %v1260
        %v1360 = vunpack.c.h.b16 %v1260
        %v1361 = vunpack.c.l.b16 %v1261
        %v1362 = vunpack.c.h.b16 %v1261
        %v1363 = vunpack.c.l.b16 %v1262
        %v1364 = vunpack.c.h.b16 %v1262
        %v1365 = vunpack.c.l.b16 %v1263
        %v1366 = vunpack.c.h.b16 %v1263
        %v1367 = vunpack.c.l.b16 %v1264
        %v1368 = vunpack.c.h.b16 %v1264
        %v1369 = vunpack.c.l.b16 %v1265
        %v1370 = vunpack.c.h.b16 %v1265
        %v1371 = vunpack.c.l.b16 %v1266
        %v1372 = vunpack.c.h.b16 %v1266
        %v1373 = vunpack.c.l.b16 %v1267
        %v1374 = vunpack.c.h.b16 %v1267
        %v1375 = vunpack.c.l.b16 %v1268
        %v1376 = vunpack.c.h.b16 %v1268
        %v1377 = vunpack.c.l.b16 %v1269
        %v1378 = vunpack.c.h.b16 %v1269
        %v1379 = vunpack.c.l.b16 %v1270
        %v1380 = vunpack.c.h.b16 %v1270
        %v1381 = vunpack.c.l.b16 %v1271
        %v1382 = vunpack.c.h.b16 %v1271
        %v1383 = vunpack.c.l.b16 %v1272
        %v1384 = vunpack.c.h.b16 %v1272
        %v1385 = vunpack.c.l.b16 %v1273
        %v1386 = vunpack.c.h.b16 %v1273
        %v1387 = vunpack.c.l.b16 %v1274
        %v1388 = vunpack.c.h.b16 %v1274
        %v1389 = vunpack.c.l.b16 %v1275
        %v1390 = vunpack.c.h.b16 %v1275
        %v1391 = vunpack.c.l.b16 %v1276
        %v1392 = vunpack.c.h.b16 %v1276
        %v1393 = vunpack.c.l.b16 %v1277
        %v1394 = vunpack.c.h.b16 %v1277
        %v1395 = vunpack.c.l.b16 %v1278
        %v1396 = vunpack.c.h.b16 %v1278
        %v1397 = vunpack.c.l.b16 %v1279
        %v1398 = vunpack.c.h.b16 %v1279
        %v1399 = vpack.c.b16 %v1339, %v1335
        %v1400 = vpack.c.b16 %v1340, %v1336
        %v1401 = vpack.c.b16 %v1341, %v1337
        %v1402 = vpack.c.b16 %v1342, %v1338
        %v1403 = vpack.c.b16 %v1347, %v1343
        %v1404 = vpack.c.b16 %v1348, %v1344
        %v1405 = vpack.c.b16 %v1349, %v1345
        %v1406 = vpack.c.b16 %v1350, %v1346
        %v1407 = vpack.c.b16 %v1355, %v1351
        %v1408 = vpack.c.b16 %v1356, %v1352
        %v1409 = vpack.c.b16 %v1357, %v1353
        %v1410 = vpack.c.b16 %v1358, %v1354
        %v1411 = vpack.c.b16 %v1363, %v1359
        %v1412 = vpack.c.b16 %v1364, %v1360
        %v1413 = vpack.c.b16 %v1365, %v1361
        %v1414 = vpack.c.b16 %v1366, %v1362
        %v1415 = vpack.c.b16 %v1371, %v1367
        %v1416 = vpack.c.b16 %v1372, %v1368
        %v1417 = vpack.c.b16 %v1373, %v1369
        %v1418 = vpack.c.b16 %v1374, %v1370
        %v1419 = vpack.c.b16 %v1379, %v1375
        %v1420 = vpack.c.b16 %v1380, %v1376
        %v1421 = vpack.c.b16 %v1381, %v1377
        %v1422 = vpack.c.b16 %v1382, %v1378
        %v1423 = vpack.c.b16 %v1387, %v1383
        %v1424 = vpack.c.b16 %v1388, %v1384
        %v1425 = vpack.c.b16 %v1389, %v1385
        %v1426 = vpack.c.b16 %v1390, %v1386
        %v1427 = vpack.c.b16 %v1395, %v1391
        %v1428 = vpack.c.b16 %v1396, %v1392
        %v1429 = vpack.c.b16 %v1397, %v1393
        %v1430 = vpack.c.b16 %v1398, %v1394
        %1463 = vmatprep.subr.bf16.mxu0 %v1400
        %1464 = vmatpush1.bf16.msra.mxu0 %v1399
        %1465 = vmatprep.subr.bf16.mxu0 %v1404
        %1466 = vmatpush1.bf16.msra.mxu0 %v1403
        %1467 = vmatprep.subr.bf16.mxu0 %v1408
        %1468 = vmatpush1.bf16.msra.mxu0 %v1407
        %1469 = vmatprep.subr.bf16.mxu0 %v1412
        %1470 = vmatpush1.bf16.msra.mxu0 %v1411
        %1471 = vmatprep.subr.bf16.mxu0 %v1416
        %1472 = vmatpush1.bf16.msra.mxu0 %v1415
        %1473 = vmatprep.subr.bf16.mxu0 %v1420
        %1474 = vmatpush1.bf16.msra.mxu0 %v1419
        %1475 = vmatprep.subr.bf16.mxu0 %v1424
        %1476 = vmatpush1.bf16.msra.mxu0 %v1423
        %1477 = vmatprep.subr.bf16.mxu0 %v1428
        %1478 = vmatpush1.bf16.msra.mxu0 %v1427
        %1479 = vmatprep.subr.bf16.mxu0 0
        %1480 = vmatpush1.bf16.msra.mxu0 0
        %1481 = vmatprep.subr.bf16.mxu0 0
        %1482 = vmatpush1.bf16.msra.mxu0 0
        %1483 = vmatprep.subr.bf16.mxu0 0
        %1484 = vmatpush1.bf16.msra.mxu0 0
        %1485 = vmatprep.subr.bf16.mxu0 0
        %1486 = vmatpush1.bf16.msra.mxu0 0
        %1487 = vmatprep.subr.bf16.mxu0 0
        %1488 = vmatpush1.bf16.msra.mxu0 0
        %1489 = vmatprep.subr.bf16.mxu0 0
        %1490 = vmatpush1.bf16.msra.mxu0 0
        %1491 = vmatprep.subr.bf16.mxu0 0
        %1492 = vmatpush1.bf16.msra.mxu0 0
        %1493 = vmatprep.subr.bf16.mxu0 0
        %1494 = vmatpush1.bf16.msra.mxu0 0
        %1495 = vmatprep.mubr.bf16.mxu0 0
        %1496 = vmatmul.mubr.bf16.gmra.mrb[0].mxu0 %v1246
        %v1497 = vpop.f32.mrb[0].mxu0
        %v1498 = vadd.f32 %v1286, %v1497
        %v1499 = vpop.f32.mrb[0].mxu0
        %v1500 = vadd.f32 %v1290, %v1499
        %v1501 = vpop.f32.mrb[0].mxu0
        %v1502 = vadd.f32 %v1286, %v1501
        %v1503 = vpop.f32.mrb[0].mxu0
        %v1504 = vadd.f32 %v1290, %v1503
        %1505 = vmatprep.mubr.bf16.mxu0 0
        %1506 = vmatmul.mubr.bf16.gmra.mrb[0].mxu0 %v1247
        %v1507 = vpop.f32.mrb[0].mxu0
        %v1508 = vadd.f32 %v1286, %v1507
        %v1509 = vpop.f32.mrb[0].mxu0
        %v1510 = vadd.f32 %v1290, %v1509
        %v1511 = vpop.f32.mrb[0].mxu0
        %v1512 = vadd.f32 %v1286, %v1511
        %v1513 = vpop.f32.mrb[0].mxu0
        %v1514 = vadd.f32 %v1290, %v1513
        %1515 = vdwg.mxu0
        %1516 = vmatprep.subr.bf16.mxu0 %v1402
        %1517 = vmatpush1.bf16.msra.mxu0 %v1401
        %1518 = vmatprep.subr.bf16.mxu0 %v1406
        %1519 = vmatpush1.bf16.msra.mxu0 %v1405
        %1520 = vmatprep.subr.bf16.mxu0 %v1410
        %1521 = vmatpush1.bf16.msra.mxu0 %v1409
        %1522 = vmatprep.subr.bf16.mxu0 %v1414
        %1523 = vmatpush1.bf16.msra.mxu0 %v1413
        %1524 = vmatprep.subr.bf16.mxu0 %v1418
        %1525 = vmatpush1.bf16.msra.mxu0 %v1417
        %1526 = vmatprep.subr.bf16.mxu0 %v1422
        %1527 = vmatpush1.bf16.msra.mxu0 %v1421
        %1528 = vmatprep.subr.bf16.mxu0 %v1426
        %1529 = vmatpush1.bf16.msra.mxu0 %v1425
        %1530 = vmatprep.subr.bf16.mxu0 %v1430
        %1531 = vmatpush1.bf16.msra.mxu0 %v1429
        %1532 = vmatprep.subr.bf16.mxu0 0
        %1533 = vmatpush1.bf16.msra.mxu0 0
        %1534 = vmatprep.subr.bf16.mxu0 0
        %1535 = vmatpush1.bf16.msra.mxu0 0
        %1536 = vmatprep.subr.bf16.mxu0 0
        %1537 = vmatpush1.bf16.msra.mxu0 0
        %1538 = vmatprep.subr.bf16.mxu0 0
        %1539 = vmatpush1.bf16.msra.mxu0 0
        %1540 = vmatprep.subr.bf16.mxu0 0
        %1541 = vmatpush1.bf16.msra.mxu0 0
        %1542 = vmatprep.subr.bf16.mxu0 0
        %1543 = vmatpush1.bf16.msra.mxu0 0
        %1544 = vmatprep.subr.bf16.mxu0 0
        %1545 = vmatpush1.bf16.msra.mxu0 0
        %1546 = vmatprep.subr.bf16.mxu0 0
        %1547 = vmatpush1.bf16.msra.mxu0 0
        %1548 = vmatprep.mubr.bf16.mxu0 0
        %1549 = vmatmul.mubr.bf16.gmra.mrb[0].mxu0 %v1246
        %v1550 = vpop.f32.mrb[0].mxu0
        %v1551 = vadd.f32 %v1294, %v1550
        %v1552 = vpop.f32.mrb[0].mxu0
        %v1553 = vadd.f32 %v1298, %v1552
        %v1554 = vpop.f32.mrb[0].mxu0
        %v1555 = vadd.f32 %v1294, %v1554
        %v1556 = vpop.f32.mrb[0].mxu0
        %v1557 = vadd.f32 %v1298, %v1556
        %1558 = vmatprep.mubr.bf16.mxu0 0
        %1559 = vmatmul.mubr.bf16.gmra.mrb[0].mxu0 %v1247
        %v1560 = vpop.f32.mrb[0].mxu0
        %v1561 = vadd.f32 %v1294, %v1560
        %v1562 = vpop.f32.mrb[0].mxu0
        %v1563 = vadd.f32 %v1298, %v1562
        %v1564 = vpop.f32.mrb[0].mxu0
        %v1565 = vadd.f32 %v1294, %v1564
        %v1566 = vpop.f32.mrb[0].mxu0
        %v1567 = vadd.f32 %v1298, %v1566
        %1568 = vdwg.mxu0
        %1569 = vst [vmem:[#allocation2] sm:$0xff] %v1498
        %1570 = vst [vmem:[#allocation2 + $0x8] sm:$0xff] %v1500
        %1571 = vst [vmem:[#allocation2 + $0x10] sm:$0xff] %v1551
        %1572 = vst [vmem:[#allocation2 + $0x18] sm:$0xff] %v1553
        %1573 = vst [vmem:[#allocation2 + $0x20] sm:$0xff] %v1502
        %1574 = vst [vmem:[#allocation2 + $0x28] sm:$0xff] %v1504
        %1575 = vst [vmem:[#allocation2 + $0x30] sm:$0xff] %v1555
        %1576 = vst [vmem:[#allocation2 + $0x38] sm:$0xff] %v1557
        %1577 = vst [vmem:[#allocation2 + $0x40] sm:$0xff] %v1508
        %1578 = vst [vmem:[#allocation2 + $0x48] sm:$0xff] %v1510
        %1579 = vst [vmem:[#allocation2 + $0x50] sm:$0xff] %v1561
        %1580 = vst [vmem:[#allocation2 + $0x58] sm:$0xff] %v1563
        %1581 = vst [vmem:[#allocation2 + $0x60] sm:$0xff] %v1512
        %1582 = vst [vmem:[#allocation2 + $0x68] sm:$0xff] %v1514
        %1583 = vst [vmem:[#allocation2 + $0x70] sm:$0xff] %v1565
        %1584 = vst [vmem:[#allocation2 + $0x78] sm:$0xff] %v1567
        %s1585 = scalar_lea.vmem [#allocation7], 256
        %v1586 = vld [vmem:[%s1585] sm:$0xff]
        %v1587 = vld [vmem:[%s1585 + $0x8] sm:$0xff]
        %v1588 = vld [vmem:[%s1585 + $0x10] sm:$0xff]
        %v1589 = vld [vmem:[%s1585 + $0x18] sm:$0xff]
        %v1590 = vld [vmem:[%s1585 + $0x20] sm:$0xff]
        %v1591 = vld [vmem:[%s1585 + $0x28] sm:$0xff]
        %v1592 = vld [vmem:[%s1585 + $0x30] sm:$0xff]
        %v1593 = vld [vmem:[%s1585 + $0x38] sm:$0xff]
        %v1594 = vld [vmem:[%s1585 + $0x40] sm:$0xff]
        %v1595 = vld [vmem:[%s1585 + $0x48] sm:$0xff]
        %v1596 = vld [vmem:[%s1585 + $0x50] sm:$0xff]
        %v1597 = vld [vmem:[%s1585 + $0x58] sm:$0xff]
        %v1598 = vld [vmem:[%s1585 + $0x60] sm:$0xff]
        %v1599 = vld [vmem:[%s1585 + $0x68] sm:$0xff]
        %v1600 = vld [vmem:[%s1585 + $0x70] sm:$0xff]
        %v1601 = vld [vmem:[%s1585 + $0x78] sm:$0xff]
        %v1602 = vld [vmem:[%s1585 + $0x80] sm:$0xff]
        %v1603 = vld [vmem:[%s1585 + $0x88] sm:$0xff]
        %v1604 = vld [vmem:[%s1585 + $0x90] sm:$0xff]
        %v1605 = vld [vmem:[%s1585 + $0x98] sm:$0xff]
        %v1606 = vld [vmem:[%s1585 + $0xa0] sm:$0xff]
        %v1607 = vld [vmem:[%s1585 + $0xa8] sm:$0xff]
        %v1608 = vld [vmem:[%s1585 + $0xb0] sm:$0xff]
        %v1609 = vld [vmem:[%s1585 + $0xb8] sm:$0xff]
        %v1610 = vld [vmem:[%s1585 + $0xc0] sm:$0xff]
        %v1611 = vld [vmem:[%s1585 + $0xc8] sm:$0xff]
        %v1612 = vld [vmem:[%s1585 + $0xd0] sm:$0xff]
        %v1613 = vld [vmem:[%s1585 + $0xd8] sm:$0xff]
        %v1614 = vld [vmem:[%s1585 + $0xe0] sm:$0xff]
        %v1615 = vld [vmem:[%s1585 + $0xe8] sm:$0xff]
        %v1616 = vld [vmem:[%s1585 + $0xf0] sm:$0xff]
        %v1617 = vld [vmem:[%s1585 + $0xf8] sm:$0xff]
        %s1618 = scalar_lea.vmem [#allocation11], 8
        %v1619 = vld [vmem:[%s1618] sm:$0xff]
        %s1620 = scalar_lea.vmem [#allocation13], 8
        %v1621 = vld [vmem:[%s1620] sm:$0xff]
        %v1622 = vld [vmem:[#allocation2] sm:$0xff]
        %v1623 = vld [vmem:[#allocation2 + $0x8] sm:$0xff]
        %v1624 = vld [vmem:[#allocation2 + $0x10] sm:$0xff]
        %v1625 = vld [vmem:[#allocation2 + $0x18] sm:$0xff]
        %v1626 = vpack.c.bf16 %v1619, %v1619
        %v1659 = vunpack.c.l.b16 %v1586
        %v1660 = vunpack.c.h.b16 %v1586
        %v1661 = vunpack.c.l.b16 %v1587
        %v1662 = vunpack.c.h.b16 %v1587
        %v1663 = vunpack.c.l.b16 %v1588
        %v1664 = vunpack.c.h.b16 %v1588
        %v1665 = vunpack.c.l.b16 %v1589
        %v1666 = vunpack.c.h.b16 %v1589
        %v1667 = vunpack.c.l.b16 %v1590
        %v1668 = vunpack.c.h.b16 %v1590
        %v1669 = vunpack.c.l.b16 %v1591
        %v1670 = vunpack.c.h.b16 %v1591
        %v1671 = vunpack.c.l.b16 %v1592
        %v1672 = vunpack.c.h.b16 %v1592
        %v1673 = vunpack.c.l.b16 %v1593
        %v1674 = vunpack.c.h.b16 %v1593
        %v1675 = vunpack.c.l.b16 %v1594
        %v1676 = vunpack.c.h.b16 %v1594
        %v1677 = vunpack.c.l.b16 %v1595
        %v1678 = vunpack.c.h.b16 %v1595
        %v1679 = vunpack.c.l.b16 %v1596
        %v1680 = vunpack.c.h.b16 %v1596
        %v1681 = vunpack.c.l.b16 %v1597
        %v1682 = vunpack.c.h.b16 %v1597
        %v1683 = vunpack.c.l.b16 %v1598
        %v1684 = vunpack.c.h.b16 %v1598
        %v1685 = vunpack.c.l.b16 %v1599
        %v1686 = vunpack.c.h.b16 %v1599
        %v1687 = vunpack.c.l.b16 %v1600
        %v1688 = vunpack.c.h.b16 %v1600
        %v1689 = vunpack.c.l.b16 %v1601
        %v1690 = vunpack.c.h.b16 %v1601
        %v1691 = vunpack.c.l.b16 %v1602
        %v1692 = vunpack.c.h.b16 %v1602
        %v1693 = vunpack.c.l.b16 %v1603
        %v1694 = vunpack.c.h.b16 %v1603
        %v1695 = vunpack.c.l.b16 %v1604
        %v1696 = vunpack.c.h.b16 %v1604
        %v1697 = vunpack.c.l.b16 %v1605
        %v1698 = vunpack.c.h.b16 %v1605
        %v1699 = vunpack.c.l.b16 %v1606
        %v1700 = vunpack.c.h.b16 %v1606
        %v1701 = vunpack.c.l.b16 %v1607
        %v1702 = vunpack.c.h.b16 %v1607
        %v1703 = vunpack.c.l.b16 %v1608
        %v1704 = vunpack.c.h.b16 %v1608
        %v1705 = vunpack.c.l.b16 %v1609
        %v1706 = vunpack.c.h.b16 %v1609
        %v1707 = vunpack.c.l.b16 %v1610
        %v1708 = vunpack.c.h.b16 %v1610
        %v1709 = vunpack.c.l.b16 %v1611
        %v1710 = vunpack.c.h.b16 %v1611
        %v1711 = vunpack.c.l.b16 %v1612
        %v1712 = vunpack.c.h.b16 %v1612
        %v1713 = vunpack.c.l.b16 %v1613
        %v1714 = vunpack.c.h.b16 %v1613
        %v1715 = vunpack.c.l.b16 %v1614
        %v1716 = vunpack.c.h.b16 %v1614
        %v1717 = vunpack.c.l.b16 %v1615
        %v1718 = vunpack.c.h.b16 %v1615
        %v1719 = vunpack.c.l.b16 %v1616
        %v1720 = vunpack.c.h.b16 %v1616
        %v1721 = vunpack.c.l.b16 %v1617
        %v1722 = vunpack.c.h.b16 %v1617
        %v1723 = vpack.c.b16 %v1663, %v1659
        %v1724 = vpack.c.b16 %v1664, %v1660
        %v1725 = vpack.c.b16 %v1665, %v1661
        %v1726 = vpack.c.b16 %v1666, %v1662
        %v1727 = vpack.c.b16 %v1671, %v1667
        %v1728 = vpack.c.b16 %v1672, %v1668
        %v1729 = vpack.c.b16 %v1673, %v1669
        %v1730 = vpack.c.b16 %v1674, %v1670
        %v1731 = vpack.c.b16 %v1679, %v1675
        %v1732 = vpack.c.b16 %v1680, %v1676
        %v1733 = vpack.c.b16 %v1681, %v1677
        %v1734 = vpack.c.b16 %v1682, %v1678
        %v1735 = vpack.c.b16 %v1687, %v1683
        %v1736 = vpack.c.b16 %v1688, %v1684
        %v1737 = vpack.c.b16 %v1689, %v1685
        %v1738 = vpack.c.b16 %v1690, %v1686
        %v1739 = vpack.c.b16 %v1695, %v1691
        %v1740 = vpack.c.b16 %v1696, %v1692
        %v1741 = vpack.c.b16 %v1697, %v1693
        %v1742 = vpack.c.b16 %v1698, %v1694
        %v1743 = vpack.c.b16 %v1703, %v1699
        %v1744 = vpack.c.b16 %v1704, %v1700
        %v1745 = vpack.c.b16 %v1705, %v1701
        %v1746 = vpack.c.b16 %v1706, %v1702
        %v1747 = vpack.c.b16 %v1711, %v1707
        %v1748 = vpack.c.b16 %v1712, %v1708
        %v1749 = vpack.c.b16 %v1713, %v1709
        %v1750 = vpack.c.b16 %v1714, %v1710
        %v1751 = vpack.c.b16 %v1719, %v1715
        %v1752 = vpack.c.b16 %v1720, %v1716
        %v1753 = vpack.c.b16 %v1721, %v1717
        %v1754 = vpack.c.b16 %v1722, %v1718
        %1787 = vmatprep.subr.bf16.mxu0 %v1724
        %1788 = vmatpush1.bf16.msra.mxu0 %v1723
        %1789 = vmatprep.subr.bf16.mxu0 %v1728
        %1790 = vmatpush1.bf16.msra.mxu0 %v1727
        %1791 = vmatprep.subr.bf16.mxu0 %v1732
        %1792 = vmatpush1.bf16.msra.mxu0 %v1731
        %1793 = vmatprep.subr.bf16.mxu0 %v1736
        %1794 = vmatpush1.bf16.msra.mxu0 %v1735
        %1795 = vmatprep.subr.bf16.mxu0 %v1740
        %1796 = vmatpush1.bf16.msra.mxu0 %v1739
        %1797 = vmatprep.subr.bf16.mxu0 %v1744
        %1798 = vmatpush1.bf16.msra.mxu0 %v1743
        %1799 = vmatprep.subr.bf16.mxu0 %v1748
        %1800 = vmatpush1.bf16.msra.mxu0 %v1747
        %1801 = vmatprep.subr.bf16.mxu0 %v1752
        %1802 = vmatpush1.bf16.msra.mxu0 %v1751
        %1803 = vmatprep.subr.bf16.mxu0 0
        %1804 = vmatpush1.bf16.msra.mxu0 0
        %1805 = vmatprep.subr.bf16.mxu0 0
        %1806 = vmatpush1.bf16.msra.mxu0 0
        %1807 = vmatprep.subr.bf16.mxu0 0
        %1808 = vmatpush1.bf16.msra.mxu0 0
        %1809 = vmatprep.subr.bf16.mxu0 0
        %1810 = vmatpush1.bf16.msra.mxu0 0
        %1811 = vmatprep.subr.bf16.mxu0 0
        %1812 = vmatpush1.bf16.msra.mxu0 0
        %1813 = vmatprep.subr.bf16.mxu0 0
        %1814 = vmatpush1.bf16.msra.mxu0 0
        %1815 = vmatprep.subr.bf16.mxu0 0
        %1816 = vmatpush1.bf16.msra.mxu0 0
        %1817 = vmatprep.subr.bf16.mxu0 0
        %1818 = vmatpush1.bf16.msra.mxu0 0
        %1819 = vmatprep.mubr.bf16.mxu0 0
        %1820 = vmatmul.mubr.bf16.gmra.mrb[0].mxu0 %v1626
        %v1821 = vpop.f32.mrb[0].mxu0
        %v1822 = vadd.f32 0.0, %v1821
        %v1823 = vpop.f32.mrb[0].mxu0
        %v1824 = vadd.f32 0.0, %v1823
        %v1825 = vpop.f32.mrb[0].mxu0
        %v1826 = vpop.f32.mrb[0].mxu0
        %1827 = vdwg.mxu0
        %1828 = vmatprep.subr.bf16.mxu0 %v1726
        %1829 = vmatpush1.bf16.msra.mxu0 %v1725
        %1830 = vmatprep.subr.bf16.mxu0 %v1730
        %1831 = vmatpush1.bf16.msra.mxu0 %v1729
        %1832 = vmatprep.subr.bf16.mxu0 %v1734
        %1833 = vmatpush1.bf16.msra.mxu0 %v1733
        %1834 = vmatprep.subr.bf16.mxu0 %v1738
        %1835 = vmatpush1.bf16.msra.mxu0 %v1737
        %1836 = vmatprep.subr.bf16.mxu0 %v1742
        %1837 = vmatpush1.bf16.msra.mxu0 %v1741
        %1838 = vmatprep.subr.bf16.mxu0 %v1746
        %1839 = vmatpush1.bf16.msra.mxu0 %v1745
        %1840 = vmatprep.subr.bf16.mxu0 %v1750
        %1841 = vmatpush1.bf16.msra.mxu0 %v1749
        %1842 = vmatprep.subr.bf16.mxu0 %v1754
        %1843 = vmatpush1.bf16.msra.mxu0 %v1753
        %1844 = vmatprep.subr.bf16.mxu0 0
        %1845 = vmatpush1.bf16.msra.mxu0 0
        %1846 = vmatprep.subr.bf16.mxu0 0
        %1847 = vmatpush1.bf16.msra.mxu0 0
        %1848 = vmatprep.subr.bf16.mxu0 0
        %1849 = vmatpush1.bf16.msra.mxu0 0
        %1850 = vmatprep.subr.bf16.mxu0 0
        %1851 = vmatpush1.bf16.msra.mxu0 0
        %1852 = vmatprep.subr.bf16.mxu0 0
        %1853 = vmatpush1.bf16.msra.mxu0 0
        %1854 = vmatprep.subr.bf16.mxu0 0
        %1855 = vmatpush1.bf16.msra.mxu0 0
        %1856 = vmatprep.subr.bf16.mxu0 0
        %1857 = vmatpush1.bf16.msra.mxu0 0
        %1858 = vmatprep.subr.bf16.mxu0 0
        %1859 = vmatpush1.bf16.msra.mxu0 0
        %1860 = vmatprep.mubr.bf16.mxu0 0
        %1861 = vmatmul.mubr.bf16.gmra.mrb[0].mxu0 %v1626
        %v1862 = vpop.f32.mrb[0].mxu0
        %v1863 = vadd.f32 0.0, %v1862
        %v1864 = vpop.f32.mrb[0].mxu0
        %v1865 = vadd.f32 0.0, %v1864
        %v1866 = vpop.f32.mrb[0].mxu0
        %v1867 = vpop.f32.mrb[0].mxu0
        %1868 = vdwg.mxu0
        %v1869 = vadd.f32 %v1622, %v1822
        %v1870 = vadd.f32 %v1623, %v1824
        %v1871 = vadd.f32 %v1624, %v1863
        %v1872 = vadd.f32 %v1625, %v1865
        %v1873 = vmul.f32 %v1869, 0.5
        %v1874 = vtanh.pop %v1873
        %v1875 = vadd.f32 %v1874, 1.0
        %v1876 = vmul.f32 %v1875, 0.5
        %v1877 = vmul.f32 %v1870, 0.5
        %v1878 = vtanh.pop %v1877
        %v1879 = vadd.f32 %v1878, 1.0
        %v1880 = vmul.f32 %v1879, 0.5
        %v1881 = vtanh.pop %v1871
        %v1882 = vmul.f32 %v1872, 0.5
        %v1883 = vtanh.pop %v1882
        %v1884 = vadd.f32 %v1883, 1.0
        %v1885 = vmul.f32 %v1884, 0.5
        %v1886 = vmul.f32 %v1880, %v1621
        %v1887 = vmul.f32 %v1876, %v1881
        %v1888 = vadd.f32 %v1886, %v1887
        %v1889 = vtanh.pop %v1888
        %v1890 = vmul.f32 %v1885, %v1889
        %v1891 = vsel %vm879, %v1890, %v1619
        %v1892 = vsel %vm879, %v1888, %v1621
        %1893 = vst [vmem:[#allocation3] sm:$0xff] %v1891
        %v1894 = vld [vmem:[%s883] sm:$0xff]
        %v1895 = vld [vmem:[%s883 + $0x8] sm:$0xff]
        %v1896 = vld [vmem:[%s883 + $0x10] sm:$0xff]
        %v1897 = vld [vmem:[%s883 + $0x18] sm:$0xff]
        %v1898 = vpack.c.bf16 %v1891, %v1891
        %1899 = vmatprep.subr.bf16.mxu0 %v1724
        %1900 = vmatpush1.bf16.msra.mxu0 %v1723
        %1901 = vmatprep.subr.bf16.mxu0 %v1728
        %1902 = vmatpush1.bf16.msra.mxu0 %v1727
        %1903 = vmatprep.subr.bf16.mxu0 %v1732
        %1904 = vmatpush1.bf16.msra.mxu0 %v1731
        %1905 = vmatprep.subr.bf16.mxu0 %v1736
        %1906 = vmatpush1.bf16.msra.mxu0 %v1735
        %1907 = vmatprep.subr.bf16.mxu0 %v1740
        %1908 = vmatpush1.bf16.msra.mxu0 %v1739
        %1909 = vmatprep.subr.bf16.mxu0 %v1744
        %1910 = vmatpush1.bf16.msra.mxu0 %v1743
        %1911 = vmatprep.subr.bf16.mxu0 %v1748
        %1912 = vmatpush1.bf16.msra.mxu0 %v1747
        %1913 = vmatprep.subr.bf16.mxu0 %v1752
        %1914 = vmatpush1.bf16.msra.mxu0 %v1751
        %1915 = vmatprep.subr.bf16.mxu0 0
        %1916 = vmatpush1.bf16.msra.mxu0 0
        %1917 = vmatprep.subr.bf16.mxu0 0
        %1918 = vmatpush1.bf16.msra.mxu0 0
        %1919 = vmatprep.subr.bf16.mxu0 0
        %1920 = vmatpush1.bf16.msra.mxu0 0
        %1921 = vmatprep.subr.bf16.mxu0 0
        %1922 = vmatpush1.bf16.msra.mxu0 0
        %1923 = vmatprep.subr.bf16.mxu0 0
        %1924 = vmatpush1.bf16.msra.mxu0 0
        %1925 = vmatprep.subr.bf16.mxu0 0
        %1926 = vmatpush1.bf16.msra.mxu0 0
        %1927 = vmatprep.subr.bf16.mxu0 0
        %1928 = vmatpush1.bf16.msra.mxu0 0
        %1929 = vmatprep.subr.bf16.mxu0 0
        %1930 = vmatpush1.bf16.msra.mxu0 0
        %1931 = vmatprep.mubr.bf16.mxu0 0
        %1932 = vmatmul.mubr.bf16.gmra.mrb[0].mxu0 %v1898
        %v1933 = vpop.f32.mrb[0].mxu0
        %v1934 = vadd.f32 0.0, %v1933
        %v1935 = vpop.f32.mrb[0].mxu0
        %v1936 = vadd.f32 0.0, %v1935
        %v1937 = vpop.f32.mrb[0].mxu0
        %v1938 = vpop.f32.mrb[0].mxu0
        %1939 = vdwg.mxu0
        %1940 = vmatprep.subr.bf16.mxu0 %v1726
        %1941 = vmatpush1.bf16.msra.mxu0 %v1725
        %1942 = vmatprep.subr.bf16.mxu0 %v1730
        %1943 = vmatpush1.bf16.msra.mxu0 %v1729
        %1944 = vmatprep.subr.bf16.mxu0 %v1734
        %1945 = vmatpush1.bf16.msra.mxu0 %v1733
        %1946 = vmatprep.subr.bf16.mxu0 %v1738
        %1947 = vmatpush1.bf16.msra.mxu0 %v1737
        %1948 = vmatprep.subr.bf16.mxu0 %v1742
        %1949 = vmatpush1.bf16.msra.mxu0 %v1741
        %1950 = vmatprep.subr.bf16.mxu0 %v1746
        %1951 = vmatpush1.bf16.msra.mxu0 %v1745
        %1952 = vmatprep.subr.bf16.mxu0 %v1750
        %1953 = vmatpush1.bf16.msra.mxu0 %v1749
        %1954 = vmatprep.subr.bf16.mxu0 %v1754
        %1955 = vmatpush1.bf16.msra.mxu0 %v1753
        %1956 = vmatprep.subr.bf16.mxu0 0
        %1957 = vmatpush1.bf16.msra.mxu0 0
        %1958 = vmatprep.subr.bf16.mxu0 0
        %1959 = vmatpush1.bf16.msra.mxu0 0
        %1960 = vmatprep.subr.bf16.mxu0 0
        %1961 = vmatpush1.bf16.msra.mxu0 0
        %1962 = vmatprep.subr.bf16.mxu0 0
        %1963 = vmatpush1.bf16.msra.mxu0 0
        %1964 = vmatprep.subr.bf16.mxu0 0
        %1965 = vmatpush1.bf16.msra.mxu0 0
        %1966 = vmatprep.subr.bf16.mxu0 0
        %1967 = vmatpush1.bf16.msra.mxu0 0
        %1968 = vmatprep.subr.bf16.mxu0 0
        %1969 = vmatpush1.bf16.msra.mxu0 0
        %1970 = vmatprep.subr.bf16.mxu0 0
        %1971 = vmatpush1.bf16.msra.mxu0 0
        %1972 = vmatprep.mubr.bf16.mxu0 0
        %1973 = vmatmul.mubr.bf16.gmra.mrb[0].mxu0 %v1898
        %v1974 = vpop.f32.mrb[0].mxu0
        %v1975 = vadd.f32 0.0, %v1974
        %v1976 = vpop.f32.mrb[0].mxu0
        %v1977 = vadd.f32 0.0, %v1976
        %v1978 = vpop.f32.mrb[0].mxu0
        %v1979 = vpop.f32.mrb[0].mxu0
        %1980 = vdwg.mxu0
        %v1981 = vadd.f32 %v1894, %v1934
        %v1982 = vadd.f32 %v1895, %v1936
        %v1983 = vadd.f32 %v1896, %v1975
        %v1984 = vadd.f32 %v1897, %v1977
        %v1985 = vmul.f32 %v1981, 0.5
        %v1986 = vtanh.pop %v1985
        %v1987 = vadd.f32 %v1986, 1.0
        %v1988 = vmul.f32 %v1987, 0.5
        %v1989 = vmul.f32 %v1982, 0.5
        %v1990 = vtanh.pop %v1989
        %v1991 = vadd.f32 %v1990, 1.0
        %v1992 = vmul.f32 %v1991, 0.5
        %v1993 = vtanh.pop %v1983
        %v1994 = vmul.f32 %v1984, 0.5
        %v1995 = vtanh.pop %v1994
        %v1996 = vadd.f32 %v1995, 1.0
        %v1997 = vmul.f32 %v1996, 0.5
        %v1998 = vmul.f32 %v1992, %v1892
        %v1999 = vmul.f32 %v1988, %v1993
        %v2000 = vadd.f32 %v1998, %v1999
        %v2001 = vtanh.pop %v2000
        %v2002 = vmul.f32 %v1997, %v2001
        %v2003 = vsel %vm997, %v2002, %v1891
        %v2004 = vsel %vm997, %v2000, %v1892
        %2005 = vst [vmem:[%s1000] sm:$0xff] %v2003
        %v2006 = vld [vmem:[%s1002] sm:$0xff]
        %v2007 = vld [vmem:[%s1002 + $0x8] sm:$0xff]
        %v2008 = vld [vmem:[%s1002 + $0x10] sm:$0xff]
        %v2009 = vld [vmem:[%s1002 + $0x18] sm:$0xff]
        %v2010 = vpack.c.bf16 %v2003, %v2003
        %2011 = vmatprep.subr.bf16.mxu0 %v1724
        %2012 = vmatpush1.bf16.msra.mxu0 %v1723
        %2013 = vmatprep.subr.bf16.mxu0 %v1728
        %2014 = vmatpush1.bf16.msra.mxu0 %v1727
        %2015 = vmatprep.subr.bf16.mxu0 %v1732
        %2016 = vmatpush1.bf16.msra.mxu0 %v1731
        %2017 = vmatprep.subr.bf16.mxu0 %v1736
        %2018 = vmatpush1.bf16.msra.mxu0 %v1735
        %2019 = vmatprep.subr.bf16.mxu0 %v1740
        %2020 = vmatpush1.bf16.msra.mxu0 %v1739
        %2021 = vmatprep.subr.bf16.mxu0 %v1744
        %2022 = vmatpush1.bf16.msra.mxu0 %v1743
        %2023 = vmatprep.subr.bf16.mxu0 %v1748
        %2024 = vmatpush1.bf16.msra.mxu0 %v1747
        %2025 = vmatprep.subr.bf16.mxu0 %v1752
        %2026 = vmatpush1.bf16.msra.mxu0 %v1751
        %2027 = vmatprep.subr.bf16.mxu0 0
        %2028 = vmatpush1.bf16.msra.mxu0 0
        %2029 = vmatprep.subr.bf16.mxu0 0
        %2030 = vmatpush1.bf16.msra.mxu0 0
        %2031 = vmatprep.subr.bf16.mxu0 0
        %2032 = vmatpush1.bf16.msra.mxu0 0
        %2033 = vmatprep.subr.bf16.mxu0 0
        %2034 = vmatpush1.bf16.msra.mxu0 0
        %2035 = vmatprep.subr.bf16.mxu0 0
        %2036 = vmatpush1.bf16.msra.mxu0 0
        %2037 = vmatprep.subr.bf16.mxu0 0
        %2038 = vmatpush1.bf16.msra.mxu0 0
        %2039 = vmatprep.subr.bf16.mxu0 0
        %2040 = vmatpush1.bf16.msra.mxu0 0
        %2041 = vmatprep.subr.bf16.mxu0 0
        %2042 = vmatpush1.bf16.msra.mxu0 0
        %2043 = vmatprep.mubr.bf16.mxu0 0
        %2044 = vmatmul.mubr.bf16.gmra.mrb[0].mxu0 %v2010
        %v2045 = vpop.f32.mrb[0].mxu0
        %v2046 = vadd.f32 0.0, %v2045
        %v2047 = vpop.f32.mrb[0].mxu0
        %v2048 = vadd.f32 0.0, %v2047
        %v2049 = vpop.f32.mrb[0].mxu0
        %v2050 = vpop.f32.mrb[0].mxu0
        %2051 = vdwg.mxu0
        %2052 = vmatprep.subr.bf16.mxu0 %v1726
        %2053 = vmatpush1.bf16.msra.mxu0 %v1725
        %2054 = vmatprep.subr.bf16.mxu0 %v1730
        %2055 = vmatpush1.bf16.msra.mxu0 %v1729
        %2056 = vmatprep.subr.bf16.mxu0 %v1734
        %2057 = vmatpush1.bf16.msra.mxu0 %v1733
        %2058 = vmatprep.subr.bf16.mxu0 %v1738
        %2059 = vmatpush1.bf16.msra.mxu0 %v1737
        %2060 = vmatprep.subr.bf16.mxu0 %v1742
        %2061 = vmatpush1.bf16.msra.mxu0 %v1741
        %2062 = vmatprep.subr.bf16.mxu0 %v1746
        %2063 = vmatpush1.bf16.msra.mxu0 %v1745
        %2064 = vmatprep.subr.bf16.mxu0 %v1750
        %2065 = vmatpush1.bf16.msra.mxu0 %v1749
        %2066 = vmatprep.subr.bf16.mxu0 %v1754
        %2067 = vmatpush1.bf16.msra.mxu0 %v1753
        %2068 = vmatprep.subr.bf16.mxu0 0
        %2069 = vmatpush1.bf16.msra.mxu0 0
        %2070 = vmatprep.subr.bf16.mxu0 0
        %2071 = vmatpush1.bf16.msra.mxu0 0
        %2072 = vmatprep.subr.bf16.mxu0 0
        %2073 = vmatpush1.bf16.msra.mxu0 0
        %2074 = vmatprep.subr.bf16.mxu0 0
        %2075 = vmatpush1.bf16.msra.mxu0 0
        %2076 = vmatprep.subr.bf16.mxu0 0
        %2077 = vmatpush1.bf16.msra.mxu0 0
        %2078 = vmatprep.subr.bf16.mxu0 0
        %2079 = vmatpush1.bf16.msra.mxu0 0
        %2080 = vmatprep.subr.bf16.mxu0 0
        %2081 = vmatpush1.bf16.msra.mxu0 0
        %2082 = vmatprep.subr.bf16.mxu0 0
        %2083 = vmatpush1.bf16.msra.mxu0 0
        %2084 = vmatprep.mubr.bf16.mxu0 0
        %2085 = vmatmul.mubr.bf16.gmra.mrb[0].mxu0 %v2010
        %v2086 = vpop.f32.mrb[0].mxu0
        %v2087 = vadd.f32 0.0, %v2086
        %v2088 = vpop.f32.mrb[0].mxu0
        %v2089 = vadd.f32 0.0, %v2088
        %v2090 = vpop.f32.mrb[0].mxu0
        %v2091 = vpop.f32.mrb[0].mxu0
        %2092 = vdwg.mxu0
        %v2093 = vadd.f32 %v2006, %v2046
        %v2094 = vadd.f32 %v2007, %v2048
        %v2095 = vadd.f32 %v2008, %v2087
        %v2096 = vadd.f32 %v2009, %v2089
        %v2097 = vmul.f32 %v2093, 0.5
        %v2098 = vtanh.pop %v2097
        %v2099 = vadd.f32 %v2098, 1.0
        %v2100 = vmul.f32 %v2099, 0.5
        %v2101 = vmul.f32 %v2094, 0.5
        %v2102 = vtanh.pop %v2101
        %v2103 = vadd.f32 %v2102, 1.0
        %v2104 = vmul.f32 %v2103, 0.5
        %v2105 = vtanh.pop %v2095
        %v2106 = vmul.f32 %v2096, 0.5
        %v2107 = vtanh.pop %v2106
        %v2108 = vadd.f32 %v2107, 1.0
        %v2109 = vmul.f32 %v2108, 0.5
        %v2110 = vmul.f32 %v2104, %v2004
        %v2111 = vmul.f32 %v2100, %v2105
        %v2112 = vadd.f32 %v2110, %v2111
        %v2113 = vtanh.pop %v2112
        %v2114 = vmul.f32 %v2109, %v2113
        %v2115 = vsel %vm1116, %v2114, %v2003
        %v2116 = vsel %vm1116, %v2112, %v2004
        %2117 = vst [vmem:[%s1119] sm:$0xff] %v2115
        %v2118 = vld [vmem:[%s1121] sm:$0xff]
        %v2119 = vld [vmem:[%s1121 + $0x8] sm:$0xff]
        %v2120 = vld [vmem:[%s1121 + $0x10] sm:$0xff]
        %v2121 = vld [vmem:[%s1121 + $0x18] sm:$0xff]
        %v2122 = vpack.c.bf16 %v2115, %v2115
        %2123 = vmatprep.subr.bf16.mxu0 %v1724
        %2124 = vmatpush1.bf16.msra.mxu0 %v1723
        %2125 = vmatprep.subr.bf16.mxu0 %v1728
        %2126 = vmatpush1.bf16.msra.mxu0 %v1727
        %2127 = vmatprep.subr.bf16.mxu0 %v1732
        %2128 = vmatpush1.bf16.msra.mxu0 %v1731
        %2129 = vmatprep.subr.bf16.mxu0 %v1736
        %2130 = vmatpush1.bf16.msra.mxu0 %v1735
        %2131 = vmatprep.subr.bf16.mxu0 %v1740
        %2132 = vmatpush1.bf16.msra.mxu0 %v1739
        %2133 = vmatprep.subr.bf16.mxu0 %v1744
        %2134 = vmatpush1.bf16.msra.mxu0 %v1743
        %2135 = vmatprep.subr.bf16.mxu0 %v1748
        %2136 = vmatpush1.bf16.msra.mxu0 %v1747
        %2137 = vmatprep.subr.bf16.mxu0 %v1752
        %2138 = vmatpush1.bf16.msra.mxu0 %v1751
        %2139 = vmatprep.subr.bf16.mxu0 0
        %2140 = vmatpush1.bf16.msra.mxu0 0
        %2141 = vmatprep.subr.bf16.mxu0 0
        %2142 = vmatpush1.bf16.msra.mxu0 0
        %2143 = vmatprep.subr.bf16.mxu0 0
        %2144 = vmatpush1.bf16.msra.mxu0 0
        %2145 = vmatprep.subr.bf16.mxu0 0
        %2146 = vmatpush1.bf16.msra.mxu0 0
        %2147 = vmatprep.subr.bf16.mxu0 0
        %2148 = vmatpush1.bf16.msra.mxu0 0
        %2149 = vmatprep.subr.bf16.mxu0 0
        %2150 = vmatpush1.bf16.msra.mxu0 0
        %2151 = vmatprep.subr.bf16.mxu0 0
        %2152 = vmatpush1.bf16.msra.mxu0 0
        %2153 = vmatprep.subr.bf16.mxu0 0
        %2154 = vmatpush1.bf16.msra.mxu0 0
        %2155 = vmatprep.mubr.bf16.mxu0 0
        %2156 = vmatmul.mubr.bf16.gmra.mrb[0].mxu0 %v2122
        %v2157 = vpop.f32.mrb[0].mxu0
        %v2158 = vadd.f32 0.0, %v2157
        %v2159 = vpop.f32.mrb[0].mxu0
        %v2160 = vadd.f32 0.0, %v2159
        %v2161 = vpop.f32.mrb[0].mxu0
        %v2162 = vpop.f32.mrb[0].mxu0
        %2163 = vdwg.mxu0
        %2164 = vmatprep.subr.bf16.mxu0 %v1726
        %2165 = vmatpush1.bf16.msra.mxu0 %v1725
        %2166 = vmatprep.subr.bf16.mxu0 %v1730
        %2167 = vmatpush1.bf16.msra.mxu0 %v1729
        %2168 = vmatprep.subr.bf16.mxu0 %v1734
        %2169 = vmatpush1.bf16.msra.mxu0 %v1733
        %2170 = vmatprep.subr.bf16.mxu0 %v1738
        %2171 = vmatpush1.bf16.msra.mxu0 %v1737
        %2172 = vmatprep.subr.bf16.mxu0 %v1742
        %2173 = vmatpush1.bf16.msra.mxu0 %v1741
        %2174 = vmatprep.subr.bf16.mxu0 %v1746
        %2175 = vmatpush1.bf16.msra.mxu0 %v1745
        %2176 = vmatprep.subr.bf16.mxu0 %v1750
        %2177 = vmatpush1.bf16.msra.mxu0 %v1749
        %2178 = vmatprep.subr.bf16.mxu0 %v1754
        %2179 = vmatpush1.bf16.msra.mxu0 %v1753
        %2180 = vmatprep.subr.bf16.mxu0 0
        %2181 = vmatpush1.bf16.msra.mxu0 0
        %2182 = vmatprep.subr.bf16.mxu0 0
        %2183 = vmatpush1.bf16.msra.mxu0 0
        %2184 = vmatprep.subr.bf16.mxu0 0
        %2185 = vmatpush1.bf16.msra.mxu0 0
        %2186 = vmatprep.subr.bf16.mxu0 0
        %2187 = vmatpush1.bf16.msra.mxu0 0
        %2188 = vmatprep.subr.bf16.mxu0 0
        %2189 = vmatpush1.bf16.msra.mxu0 0
        %2190 = vmatprep.subr.bf16.mxu0 0
        %2191 = vmatpush1.bf16.msra.mxu0 0
        %2192 = vmatprep.subr.bf16.mxu0 0
        %2193 = vmatpush1.bf16.msra.mxu0 0
        %2194 = vmatprep.subr.bf16.mxu0 0
        %2195 = vmatpush1.bf16.msra.mxu0 0
        %2196 = vmatprep.mubr.bf16.mxu0 0
        %2197 = vmatmul.mubr.bf16.gmra.mrb[0].mxu0 %v2122
        %v2198 = vpop.f32.mrb[0].mxu0
        %v2199 = vadd.f32 0.0, %v2198
        %v2200 = vpop.f32.mrb[0].mxu0
        %v2201 = vadd.f32 0.0, %v2200
        %v2202 = vpop.f32.mrb[0].mxu0
        %v2203 = vpop.f32.mrb[0].mxu0
        %2204 = vdwg.mxu0
        %v2205 = vadd.f32 %v2118, %v2158
        %v2206 = vadd.f32 %v2119, %v2160
        %v2207 = vadd.f32 %v2120, %v2199
        %v2208 = vadd.f32 %v2121, %v2201
        %v2209 = vmul.f32 %v2205, 0.5
        %v2210 = vtanh.pop %v2209
        %v2211 = vadd.f32 %v2210, 1.0
        %v2212 = vmul.f32 %v2211, 0.5
        %v2213 = vmul.f32 %v2206, 0.5
        %v2214 = vtanh.pop %v2213
        %v2215 = vadd.f32 %v2214, 1.0
        %v2216 = vmul.f32 %v2215, 0.5
        %v2217 = vtanh.pop %v2207
        %v2218 = vmul.f32 %v2208, 0.5
        %v2219 = vtanh.pop %v2218
        %v2220 = vadd.f32 %v2219, 1.0
        %v2221 = vmul.f32 %v2220, 0.5
        %v2222 = vmul.f32 %v2216, %v2116
        %v2223 = vmul.f32 %v2212, %v2217
        %v2224 = vadd.f32 %v2222, %v2223
        %v2225 = vtanh.pop %v2224
        %v2226 = vmul.f32 %v2221, %v2225
        %v2227 = vsel %vm1235, %v2226, %v2115
        %v2228 = vsel %vm1235, %v2224, %v2116
        %2229 = vst [vmem:[%s1238] sm:$0xff] %v2227
        %2230 = vst [vmem:[%s1618] sm:$0xff] %v2227
        %2231 = vst [vmem:[%s1620] sm:$0xff] %v2228
        %v2232 = vld [vmem:[#allocation3] sm:$0xff]
        %v2233 = vld [vmem:[#allocation3 + $0x8] sm:$0xff]
        %v2234 = vld [vmem:[#allocation3 + $0x10] sm:$0xff]
        %v2235 = vld [vmem:[#allocation3 + $0x18] sm:$0xff]
        %v2236 = vtanh.pop %v2232
        %v2237 = vtanh.pop %v2233
        %v2238 = vtanh.pop %v2234
        %v2239 = vtanh.pop %v2235
        %v2240 = vpack.c.bf16 %v2237, %v2236
        %v2241 = vpack.c.bf16 %v2239, %v2238
        %v2242 = vld [vmem:[#allocation9] sm:$0xf]
        %v2243 = vld [vmem:[#allocation9 + $0x4] sm:$0xf]
        %v2244 = vld [vmem:[#allocation9 + $0x8] sm:$0xf]
        %v2245 = vld [vmem:[#allocation9 + $0xc] sm:$0xf]
        %v2246 = vld [vmem:[#allocation9 + $0x10] sm:$0xf]
        %v2247 = vld [vmem:[#allocation9 + $0x14] sm:$0xf]
        %v2248 = vld [vmem:[#allocation9 + $0x18] sm:$0xf]
        %v2249 = vld [vmem:[#allocation9 + $0x1c] sm:$0xf]
        %v2250 = vld [vmem:[#allocation9 + $0x20] sm:$0xf]
        %v2251 = vld [vmem:[#allocation9 + $0x24] sm:$0xf]
        %v2252 = vld [vmem:[#allocation9 + $0x28] sm:$0xf]
        %v2253 = vld [vmem:[#allocation9 + $0x2c] sm:$0xf]
        %v2254 = vld [vmem:[#allocation9 + $0x30] sm:$0xf]
        %v2255 = vld [vmem:[#allocation9 + $0x34] sm:$0xf]
        %v2256 = vld [vmem:[#allocation9 + $0x38] sm:$0xf]
        %v2257 = vld [vmem:[#allocation9 + $0x3c] sm:$0xf]
        %v2258 = vld [vmem:[%s6] sm:$0x1]
        %v2260 = vlaneseq
        %v2261 = vshrl.u32 %v2260, 7
        %v2262 = vsub.s32 0, %v2261
        %v2263 = vrot.slane %v2258, %v2262
        %v2281 = vunpack.c.l.b16 %v2242
        %v2282 = vunpack.c.l.b16 %v2243
        %v2283 = vunpack.c.l.b16 %v2244
        %v2284 = vunpack.c.l.b16 %v2245
        %v2285 = vunpack.c.l.b16 %v2246
        %v2286 = vunpack.c.l.b16 %v2247
        %v2287 = vunpack.c.l.b16 %v2248
        %v2288 = vunpack.c.l.b16 %v2249
        %v2289 = vunpack.c.l.b16 %v2250
        %v2290 = vunpack.c.l.b16 %v2251
        %v2291 = vunpack.c.l.b16 %v2252
        %v2292 = vunpack.c.l.b16 %v2253
        %v2293 = vunpack.c.l.b16 %v2254
        %v2294 = vunpack.c.l.b16 %v2255
        %v2295 = vunpack.c.l.b16 %v2256
        %v2296 = vunpack.c.l.b16 %v2257
        %v2297 = vpack.c.b16 %v2282, %v2281
        %v2298 = vpack.c.b16 %v2284, %v2283
        %v2299 = vpack.c.b16 %v2286, %v2285
        %v2300 = vpack.c.b16 %v2288, %v2287
        %v2301 = vpack.c.b16 %v2290, %v2289
        %v2302 = vpack.c.b16 %v2292, %v2291
        %v2303 = vpack.c.b16 %v2294, %v2293
        %v2304 = vpack.c.b16 %v2296, %v2295
        %2313 = vmatprep.subr.bf16.mxu0 0
        %2314 = vmatpush1.bf16.msra.mxu0 %v2297
        %2315 = vmatprep.subr.bf16.mxu0 0
        %2316 = vmatpush1.bf16.msra.mxu0 %v2298
        %2317 = vmatprep.subr.bf16.mxu0 0
        %2318 = vmatpush1.bf16.msra.mxu0 %v2299
        %2319 = vmatprep.subr.bf16.mxu0 0
        %2320 = vmatpush1.bf16.msra.mxu0 %v2300
        %2321 = vmatprep.subr.bf16.mxu0 0
        %2322 = vmatpush1.bf16.msra.mxu0 %v2301
        %2323 = vmatprep.subr.bf16.mxu0 0
        %2324 = vmatpush1.bf16.msra.mxu0 %v2302
        %2325 = vmatprep.subr.bf16.mxu0 0
        %2326 = vmatpush1.bf16.msra.mxu0 %v2303
        %2327 = vmatprep.subr.bf16.mxu0 0
        %2328 = vmatpush1.bf16.msra.mxu0 %v2304
        %2329 = vmatprep.subr.bf16.mxu0 0
        %2330 = vmatpush1.bf16.msra.mxu0 0
        %2331 = vmatprep.subr.bf16.mxu0 0
        %2332 = vmatpush1.bf16.msra.mxu0 0
        %2333 = vmatprep.subr.bf16.mxu0 0
        %2334 = vmatpush1.bf16.msra.mxu0 0
        %2335 = vmatprep.subr.bf16.mxu0 0
        %2336 = vmatpush1.bf16.msra.mxu0 0
        %2337 = vmatprep.subr.bf16.mxu0 0
        %2338 = vmatpush1.bf16.msra.mxu0 0
        %2339 = vmatprep.subr.bf16.mxu0 0
        %2340 = vmatpush1.bf16.msra.mxu0 0
        %2341 = vmatprep.subr.bf16.mxu0 0
        %2342 = vmatpush1.bf16.msra.mxu0 0
        %2343 = vmatprep.subr.bf16.mxu0 0
        %2344 = vmatpush1.bf16.msra.mxu0 0
        %2345 = vmatprep.mubr.bf16.mxu0 0
        %2346 = vmatmul.mubr.bf16.gmra.mrb[0].mxu0 %v2240
        %v2347 = vpop.f32.mrb[0].mxu0
        %v2348 = vadd.f32 %v2263, %v2347
        %v2349 = vpop.f32.mrb[0].mxu0
        %v2350 = vpop.f32.mrb[0].mxu0
        %v2351 = vadd.f32 %v2263, %v2350
        %v2352 = vpop.f32.mrb[0].mxu0
        %2353 = vmatprep.mubr.bf16.mxu0 0
        %2354 = vmatmul.mubr.bf16.gmra.mrb[0].mxu0 %v2241
        %v2355 = vpop.f32.mrb[0].mxu0
        %v2356 = vadd.f32 %v2263, %v2355
        %v2357 = vpop.f32.mrb[0].mxu0
        %v2358 = vpop.f32.mrb[0].mxu0
        %v2359 = vadd.f32 %v2263, %v2358
        %v2360 = vpop.f32.mrb[0].mxu0
        %2361 = vdwg.mxu0
        %2362 = vmax.xlane.f32.xlu0 %v2348
        %v2363 = vpop.xlane.xlu0 %2362
        %2364 = vmax.xlane.f32.xlu0 %v2351
        %v2365 = vpop.xlane.xlu0 %2364
        %2366 = vmax.xlane.f32.xlu0 %v2356
        %v2367 = vpop.xlane.xlu0 %2366
        %2368 = vmax.xlane.f32.xlu0 %v2359
        %v2369 = vpop.xlane.xlu0 %2368
        %v2370 = vsub.f32 %v2348, %v2363
        %v2371 = vsub.f32 %v2351, %v2365
        %v2372 = vsub.f32 %v2356, %v2367
        %v2373 = vsub.f32 %v2359, %v2369
        %v2374 = vmul.f32 %v2370, 1.442695
        %v2375 = vpow.pop %v2374
        %v2376 = vmul.f32 %v2371, 1.442695
        %v2377 = vpow.pop %v2376
        %v2378 = vmul.f32 %v2372, 1.442695
        %v2379 = vpow.pop %v2378
        %v2380 = vmul.f32 %v2373, 1.442695
        %v2381 = vpow.pop %v2380
        %2382 = vadd.xlane.f32.xlu0 %v2375
        %v2383 = vpop.xlane.xlu0 %2382
        %2384 = vadd.xlane.f32.xlu0 %v2377
        %v2385 = vpop.xlane.xlu0 %2384
        %2386 = vadd.xlane.f32.xlu0 %v2379
        %v2387 = vpop.xlane.xlu0 %2386
        %2388 = vadd.xlane.f32.xlu0 %v2381
        %v2389 = vpop.xlane.xlu0 %2388
        %v2390 = vlog2.pop %v2383
        %v2391 = vmul.f32 %v2390, 0.6931472
        %v2392 = vlog2.pop %v2385
        %v2393 = vmul.f32 %v2392, 0.6931472
        %v2394 = vlog2.pop %v2387
        %v2395 = vmul.f32 %v2394, 0.6931472
        %v2396 = vlog2.pop %v2389
        %v2397 = vmul.f32 %v2396, 0.6931472
        %v2398 = vadd.f32 %v2391, %v2363
        %v2399 = vadd.f32 %v2393, %v2365
        %v2400 = vadd.f32 %v2395, %v2367
        %v2401 = vadd.f32 %v2397, %v2369
        %v2402 = vsub.f32 %v2348, %v2398
        %v2403 = vsub.f32 %v2351, %v2399
        %v2404 = vsub.f32 %v2356, %v2400
        %v2405 = vsub.f32 %v2359, %v2401
        %2406 = vst [vmem:[%s362] sm:$0xff] %v2402
        %2407 = vst [vmem:[%s362 + $0x8] sm:$0xff] %v2403
        %2408 = vst [vmem:[%s362 + $0x10] sm:$0xff] %v2404
        %2409 = vst [vmem:[%s362 + $0x18] sm:$0xff] %v2405
        %s2410 = sand.u32 %s187, 1
        %s2411 = scalar_lea.sflag [#allocation6], %s2410
        %s2412 = sand.u32 %s187, 1
        %s2413 = smul.addr %s2412, 32
        %s2414 = scalar_lea.vmem [#allocation10], %s2413
        // Predicated region
        $region65: #{tpu_custom_call.1} parent=47 // pred_check
          %p2415 = pneg %p197
        $region66: #{tpu_custom_call.1} parent=47 // pred_check_branch
          %2417 = sbr.rel (%p2415) target = $region68
        $region67: #{tpu_custom_call.1} parent=47 // pred_region
          %s2418 = smul.u32 4, %s27
          %s2420 = ssub.s32 512, 512
          %2421 = vsyncadd %s2411, %s2420
          %s2422 = smul.addr %s2418, 128
          %s2423 = scalar_lea.hbm %s7, %s2422
          %s2424 = sshll.u32 %s2414, 4
          %s2425 = int_to_ptr.vmem [resolvable:$true] %s2424
          %2430 = dma.vmem_to_hbm [thread:$0]  %s2425, 512, %s2423, %s2411, 128, 128, 8
        $region68: #{tpu_custom_call.1} parent=47 // pred_fallthru
          _
        // Predicated region
        $region69: #{tpu_custom_call.1} parent=47 // pred_check
          %p2431 = pneg %p218
        $region70: #{tpu_custom_call.1} parent=47 // pred_check_branch
          %2433 = sbr.rel (%p2431) target = $region72
        $region71: #{tpu_custom_call.1} parent=47 // pred_region
          %s2435 = ssub.s32 256, 256
          %2436 = vsyncadd [#allocation12], %s2435
          %s2437 = sshll.u32 [#allocation11], 4
          %s2438 = int_to_ptr.vmem [resolvable:$true] %s2437
          %2443 = dma.vmem_to_hbm [thread:$0]  %s2438, 256, %s8, [#allocation12], 128, 128, 8
        $region72: #{tpu_custom_call.1} parent=47 // pred_fallthru
          _
        // Predicated region
        $region73: #{tpu_custom_call.1} parent=47 // pred_check
          %p2444 = pneg %p239
        $region74: #{tpu_custom_call.1} parent=47 // pred_check_branch
          %2446 = sbr.rel (%p2444) target = $region76
        $region75: #{tpu_custom_call.1} parent=47 // pred_region
          %s2448 = ssub.s32 256, 256
          %2449 = vsyncadd [#allocation12], %s2448
          %s2450 = sshll.u32 [#allocation13], 4
          %s2451 = int_to_ptr.vmem [resolvable:$true] %s2450
          %2456 = dma.vmem_to_hbm [thread:$0]  %s2451, 256, %s9, [#allocation12], 128, 128, 8
        $region76: #{tpu_custom_call.1} parent=47 // pred_fallthru
          _
        // Predicated region
        $region77: #{tpu_custom_call.1} parent=47 // pred_check
          %p2457 = pneg %p218
        $region78: #{tpu_custom_call.1} parent=47 // pred_check_branch
          %2459 = sbr.rel (%p2457) target = $region80
        $region79: #{tpu_custom_call.1} parent=47 // pred_region
          %2460 = dma.done [#allocation12], 256
        $region80: #{tpu_custom_call.1} parent=47 // pred_fallthru
          _
        // Predicated region
        $region81: #{tpu_custom_call.1} parent=47 // pred_check
          %p2461 = pneg %p239
        $region82: #{tpu_custom_call.1} parent=47 // pred_check_branch
          %2463 = sbr.rel (%p2461) target = $region84
        $region83: #{tpu_custom_call.1} parent=47 // pred_region
          %2464 = dma.done [#allocation12], 256
        $region84: #{tpu_custom_call.1} parent=47 // pred_fallthru
          _
      $region48: #{tpu_custom_call.1} parent=5 // pred_fallthru
        _
      %p2465 = scmp.le.s32.totalorder 2, %s22
      // Predicated region
      $region85: #{tpu_custom_call.1} parent=5 // pred_check
        %p2466 = pneg %p2465
      $region86: #{tpu_custom_call.1} parent=5 // pred_check_branch
        %2468 = sbr.rel (%p2466) target = $region88
      $region87: #{tpu_custom_call.1} parent=5 // pred_region
        %s2469 = ssub.s32 %s22, 2
        // Predicated region
        $region89: #{tpu_custom_call.1} parent=87 // pred_check
          %p2470 = pneg %p203
        $region90: #{tpu_custom_call.1} parent=87 // pred_check_branch
          %2472 = sbr.rel (%p2470) target = $region92
        $region91: #{tpu_custom_call.1} parent=87 // pred_region
          %s2473 = sand.u32 %s188, 1
          %s2474 = scalar_lea.sflag [#allocation6], %s2473
          %s2475 = sand.u32 %s188, 1
          %s2476 = smul.addr %s2475, 32
          %s2477 = scalar_lea.vmem [#allocation10], %s2476
          %2478 = dma.done %s2474, 512
        $region92: #{tpu_custom_call.1} parent=87 // pred_fallthru
          _
      $region88: #{tpu_custom_call.1} parent=5 // pred_fallthru
        _
    $region6: #{tpu_custom_call.1} parent=1 // loop_footer
      %s26 = sadd.s32 1, %s22
    $region7: #{tpu_custom_call.1} parent=1 // loop_footer_branch
      %21 = sbr.rel target = $region3
    $region8: #{tpu_custom_call.1} parent=1 // loop_exit
      _
    %2479 = vsyncpa [#allocation5], 1
    %s2480 = scalar_lea.sflag [#allocation5], 1
    %2481 = vsyncpa %s2480, 1
    %2482 = vsyncpa [#allocation8], 1
    %2483 = vsyncpa [#allocation6], 1
    %s2484 = scalar_lea.sflag [#allocation6], 1
    %2485 = vsyncpa %s2484, 1
    %2486 = vsyncpa [#allocation12], 1

</llo_original>
